<compile_context>
chip_gen: v7x
topology: tpu7x:2x2x1
jax: 0.10.0
libtpu: 0.0.40
codegen_flags: <defaults>
</compile_context>

<pallas_src>
import math

import jax
import jax.numpy as jnp
from jax.experimental import pallas as pl
from jax.experimental.pallas import tpu as pltpu

# ----------------------------- model config (small, consistent) -----------------------------
IMAGE_SIZE = 16
PATCH      = 4
CHANNELS   = 1
DIM        = 32          # transformer width = DIM * 2
DEPTH      = 2
HEADS      = 2
DIM_HEAD   = 32
MLP_DIM    = 32          # mlp hidden = MLP_DIM * 2
L          = 10

D          = DIM * 2                     # 64  transformer width
INNER      = HEADS * DIM_HEAD            # 64  attention inner dim
HIDDEN     = MLP_DIM * 2                 # 64  mlp hidden
IN_DIM     = CHANNELS * PATCH * PATCH    # 16  patch flatten dim
PROBE_DIM  = 2 * PATCH * PATCH           # 32  probe flatten dim
PATCH_DIM2 = PATCH * PATCH * 2           # 32  output per token
POS_DIM    = 4 * L                       # 40  positional-frequency features
SCALE      = DIM_HEAD ** -0.5
LN_EPS     = 1e-5
NEG_INF    = -1e30

# ---- toy batch config baked into the fused kernel (mask / padding are static) ----
B_TOK  = 2
N_TOK  = 8
BN     = B_TOK * N_TOK                       # 16 patch tokens (rows 0..BN-1)
M_REAL = BN + B_TOK                          # 18 real tokens (probe tokens at the end)
M_PAD  = ((M_REAL + 7) // 8) * 8             # 24 rows -> full f32 sublanes (perf item 4)
N_SHIFT = N_TOK.bit_length() - 1
assert (1 << N_SHIFT) == N_TOK               # batch-id uses a shift instead of int divide

HPAD     = 128                               # per-head q/k/v lane block (perf item 3)
QKV_W    = 3 * HPAD                          # 384 lanes per (layer, head)
AUX_ROWS = HEADS * HPAD + D + HIDDEN         # 384 rows per layer in the aux slab
OUT_PAD  = 128                               # lane-padded output width (perf item 5)
EB_ROWS  = IN_DIM + POS_DIM + PROBE_DIM      # 88 rows of fused embedding weights
VEC_PER_LAYER = 7                            # g1, b1, bo, g2, b2, bm1, bm2


# --------------------------------------- in-kernel helpers ---------------------------------------
def _erf_approx(x):
    # Abramowitz & Stegun 7.1.26 (max abs err ~1.5e-7). Kept exact-divide / erf-style
    # on purpose: nn.GELU uses exact erf and the divide is ~1.5K elements per layer
    # (review item 10 judged marginal; tanh-GELU would add ~1e-3 drift).
    a1, a2, a3, a4, a5 = 0.254829592, -0.284496736, 1.421413741, -1.453152027, 1.061405429
    p = 0.3275911
    s = jnp.where(x < 0.0, -1.0, 1.0)
    ax = jnp.abs(x)
    t = 1.0 / (1.0 + p * ax)
    poly = ((((a5 * t + a4) * t + a3) * t + a2) * t + a1) * t
    return s * (1.0 - poly * jnp.exp(-ax * ax))


def _gelu_exact(x):
    return 0.5 * x * (1.0 + _erf_approx(x * (1.0 / math.sqrt(2.0))))


def _layernorm(x, gamma, beta):
    mu = jnp.mean(x, axis=-1, keepdims=True)
    xc = x - mu
    var = jnp.mean(xc * xc, axis=-1, keepdims=True)
    return xc * jax.lax.rsqrt(var + LN_EPS) * gamma + beta


# ----------------------------------------- fused kernel -----------------------------------------
def _fused_forward_kernel(xp_ref, trig_ref, probe_ref,
                          w_eb_ref, vecs_ref, w_qkv_ref, w_aux_ref, w_out_ref,
                          o_ref, x_scr):
    f32 = jnp.float32

    # ---------------- fused patch + positional + probe embedding ----------------
    patch_emb = (
        jnp.dot(xp_ref[...], w_eb_ref[0:IN_DIM, :], preferred_element_type=f32)
        + jnp.dot(trig_ref[...], w_eb_ref[IN_DIM:IN_DIM + POS_DIM, :],
                  preferred_element_type=f32)
        + vecs_ref[0:1, :])                                               # [BN, D]
    probe_emb = (
        jnp.dot(probe_ref[...], w_eb_ref[IN_DIM + POS_DIM:EB_ROWS, :],
                preferred_element_type=f32)
        + vecs_ref[1:2, :])                                               # [B_TOK, D]

    # Assemble the padded token slab in VMEM: [patch tokens | probe tokens | zero pad].
    x_scr[...] = jnp.zeros((M_PAD, D), f32)
    x_scr[0:BN, :] = patch_emb
    x_scr[BN:M_REAL, :] = probe_emb
    x = x_scr[...]

    # -------- additive block-diagonal attention mask, built in-kernel (perf item 1) --------
    ri = jax.lax.broadcasted_iota(jnp.int32, (M_PAD, M_PAD), 0)
    ci = jax.lax.broadcasted_iota(jnp.int32, (M_PAD, M_PAD), 1)

    def _batch_id(t):
        # patch rows: t // N_TOK (shift); probe rows: t - BN; pad rows: unique id
        # (>= M_REAL) so each padding row only attends to itself (no NaN softmax).
        return jnp.where(t < BN, jnp.right_shift(t, N_SHIFT),
                         jnp.where(t < M_REAL, t - BN, t))

    amask = jnp.where(_batch_id(ri) == _batch_id(ci), 0.0, NEG_INF)      # [M_PAD, M_PAD]

    # ------------------------------ transformer layers (unrolled) ------------------------------
    for l in range(DEPTH):
        vb = 2 + VEC_PER_LAYER * l
        g1  = vecs_ref[vb + 0:vb + 1, :]
        b1  = vecs_ref[vb + 1:vb + 2, :]
        bo  = vecs_ref[vb + 2:vb + 3, :]
        g2  = vecs_ref[vb + 3:vb + 4, :]
        b2  = vecs_ref[vb + 4:vb + 5, :]
        bm1 = vecs_ref[vb + 5:vb + 6, :]
        bm2 = vecs_ref[vb + 6:vb + 7, :]
        ab = l * AUX_ROWS

        # ------- attention (pre-norm); per-head q/k/v live in 128-lane blocks -------
        xn = _layernorm(x, g1, b1)
        acc = None
        for h in range(HEADS):                       # static unroll over heads
            qkvh = jnp.dot(xn, w_qkv_ref[l * HEADS + h],
                           preferred_element_type=f32)                   # [M, 384]
            qh = qkvh[:, 0:HPAD]                     # softmax scale folded into weights
            kh = qkvh[:, HPAD:2 * HPAD]
            vh = qkvh[:, 2 * HPAD:3 * HPAD]
            # q @ k^T without materializing a transpose (contract last dims);
            # zero-padded lanes contribute exactly 0.
            s = jax.lax.dot_general(qh, kh, (((1,), (1,)), ((), ())),
                                    preferred_element_type=f32)          # [M, M]
            s = s + amask
            s = s - jnp.max(s, axis=-1, keepdims=True)
            p = jnp.exp(s)
            p = p * pl.reciprocal(jnp.sum(p, axis=-1, keepdims=True), approx=True)
            oh = jnp.dot(p, vh, preferred_element_type=f32)              # [M, HPAD]
            pr = jnp.dot(oh, w_aux_ref[ab + h * HPAD:ab + (h + 1) * HPAD, :],
                         preferred_element_type=f32)                     # [M, D]
            acc = pr if acc is None else acc + pr
        x = x + acc + bo

        # ----------------------------------- mlp (pre-norm) -----------------------------------
        xn = _layernorm(x, g2, b2)
        h1 = jnp.dot(xn, w_aux_ref[ab + HEADS * HPAD:ab + HEADS * HPAD + D, :],
                     preferred_element_type=f32) + bm1
        h1 = _gelu_exact(h1)
        x = x + jnp.dot(h1, w_aux_ref[ab + HEADS * HPAD + D:ab + AUX_ROWS, :],
                        preferred_element_type=f32) + bm2

    # ------------- embedding -> patch projection (lane-padded to 128, bias as last row) -------------
    o_ref[...] = (jnp.dot(x, w_out_ref[0:D, :], preferred_element_type=f32)
                  + w_out_ref[D:D + 1, :])


def fused_forward(xp, trig, probe_f, packed):
    # Single grid-less pallas_call: every operand (~0.7 MiB total) lives whole in VMEM,
    # no HBM round-trips between stages. No grid on v5e/v6e (1 TC) -> zero step overhead.
    vmem = pl.BlockSpec(memory_space=pltpu.MemorySpace.VMEM)
    return pl.pallas_call(
        _fused_forward_kernel,
        out_shape=jax.ShapeDtypeStruct((M_PAD, OUT_PAD), jnp.float32),
        in_specs=[vmem] * 8,
        out_specs=vmem,
        scratch_shapes=[pltpu.VMEM((M_PAD, D), jnp.float32)],
    )(xp, trig, probe_f,
      packed['w_eb'], packed['vecs'], packed['w_qkv'], packed['w_aux'], packed['w_out'])


# ------------------------------------------- parameters -------------------------------------------
def init_params(key):
    ks = iter(jax.random.split(key, 64))

    def w(shape):
        return jax.random.normal(next(ks), shape, jnp.float32) * 0.02

    def b(shape):
        return jax.random.normal(next(ks), shape, jnp.float32) * 0.01

    params = {
        'w_patch': w((IN_DIM, D)),     'b_patch': b((D,)),
        'w_pos':   w((POS_DIM, D)),    'b_pos':   b((D,)),
        'w_probe': w((PROBE_DIM, D)),  'b_probe': b((D,)),
        'w_out':   w((D, PATCH_DIM2)), 'b_out':   b((PATCH_DIM2,)),
        'layers': [],
    }
    for _ in range(DEPTH):
        params['layers'].append(dict(
            g1=jnp.ones((D,), jnp.float32), be1=jnp.zeros((D,), jnp.float32),
            wq=w((D, INNER)), wk=w((D, INNER)), wv=w((D, INNER)),
            wo=w((INNER, D)), bo=b((D,)),
            g2=jnp.ones((D,), jnp.float32), be2=jnp.zeros((D,), jnp.float32),
            w1=w((D, HIDDEN)), bm1=b((HIDDEN,)),
            w2=w((HIDDEN, D)), bm2=b((D,)),
        ))
    return params


def pack_params(params):
    """One-time host-side packing: 8 kernel operands, lane/sublane-aligned, scale folded."""
    layers = params['layers']

    # fused embedding weights: [w_patch | w_pos | w_probe] stacked on rows -> [88, D]
    w_eb = jnp.concatenate([params['w_patch'], params['w_pos'], params['w_probe']], axis=0)

    # one [16, D] slab with every bias / LayerNorm vector (perf item 9)
    rows = [params['b_patch'] + params['b_pos'], params['b_probe']]
    for lp in layers:
        rows += [lp['g1'], lp['be1'], lp['bo'], lp['g2'], lp['be2'], lp['bm1'], lp['bm2']]
    vecs = jnp.stack(rows, axis=0)

    # per-(layer, head) qkv weights, 128-lane blocks, softmax scale folded into q (items 2+3)
    def lane_pad(wc):
        return jnp.pad(wc, ((0, 0), (0, HPAD - wc.shape[1])))

    qkv = []
    for lp in layers:
        for h in range(HEADS):
            c = slice(h * DIM_HEAD, (h + 1) * DIM_HEAD)
            qkv.append(jnp.concatenate(
                [lane_pad(lp['wq'][:, c] * SCALE),
                 lane_pad(lp['wk'][:, c]),
                 lane_pad(lp['wv'][:, c])], axis=1))
    w_qkv = jnp.stack(qkv, axis=0)                       # [DEPTH*HEADS, D, 3*HPAD]

    # per-layer aux weights: [wo_h0 (128 rows, zero-padded) | wo_h1 | w_mlp1 | w_mlp2]
    aux = []
    for lp in layers:
        for h in range(HEADS):
            aux.append(jnp.pad(lp['wo'][h * DIM_HEAD:(h + 1) * DIM_HEAD, :],
                               ((0, HPAD - DIM_HEAD), (0, 0))))
        aux += [lp['w1'], lp['w2']]
    w_aux = jnp.concatenate(aux, axis=0)                 # [DEPTH*AUX_ROWS, D]

    # lane-padded output projection with bias folded in as a trailing row (item 5)
    w_out = jnp.concatenate(
        [jnp.pad(params['w_out'], ((0, 0), (0, OUT_PAD - PATCH_DIM2))),
         jnp.pad(params['b_out'][None, :], ((0, 0), (0, OUT_PAD - PATCH_DIM2)))], axis=0)

    return dict(w_eb=w_eb, vecs=vecs, w_qkv=w_qkv, w_aux=w_aux, w_out=w_out)


# --------------------------------------------- forward ---------------------------------------------
def ptychovit_forward(x, scanLoc, probe, packed):
    B, N = x.shape[0], x.shape[1]
    assert (B, N) == (B_TOK, N_TOK), "attention mask / padding are baked for this config"

    xp = x.reshape(B * N, IN_DIM).astype(jnp.float32)
    probe_f = probe.reshape(B, PROBE_DIM).astype(jnp.float32)

    # TODO(synk): the sin/cos positional features stay in this (fully fusible, ~5-op)
    #             XLA chain because jnp.sin/cos lowering inside Mosaic isn't guaranteed
    #             on all jax versions; mask, indicator columns and token-slab assembly
    #             now live inside the kernel.
    sl = scanLoc.reshape(B * N, 4).astype(jnp.float32)
    s = jnp.stack([sl[:, 0], sl[:, 2]], axis=-1) * (math.pi / IMAGE_SIZE)     # [BN, 2]
    pow2 = jnp.asarray([float(2 ** l) for l in range(L)], jnp.float32)        # [L]
    ang = s[:, None, :] * pow2[None, :, None]                                 # [BN, L, 2]
    trig = jnp.concatenate([jnp.sin(ang), jnp.cos(ang)], axis=-1).reshape(B * N, POS_DIM)

    out = fused_forward(xp, trig, probe_f, packed)        # [M_PAD, 128]
    out = out[:B * N, :PATCH_DIM2]                        # patch tokens only; drop probe + pad rows
    return out.reshape(B, N, PATCH, PATCH, 2)


# ----------------------------------------------- main -----------------------------------------------
if __name__ == "__main__":
    key = jax.random.PRNGKey(0)
    kx, ksc, kp, kw = jax.random.split(key, 4)
    B, N = B_TOK, N_TOK

    x = jax.random.normal(kx, (B, N, CHANNELS, PATCH, PATCH), jnp.float32)
    scanLoc = jax.random.uniform(ksc, (B, N, 4), jnp.float32, 0.0, IMAGE_SIZE)
    probe = jax.random.normal(kp, (B, PATCH, PATCH, 2), jnp.float32)

    params = init_params(kw)
    packed = pack_params(params)

    fwd = jax.jit(ptychovit_forward)
    out = jax.block_until_ready(fwd(x, scanLoc, probe, packed))
    assert out.shape == (B, N, PATCH, PATCH, 2), out.shape
    assert bool(jnp.all(jnp.isfinite(out)))
    print("KERNEL_OK")
</pallas_src>

<mosaic_0001>
module attributes {stable_mosaic.version = 11 : i64} {
  func.func @_fused_forward_kernel(%arg0: memref<16x16xf32, #tpu.memory_space<vmem>>, %arg1: memref<16x40xf32, #tpu.memory_space<vmem>>, %arg2: memref<2x32xf32, #tpu.memory_space<vmem>>, %arg3: memref<88x64xf32, #tpu.memory_space<vmem>>, %arg4: memref<16x64xf32, #tpu.memory_space<vmem>>, %arg5: memref<4x64x384xf32, #tpu.memory_space<vmem>>, %arg6: memref<768x64xf32, #tpu.memory_space<vmem>>, %arg7: memref<65x128xf32, #tpu.memory_space<vmem>>, %arg8: memref<24x128xf32, #tpu.memory_space<vmem>>, %arg9: memref<24x64xf32, #tpu.memory_space<vmem>>) attributes {dimension_semantics = [], scalar_prefetch = 0 : i64, scratch_operands = 1 : i64, tpu.core_type = #tpu.core_type<tc>} {
    %c0 = arith.constant 0 : index
    %c0_0 = arith.constant 0 : index
    %0 = vector.load %arg0[%c0, %c0_0] : memref<16x16xf32, #tpu.memory_space<vmem>>, vector<16x16xf32>
    %c0_1 = arith.constant 0 : index
    %c0_2 = arith.constant 0 : index
    %1 = vector.load %arg3[%c0_1, %c0_2] : memref<88x64xf32, #tpu.memory_space<vmem>>, vector<16x64xf32>
    %cst = arith.constant dense<0.000000e+00> : vector<16x64xf32>
    %2 = tpu.matmul %0, %1, %cst {dimension_numbers = #tpu.dot_dimension_numbers<[1], [0], [0], [1], [0, 0, 1, 1], [], []>} : vector<16x16xf32>, vector<16x64xf32>, vector<16x64xf32> -> vector<16x64xf32>
    %c0_3 = arith.constant 0 : index
    %c0_4 = arith.constant 0 : index
    %3 = vector.load %arg1[%c0_3, %c0_4] : memref<16x40xf32, #tpu.memory_space<vmem>>, vector<16x40xf32>
    %c16 = arith.constant 16 : index
    %c0_5 = arith.constant 0 : index
    %4 = vector.load %arg3[%c16, %c0_5] : memref<88x64xf32, #tpu.memory_space<vmem>>, vector<40x64xf32>
    %cst_6 = arith.constant dense<0.000000e+00> : vector<16x64xf32>
    %5 = tpu.matmul %3, %4, %cst_6 {dimension_numbers = #tpu.dot_dimension_numbers<[1], [0], [0], [1], [0, 0, 1, 1], [], []>} : vector<16x40xf32>, vector<40x64xf32>, vector<16x64xf32> -> vector<16x64xf32>
    %6 = arith.addf %2, %5 : vector<16x64xf32>
    %c0_7 = arith.constant 0 : index
    %c0_8 = arith.constant 0 : index
    %7 = vector.load %arg4[%c0_7, %c0_8] : memref<16x64xf32, #tpu.memory_space<vmem>>, vector<1x64xf32>
    %8 = vector.broadcast %7 : vector<1x64xf32> to vector<16x64xf32>
    %9 = arith.addf %6, %8 : vector<16x64xf32>
    %c0_9 = arith.constant 0 : index
    %c0_10 = arith.constant 0 : index
    %10 = vector.load %arg2[%c0_9, %c0_10] : memref<2x32xf32, #tpu.memory_space<vmem>>, vector<2x32xf32>
    %c56 = arith.constant 56 : index
    %c0_11 = arith.constant 0 : index
    %11 = vector.load %arg3[%c56, %c0_11] : memref<88x64xf32, #tpu.memory_space<vmem>>, vector<32x64xf32>
    %cst_12 = arith.constant dense<0.000000e+00> : vector<2x64xf32>
    %12 = tpu.matmul %10, %11, %cst_12 {dimension_numbers = #tpu.dot_dimension_numbers<[1], [0], [0], [1], [0, 0, 1, 1], [], []>} : vector<2x32xf32>, vector<32x64xf32>, vector<2x64xf32> -> vector<2x64xf32>
    %c1 = arith.constant 1 : index
    %c0_13 = arith.constant 0 : index
    %13 = vector.load %arg4[%c1, %c0_13] : memref<16x64xf32, #tpu.memory_space<vmem>>, vector<1x64xf32>
    %14 = vector.broadcast %13 : vector<1x64xf32> to vector<2x64xf32>
    %15 = arith.addf %12, %14 : vector<2x64xf32>
    %cst_14 = arith.constant 0.000000e+00 : f32
    %16 = vector.broadcast %cst_14 : f32 to vector<24x64xf32>
    %c0_15 = arith.constant 0 : index
    %c0_16 = arith.constant 0 : index
    %17 = vector.load %arg9[%c0_15, %c0_16] : memref<24x64xf32, #tpu.memory_space<vmem>>, vector<24x64xf32>
    tpu.vector_store %arg9[%c0_15, %c0_16], %16 {strides = array<i32>} : memref<24x64xf32, #tpu.memory_space<vmem>>, vector<24x64xf32>,
    %c0_17 = arith.constant 0 : index
    %c0_18 = arith.constant 0 : index
    %18 = vector.load %arg9[%c0_17, %c0_18] : memref<24x64xf32, #tpu.memory_space<vmem>>, vector<16x64xf32>
    tpu.vector_store %arg9[%c0_17, %c0_18], %9 {strides = array<i32>} : memref<24x64xf32, #tpu.memory_space<vmem>>, vector<16x64xf32>,
    %c16_19 = arith.constant 16 : index
    %c0_20 = arith.constant 0 : index
    %19 = vector.load %arg9[%c16_19, %c0_20] : memref<24x64xf32, #tpu.memory_space<vmem>>, vector<2x64xf32>
    tpu.vector_store %arg9[%c16_19, %c0_20], %15 {strides = array<i32>} : memref<24x64xf32, #tpu.memory_space<vmem>>, vector<2x64xf32>,
    %c0_21 = arith.constant 0 : index
    %c0_22 = arith.constant 0 : index
    %20 = vector.load %arg9[%c0_21, %c0_22] : memref<24x64xf32, #tpu.memory_space<vmem>>, vector<24x64xf32>
    %21 = tpu.iota {dimensions = array<i32: 0>} : vector<24x24xi32>
    %22 = tpu.iota {dimensions = array<i32: 1>} : vector<24x24xi32>
    %c16_i32 = arith.constant 16 : i32
    %23 = vector.broadcast %c16_i32 : i32 to vector<24x24xi32>
    %24 = arith.cmpi slt, %21, %23 : vector<24x24xi32>
    %c3_i32 = arith.constant 3 : i32
    %25 = vector.broadcast %c3_i32 : i32 to vector<24x24xi32>
    %26 = arith.shrsi %21, %25 : vector<24x24xi32>
    %c18_i32 = arith.constant 18 : i32
    %27 = vector.broadcast %c18_i32 : i32 to vector<24x24xi32>
    %28 = arith.cmpi slt, %21, %27 : vector<24x24xi32>
    %c16_i32_23 = arith.constant 16 : i32
    %29 = vector.broadcast %c16_i32_23 : i32 to vector<24x24xi32>
    %30 = arith.subi %21, %29 : vector<24x24xi32>
    %31 = arith.select %28, %30, %21 : vector<24x24xi1>, vector<24x24xi32>
    %32 = arith.select %24, %26, %31 : vector<24x24xi1>, vector<24x24xi32>
    %c16_i32_24 = arith.constant 16 : i32
    %33 = vector.broadcast %c16_i32_24 : i32 to vector<24x24xi32>
    %34 = arith.cmpi slt, %22, %33 : vector<24x24xi32>
    %c3_i32_25 = arith.constant 3 : i32
    %35 = vector.broadcast %c3_i32_25 : i32 to vector<24x24xi32>
    %36 = arith.shrsi %22, %35 : vector<24x24xi32>
    %c18_i32_26 = arith.constant 18 : i32
    %37 = vector.broadcast %c18_i32_26 : i32 to vector<24x24xi32>
    %38 = arith.cmpi slt, %22, %37 : vector<24x24xi32>
    %c16_i32_27 = arith.constant 16 : i32
    %39 = vector.broadcast %c16_i32_27 : i32 to vector<24x24xi32>
    %40 = arith.subi %22, %39 : vector<24x24xi32>
    %41 = arith.select %38, %40, %22 : vector<24x24xi1>, vector<24x24xi32>
    %42 = arith.select %34, %36, %41 : vector<24x24xi1>, vector<24x24xi32>
    %43 = arith.cmpi eq, %32, %42 : vector<24x24xi32>
    %cst_28 = arith.constant 0.000000e+00 : f32
    %cst_29 = arith.constant -1.000000e+30 : f32
    %44 = vector.broadcast %cst_28 : f32 to vector<24x24xf32>
    %45 = vector.broadcast %cst_29 : f32 to vector<24x24xf32>
    %46 = arith.select %43, %44, %45 : vector<24x24xi1>, vector<24x24xf32>
    %c2 = arith.constant 2 : index
    %c0_30 = arith.constant 0 : index
    %47 = vector.load %arg4[%c2, %c0_30] : memref<16x64xf32, #tpu.memory_space<vmem>>, vector<1x64xf32>
    %c3 = arith.constant 3 : index
    %c0_31 = arith.constant 0 : index
    %48 = vector.load %arg4[%c3, %c0_31] : memref<16x64xf32, #tpu.memory_space<vmem>>, vector<1x64xf32>
    %c4 = arith.constant 4 : index
    %c0_32 = arith.constant 0 : index
    %49 = vector.load %arg4[%c4, %c0_32] : memref<16x64xf32, #tpu.memory_space<vmem>>, vector<1x64xf32>
    %c5 = arith.constant 5 : index
    %c0_33 = arith.constant 0 : index
    %50 = vector.load %arg4[%c5, %c0_33] : memref<16x64xf32, #tpu.memory_space<vmem>>, vector<1x64xf32>
    %c6 = arith.constant 6 : index
    %c0_34 = arith.constant 0 : index
    %51 = vector.load %arg4[%c6, %c0_34] : memref<16x64xf32, #tpu.memory_space<vmem>>, vector<1x64xf32>
    %c7 = arith.constant 7 : index
    %c0_35 = arith.constant 0 : index
    %52 = vector.load %arg4[%c7, %c0_35] : memref<16x64xf32, #tpu.memory_space<vmem>>, vector<1x64xf32>
    %c8 = arith.constant 8 : index
    %c0_36 = arith.constant 0 : index
    %53 = vector.load %arg4[%c8, %c0_36] : memref<16x64xf32, #tpu.memory_space<vmem>>, vector<1x64xf32>
    %cst_37 = arith.constant dense<0.000000e+00> : vector<24xf32>
    %54 = vector.multi_reduction <add>, %20, %cst_37 [1] : vector<24x64xf32> to vector<24xf32>
    %55 = vector.shape_cast %54 : vector<24xf32> to vector<24x1xf32>
    %cst_38 = arith.constant 6.400000e+01 : f32
    %56 = vector.broadcast %cst_38 : f32 to vector<24x1xf32>
    %57 = arith.divf %55, %56 : vector<24x1xf32>
    %58 = vector.broadcast %57 : vector<24x1xf32> to vector<24x64xf32>
    %59 = arith.subf %20, %58 : vector<24x64xf32>
    %60 = arith.mulf %59, %59 : vector<24x64xf32>
    %cst_39 = arith.constant dense<0.000000e+00> : vector<24xf32>
    %61 = vector.multi_reduction <add>, %60, %cst_39 [1] : vector<24x64xf32> to vector<24xf32>
    %62 = vector.shape_cast %61 : vector<24xf32> to vector<24x1xf32>
    %cst_40 = arith.constant 6.400000e+01 : f32
    %63 = vector.broadcast %cst_40 : f32 to vector<24x1xf32>
    %64 = arith.divf %62, %63 : vector<24x1xf32>
    %cst_41 = arith.constant 9.99999974E-6 : f32
    %65 = vector.broadcast %cst_41 : f32 to vector<24x1xf32>
    %66 = arith.addf %64, %65 : vector<24x1xf32>
    %67 = math.rsqrt %66 : vector<24x1xf32>
    %68 = vector.broadcast %67 : vector<24x1xf32> to vector<24x64xf32>
    %69 = arith.mulf %59, %68 : vector<24x64xf32>
    %70 = vector.broadcast %47 : vector<1x64xf32> to vector<24x64xf32>
    %71 = arith.mulf %69, %70 : vector<24x64xf32>
    %72 = vector.broadcast %48 : vector<1x64xf32> to vector<24x64xf32>
    %73 = arith.addf %71, %72 : vector<24x64xf32>
    %c0_42 = arith.constant 0 : index
    %c0_43 = arith.constant 0 : index
    %c0_44 = arith.constant 0 : index
    %74 = vector.load %arg5[%c0_42, %c0_43, %c0_44] : memref<4x64x384xf32, #tpu.memory_space<vmem>>, vector<1x64x384xf32>
    %75 = vector.shape_cast %74 : vector<1x64x384xf32> to vector<64x384xf32>
    %cst_45 = arith.constant dense<0.000000e+00> : vector<24x384xf32>
    %76 = tpu.matmul %73, %75, %cst_45 {dimension_numbers = #tpu.dot_dimension_numbers<[1], [0], [0], [1], [0, 0, 1, 1], [], []>} : vector<24x64xf32>, vector<64x384xf32>, vector<24x384xf32> -> vector<24x384xf32>
    %77 = vector.extract_strided_slice %76 {offsets = [0, 0], sizes = [24, 128], strides = [1, 1]} : vector<24x384xf32> to vector<24x128xf32>
    %78 = vector.extract_strided_slice %76 {offsets = [0, 128], sizes = [24, 128], strides = [1, 1]} : vector<24x384xf32> to vector<24x128xf32>
    %79 = vector.extract_strided_slice %76 {offsets = [0, 256], sizes = [24, 128], strides = [1, 1]} : vector<24x384xf32> to vector<24x128xf32>
    %cst_46 = arith.constant dense<0.000000e+00> : vector<24x24xf32>
    %80 = tpu.matmul %77, %78, %cst_46 {dimension_numbers = #tpu.dot_dimension_numbers<[1], [1], [0], [0], [0, 0, 1, 0], [], []>} : vector<24x128xf32>, vector<24x128xf32>, vector<24x24xf32> -> vector<24x24xf32>
    %81 = arith.addf %80, %46 : vector<24x24xf32>
    %cst_47 = arith.constant dense<0xFF800000> : vector<24xf32>
    %82 = vector.multi_reduction <maximumf>, %81, %cst_47 [1] : vector<24x24xf32> to vector<24xf32>
    %83 = vector.shape_cast %82 : vector<24xf32> to vector<24x1xf32>
    %84 = vector.broadcast %83 : vector<24x1xf32> to vector<24x24xf32>
    %85 = arith.subf %81, %84 : vector<24x24xf32>
    %86 = math.exp %85 : vector<24x24xf32>
    %cst_48 = arith.constant dense<0.000000e+00> : vector<24xf32>
    %87 = vector.multi_reduction <add>, %86, %cst_48 [1] : vector<24x24xf32> to vector<24xf32>
    %88 = vector.shape_cast %87 : vector<24xf32> to vector<24x1xf32>
    %89 = tpu.reciprocal %88 {approx = true} : vector<24x1xf32> -> vector<24x1xf32>
    %90 = vector.broadcast %89 : vector<24x1xf32> to vector<24x24xf32>
    %91 = arith.mulf %86, %90 : vector<24x24xf32>
    %cst_49 = arith.constant dense<0.000000e+00> : vector<24x128xf32>
    %92 = tpu.matmul %91, %79, %cst_49 {dimension_numbers = #tpu.dot_dimension_numbers<[1], [0], [0], [1], [0, 0, 1, 1], [], []>} : vector<24x24xf32>, vector<24x128xf32>, vector<24x128xf32> -> vector<24x128xf32>
    %c0_50 = arith.constant 0 : index
    %c0_51 = arith.constant 0 : index
    %93 = vector.load %arg6[%c0_50, %c0_51] : memref<768x64xf32, #tpu.memory_space<vmem>>, vector<128x64xf32>
    %cst_52 = arith.constant dense<0.000000e+00> : vector<24x64xf32>
    %94 = tpu.matmul %92, %93, %cst_52 {dimension_numbers = #tpu.dot_dimension_numbers<[1], [0], [0], [1], [0, 0, 1, 1], [], []>} : vector<24x128xf32>, vector<128x64xf32>, vector<24x64xf32> -> vector<24x64xf32>
    %c1_53 = arith.constant 1 : index
    %c0_54 = arith.constant 0 : index
    %c0_55 = arith.constant 0 : index
    %95 = vector.load %arg5[%c1_53, %c0_54, %c0_55] : memref<4x64x384xf32, #tpu.memory_space<vmem>>, vector<1x64x384xf32>
    %96 = vector.shape_cast %95 : vector<1x64x384xf32> to vector<64x384xf32>
    %cst_56 = arith.constant dense<0.000000e+00> : vector<24x384xf32>
    %97 = tpu.matmul %73, %96, %cst_56 {dimension_numbers = #tpu.dot_dimension_numbers<[1], [0], [0], [1], [0, 0, 1, 1], [], []>} : vector<24x64xf32>, vector<64x384xf32>, vector<24x384xf32> -> vector<24x384xf32>
    %98 = vector.extract_strided_slice %97 {offsets = [0, 0], sizes = [24, 128], strides = [1, 1]} : vector<24x384xf32> to vector<24x128xf32>
    %99 = vector.extract_strided_slice %97 {offsets = [0, 128], sizes = [24, 128], strides = [1, 1]} : vector<24x384xf32> to vector<24x128xf32>
    %100 = vector.extract_strided_slice %97 {offsets = [0, 256], sizes = [24, 128], strides = [1, 1]} : vector<24x384xf32> to vector<24x128xf32>
    %cst_57 = arith.constant dense<0.000000e+00> : vector<24x24xf32>
    %101 = tpu.matmul %98, %99, %cst_57 {dimension_numbers = #tpu.dot_dimension_numbers<[1], [1], [0], [0], [0, 0, 1, 0], [], []>} : vector<24x128xf32>, vector<24x128xf32>, vector<24x24xf32> -> vector<24x24xf32>
    %102 = arith.addf %101, %46 : vector<24x24xf32>
    %cst_58 = arith.constant dense<0xFF800000> : vector<24xf32>
    %103 = vector.multi_reduction <maximumf>, %102, %cst_58 [1] : vector<24x24xf32> to vector<24xf32>
    %104 = vector.shape_cast %103 : vector<24xf32> to vector<24x1xf32>
    %105 = vector.broadcast %104 : vector<24x1xf32> to vector<24x24xf32>
    %106 = arith.subf %102, %105 : vector<24x24xf32>
    %107 = math.exp %106 : vector<24x24xf32>
    %cst_59 = arith.constant dense<0.000000e+00> : vector<24xf32>
    %108 = vector.multi_reduction <add>, %107, %cst_59 [1] : vector<24x24xf32> to vector<24xf32>
    %109 = vector.shape_cast %108 : vector<24xf32> to vector<24x1xf32>
    %110 = tpu.reciprocal %109 {approx = true} : vector<24x1xf32> -> vector<24x1xf32>
    %111 = vector.broadcast %110 : vector<24x1xf32> to vector<24x24xf32>
    %112 = arith.mulf %107, %111 : vector<24x24xf32>
    %cst_60 = arith.constant dense<0.000000e+00> : vector<24x128xf32>
    %113 = tpu.matmul %112, %100, %cst_60 {dimension_numbers = #tpu.dot_dimension_numbers<[1], [0], [0], [1], [0, 0, 1, 1], [], []>} : vector<24x24xf32>, vector<24x128xf32>, vector<24x128xf32> -> vector<24x128xf32>
    %c128 = arith.constant 128 : index
    %c0_61 = arith.constant 0 : index
    %114 = vector.load %arg6[%c128, %c0_61] : memref<768x64xf32, #tpu.memory_space<vmem>>, vector<128x64xf32>
    %cst_62 = arith.constant dense<0.000000e+00> : vector<24x64xf32>
    %115 = tpu.matmul %113, %114, %cst_62 {dimension_numbers = #tpu.dot_dimension_numbers<[1], [0], [0], [1], [0, 0, 1, 1], [], []>} : vector<24x128xf32>, vector<128x64xf32>, vector<24x64xf32> -> vector<24x64xf32>
    %116 = arith.addf %94, %115 : vector<24x64xf32>
    %117 = arith.addf %20, %116 : vector<24x64xf32>
    %118 = vector.broadcast %49 : vector<1x64xf32> to vector<24x64xf32>
    %119 = arith.addf %117, %118 : vector<24x64xf32>
    %cst_63 = arith.constant dense<0.000000e+00> : vector<24xf32>
    %120 = vector.multi_reduction <add>, %119, %cst_63 [1] : vector<24x64xf32> to vector<24xf32>
    %121 = vector.shape_cast %120 : vector<24xf32> to vector<24x1xf32>
    %cst_64 = arith.constant 6.400000e+01 : f32
    %122 = vector.broadcast %cst_64 : f32 to vector<24x1xf32>
    %123 = arith.divf %121, %122 : vector<24x1xf32>
    %124 = vector.broadcast %123 : vector<24x1xf32> to vector<24x64xf32>
    %125 = arith.subf %119, %124 : vector<24x64xf32>
    %126 = arith.mulf %125, %125 : vector<24x64xf32>
    %cst_65 = arith.constant dense<0.000000e+00> : vector<24xf32>
    %127 = vector.multi_reduction <add>, %126, %cst_65 [1] : vector<24x64xf32> to vector<24xf32>
    %128 = vector.shape_cast %127 : vector<24xf32> to vector<24x1xf32>
    %cst_66 = arith.constant 6.400000e+01 : f32
    %129 = vector.broadcast %cst_66 : f32 to vector<24x1xf32>
    %130 = arith.divf %128, %129 : vector<24x1xf32>
    %cst_67 = arith.constant 9.99999974E-6 : f32
    %131 = vector.broadcast %cst_67 : f32 to vector<24x1xf32>
    %132 = arith.addf %130, %131 : vector<24x1xf32>
    %133 = math.rsqrt %132 : vector<24x1xf32>
    %134 = vector.broadcast %133 : vector<24x1xf32> to vector<24x64xf32>
    %135 = arith.mulf %125, %134 : vector<24x64xf32>
    %136 = vector.broadcast %50 : vector<1x64xf32> to vector<24x64xf32>
    %137 = arith.mulf %135, %136 : vector<24x64xf32>
    %138 = vector.broadcast %51 : vector<1x64xf32> to vector<24x64xf32>
    %139 = arith.addf %137, %138 : vector<24x64xf32>
    %c256 = arith.constant 256 : index
    %c0_68 = arith.constant 0 : index
    %140 = vector.load %arg6[%c256, %c0_68] : memref<768x64xf32, #tpu.memory_space<vmem>>, vector<64x64xf32>
    %cst_69 = arith.constant dense<0.000000e+00> : vector<24x64xf32>
    %141 = tpu.matmul %139, %140, %cst_69 {dimension_numbers = #tpu.dot_dimension_numbers<[1], [0], [0], [1], [0, 0, 1, 1], [], []>} : vector<24x64xf32>, vector<64x64xf32>, vector<24x64xf32> -> vector<24x64xf32>
    %142 = vector.broadcast %52 : vector<1x64xf32> to vector<24x64xf32>
    %143 = arith.addf %141, %142 : vector<24x64xf32>
    %cst_70 = arith.constant 5.000000e-01 : f32
    %144 = vector.broadcast %cst_70 : f32 to vector<24x64xf32>
    %145 = arith.mulf %144, %143 : vector<24x64xf32>
    %cst_71 = arith.constant 0.707106769 : f32
    %146 = vector.broadcast %cst_71 : f32 to vector<24x64xf32>
    %147 = arith.mulf %143, %146 : vector<24x64xf32>
    %cst_72 = arith.constant 0.000000e+00 : f32
    %148 = vector.broadcast %cst_72 : f32 to vector<24x64xf32>
    %149 = arith.cmpf olt, %147, %148 : vector<24x64xf32>
    %cst_73 = arith.constant -1.000000e+00 : f32
    %cst_74 = arith.constant 1.000000e+00 : f32
    %150 = vector.broadcast %cst_73 : f32 to vector<24x64xf32>
    %151 = vector.broadcast %cst_74 : f32 to vector<24x64xf32>
    %152 = arith.select %149, %150, %151 : vector<24x64xi1>, vector<24x64xf32>
    %153 = math.absf %147 : vector<24x64xf32>
    %cst_75 = arith.constant 0.327591091 : f32
    %154 = vector.broadcast %cst_75 : f32 to vector<24x64xf32>
    %155 = arith.mulf %154, %153 : vector<24x64xf32>
    %cst_76 = arith.constant 1.000000e+00 : f32
    %156 = vector.broadcast %cst_76 : f32 to vector<24x64xf32>
    %157 = arith.addf %156, %155 : vector<24x64xf32>
    %cst_77 = arith.constant 1.000000e+00 : f32
    %158 = vector.broadcast %cst_77 : f32 to vector<24x64xf32>
    %159 = arith.divf %158, %157 : vector<24x64xf32>
    %cst_78 = arith.constant 1.06140542 : f32
    %160 = vector.broadcast %cst_78 : f32 to vector<24x64xf32>
    %161 = arith.mulf %160, %159 : vector<24x64xf32>
    %cst_79 = arith.constant -1.45315206 : f32
    %162 = vector.broadcast %cst_79 : f32 to vector<24x64xf32>
    %163 = arith.addf %161, %162 : vector<24x64xf32>
    %164 = arith.mulf %163, %159 : vector<24x64xf32>
    %cst_80 = arith.constant 1.42141378 : f32
    %165 = vector.broadcast %cst_80 : f32 to vector<24x64xf32>
    %166 = arith.addf %164, %165 : vector<24x64xf32>
    %167 = arith.mulf %166, %159 : vector<24x64xf32>
    %cst_81 = arith.constant -0.284496725 : f32
    %168 = vector.broadcast %cst_81 : f32 to vector<24x64xf32>
    %169 = arith.addf %167, %168 : vector<24x64xf32>
    %170 = arith.mulf %169, %159 : vector<24x64xf32>
    %cst_82 = arith.constant 0.254829586 : f32
    %171 = vector.broadcast %cst_82 : f32 to vector<24x64xf32>
    %172 = arith.addf %170, %171 : vector<24x64xf32>
    %173 = arith.mulf %172, %159 : vector<24x64xf32>
    %cst_83 = arith.constant 0.000000e+00 : f32
    %174 = vector.broadcast %cst_83 : f32 to vector<24x64xf32>
    %175 = arith.subf %174, %153 : vector<24x64xf32>
    %176 = arith.mulf %175, %153 : vector<24x64xf32>
    %177 = math.exp %176 : vector<24x64xf32>
    %178 = arith.mulf %173, %177 : vector<24x64xf32>
    %cst_84 = arith.constant 1.000000e+00 : f32
    %179 = vector.broadcast %cst_84 : f32 to vector<24x64xf32>
    %180 = arith.subf %179, %178 : vector<24x64xf32>
    %181 = arith.mulf %152, %180 : vector<24x64xf32>
    %cst_85 = arith.constant 1.000000e+00 : f32
    %182 = vector.broadcast %cst_85 : f32 to vector<24x64xf32>
    %183 = arith.addf %182, %181 : vector<24x64xf32>
    %184 = arith.mulf %145, %183 : vector<24x64xf32>
    %c320 = arith.constant 320 : index
    %c0_86 = arith.constant 0 : index
    %185 = vector.load %arg6[%c320, %c0_86] : memref<768x64xf32, #tpu.memory_space<vmem>>, vector<64x64xf32>
    %cst_87 = arith.constant dense<0.000000e+00> : vector<24x64xf32>
    %186 = tpu.matmul %184, %185, %cst_87 {dimension_numbers = #tpu.dot_dimension_numbers<[1], [0], [0], [1], [0, 0, 1, 1], [], []>} : vector<24x64xf32>, vector<64x64xf32>, vector<24x64xf32> -> vector<24x64xf32>
    %187 = arith.addf %119, %186 : vector<24x64xf32>
    %188 = vector.broadcast %53 : vector<1x64xf32> to vector<24x64xf32>
    %189 = arith.addf %187, %188 : vector<24x64xf32>
    %c9 = arith.constant 9 : index
    %c0_88 = arith.constant 0 : index
    %190 = vector.load %arg4[%c9, %c0_88] : memref<16x64xf32, #tpu.memory_space<vmem>>, vector<1x64xf32>
    %c10 = arith.constant 10 : index
    %c0_89 = arith.constant 0 : index
    %191 = vector.load %arg4[%c10, %c0_89] : memref<16x64xf32, #tpu.memory_space<vmem>>, vector<1x64xf32>
    %c11 = arith.constant 11 : index
    %c0_90 = arith.constant 0 : index
    %192 = vector.load %arg4[%c11, %c0_90] : memref<16x64xf32, #tpu.memory_space<vmem>>, vector<1x64xf32>
    %c12 = arith.constant 12 : index
    %c0_91 = arith.constant 0 : index
    %193 = vector.load %arg4[%c12, %c0_91] : memref<16x64xf32, #tpu.memory_space<vmem>>, vector<1x64xf32>
    %c13 = arith.constant 13 : index
    %c0_92 = arith.constant 0 : index
    %194 = vector.load %arg4[%c13, %c0_92] : memref<16x64xf32, #tpu.memory_space<vmem>>, vector<1x64xf32>
    %c14 = arith.constant 14 : index
    %c0_93 = arith.constant 0 : index
    %195 = vector.load %arg4[%c14, %c0_93] : memref<16x64xf32, #tpu.memory_space<vmem>>, vector<1x64xf32>
    %c15 = arith.constant 15 : index
    %c0_94 = arith.constant 0 : index
    %196 = vector.load %arg4[%c15, %c0_94] : memref<16x64xf32, #tpu.memory_space<vmem>>, vector<1x64xf32>
    %cst_95 = arith.constant dense<0.000000e+00> : vector<24xf32>
    %197 = vector.multi_reduction <add>, %189, %cst_95 [1] : vector<24x64xf32> to vector<24xf32>
    %198 = vector.shape_cast %197 : vector<24xf32> to vector<24x1xf32>
    %cst_96 = arith.constant 6.400000e+01 : f32
    %199 = vector.broadcast %cst_96 : f32 to vector<24x1xf32>
    %200 = arith.divf %198, %199 : vector<24x1xf32>
    %201 = vector.broadcast %200 : vector<24x1xf32> to vector<24x64xf32>
    %202 = arith.subf %189, %201 : vector<24x64xf32>
    %203 = arith.mulf %202, %202 : vector<24x64xf32>
    %cst_97 = arith.constant dense<0.000000e+00> : vector<24xf32>
    %204 = vector.multi_reduction <add>, %203, %cst_97 [1] : vector<24x64xf32> to vector<24xf32>
    %205 = vector.shape_cast %204 : vector<24xf32> to vector<24x1xf32>
    %cst_98 = arith.constant 6.400000e+01 : f32
    %206 = vector.broadcast %cst_98 : f32 to vector<24x1xf32>
    %207 = arith.divf %205, %206 : vector<24x1xf32>
    %cst_99 = arith.constant 9.99999974E-6 : f32
    %208 = vector.broadcast %cst_99 : f32 to vector<24x1xf32>
    %209 = arith.addf %207, %208 : vector<24x1xf32>
    %210 = math.rsqrt %209 : vector<24x1xf32>
    %211 = vector.broadcast %210 : vector<24x1xf32> to vector<24x64xf32>
    %212 = arith.mulf %202, %211 : vector<24x64xf32>
    %213 = vector.broadcast %190 : vector<1x64xf32> to vector<24x64xf32>
    %214 = arith.mulf %212, %213 : vector<24x64xf32>
    %215 = vector.broadcast %191 : vector<1x64xf32> to vector<24x64xf32>
    %216 = arith.addf %214, %215 : vector<24x64xf32>
    %c2_100 = arith.constant 2 : index
    %c0_101 = arith.constant 0 : index
    %c0_102 = arith.constant 0 : index
    %217 = vector.load %arg5[%c2_100, %c0_101, %c0_102] : memref<4x64x384xf32, #tpu.memory_space<vmem>>, vector<1x64x384xf32>
    %218 = vector.shape_cast %217 : vector<1x64x384xf32> to vector<64x384xf32>
    %cst_103 = arith.constant dense<0.000000e+00> : vector<24x384xf32>
    %219 = tpu.matmul %216, %218, %cst_103 {dimension_numbers = #tpu.dot_dimension_numbers<[1], [0], [0], [1], [0, 0, 1, 1], [], []>} : vector<24x64xf32>, vector<64x384xf32>, vector<24x384xf32> -> vector<24x384xf32>
    %220 = vector.extract_strided_slice %219 {offsets = [0, 0], sizes = [24, 128], strides = [1, 1]} : vector<24x384xf32> to vector<24x128xf32>
    %221 = vector.extract_strided_slice %219 {offsets = [0, 128], sizes = [24, 128], strides = [1, 1]} : vector<24x384xf32> to vector<24x128xf32>
    %222 = vector.extract_strided_slice %219 {offsets = [0, 256], sizes = [24, 128], strides = [1, 1]} : vector<24x384xf32> to vector<24x128xf32>
    %cst_104 = arith.constant dense<0.000000e+00> : vector<24x24xf32>
    %223 = tpu.matmul %220, %221, %cst_104 {dimension_numbers = #tpu.dot_dimension_numbers<[1], [1], [0], [0], [0, 0, 1, 0], [], []>} : vector<24x128xf32>, vector<24x128xf32>, vector<24x24xf32> -> vector<24x24xf32>
    %224 = arith.addf %223, %46 : vector<24x24xf32>
    %cst_105 = arith.constant dense<0xFF800000> : vector<24xf32>
    %225 = vector.multi_reduction <maximumf>, %224, %cst_105 [1] : vector<24x24xf32> to vector<24xf32>
    %226 = vector.shape_cast %225 : vector<24xf32> to vector<24x1xf32>
    %227 = vector.broadcast %226 : vector<24x1xf32> to vector<24x24xf32>
    %228 = arith.subf %224, %227 : vector<24x24xf32>
    %229 = math.exp %228 : vector<24x24xf32>
    %cst_106 = arith.constant dense<0.000000e+00> : vector<24xf32>
    %230 = vector.multi_reduction <add>, %229, %cst_106 [1] : vector<24x24xf32> to vector<24xf32>
    %231 = vector.shape_cast %230 : vector<24xf32> to vector<24x1xf32>
    %232 = tpu.reciprocal %231 {approx = true} : vector<24x1xf32> -> vector<24x1xf32>
    %233 = vector.broadcast %232 : vector<24x1xf32> to vector<24x24xf32>
    %234 = arith.mulf %229, %233 : vector<24x24xf32>
    %cst_107 = arith.constant dense<0.000000e+00> : vector<24x128xf32>
    %235 = tpu.matmul %234, %222, %cst_107 {dimension_numbers = #tpu.dot_dimension_numbers<[1], [0], [0], [1], [0, 0, 1, 1], [], []>} : vector<24x24xf32>, vector<24x128xf32>, vector<24x128xf32> -> vector<24x128xf32>
    %c384 = arith.constant 384 : index
    %c0_108 = arith.constant 0 : index
    %236 = vector.load %arg6[%c384, %c0_108] : memref<768x64xf32, #tpu.memory_space<vmem>>, vector<128x64xf32>
    %cst_109 = arith.constant dense<0.000000e+00> : vector<24x64xf32>
    %237 = tpu.matmul %235, %236, %cst_109 {dimension_numbers = #tpu.dot_dimension_numbers<[1], [0], [0], [1], [0, 0, 1, 1], [], []>} : vector<24x128xf32>, vector<128x64xf32>, vector<24x64xf32> -> vector<24x64xf32>
    %c3_110 = arith.constant 3 : index
    %c0_111 = arith.constant 0 : index
    %c0_112 = arith.constant 0 : index
    %238 = vector.load %arg5[%c3_110, %c0_111, %c0_112] : memref<4x64x384xf32, #tpu.memory_space<vmem>>, vector<1x64x384xf32>
    %239 = vector.shape_cast %238 : vector<1x64x384xf32> to vector<64x384xf32>
    %cst_113 = arith.constant dense<0.000000e+00> : vector<24x384xf32>
    %240 = tpu.matmul %216, %239, %cst_113 {dimension_numbers = #tpu.dot_dimension_numbers<[1], [0], [0], [1], [0, 0, 1, 1], [], []>} : vector<24x64xf32>, vector<64x384xf32>, vector<24x384xf32> -> vector<24x384xf32>
    %241 = vector.extract_strided_slice %240 {offsets = [0, 0], sizes = [24, 128], strides = [1, 1]} : vector<24x384xf32> to vector<24x128xf32>
    %242 = vector.extract_strided_slice %240 {offsets = [0, 128], sizes = [24, 128], strides = [1, 1]} : vector<24x384xf32> to vector<24x128xf32>
    %243 = vector.extract_strided_slice %240 {offsets = [0, 256], sizes = [24, 128], strides = [1, 1]} : vector<24x384xf32> to vector<24x128xf32>
    %cst_114 = arith.constant dense<0.000000e+00> : vector<24x24xf32>
    %244 = tpu.matmul %241, %242, %cst_114 {dimension_numbers = #tpu.dot_dimension_numbers<[1], [1], [0], [0], [0, 0, 1, 0], [], []>} : vector<24x128xf32>, vector<24x128xf32>, vector<24x24xf32> -> vector<24x24xf32>
    %245 = arith.addf %244, %46 : vector<24x24xf32>
    %cst_115 = arith.constant dense<0xFF800000> : vector<24xf32>
    %246 = vector.multi_reduction <maximumf>, %245, %cst_115 [1] : vector<24x24xf32> to vector<24xf32>
    %247 = vector.shape_cast %246 : vector<24xf32> to vector<24x1xf32>
    %248 = vector.broadcast %247 : vector<24x1xf32> to vector<24x24xf32>
    %249 = arith.subf %245, %248 : vector<24x24xf32>
    %250 = math.exp %249 : vector<24x24xf32>
    %cst_116 = arith.constant dense<0.000000e+00> : vector<24xf32>
    %251 = vector.multi_reduction <add>, %250, %cst_116 [1] : vector<24x24xf32> to vector<24xf32>
    %252 = vector.shape_cast %251 : vector<24xf32> to vector<24x1xf32>
    %253 = tpu.reciprocal %252 {approx = true} : vector<24x1xf32> -> vector<24x1xf32>
    %254 = vector.broadcast %253 : vector<24x1xf32> to vector<24x24xf32>
    %255 = arith.mulf %250, %254 : vector<24x24xf32>
    %cst_117 = arith.constant dense<0.000000e+00> : vector<24x128xf32>
    %256 = tpu.matmul %255, %243, %cst_117 {dimension_numbers = #tpu.dot_dimension_numbers<[1], [0], [0], [1], [0, 0, 1, 1], [], []>} : vector<24x24xf32>, vector<24x128xf32>, vector<24x128xf32> -> vector<24x128xf32>
    %c512 = arith.constant 512 : index
    %c0_118 = arith.constant 0 : index
    %257 = vector.load %arg6[%c512, %c0_118] : memref<768x64xf32, #tpu.memory_space<vmem>>, vector<128x64xf32>
    %cst_119 = arith.constant dense<0.000000e+00> : vector<24x64xf32>
    %258 = tpu.matmul %256, %257, %cst_119 {dimension_numbers = #tpu.dot_dimension_numbers<[1], [0], [0], [1], [0, 0, 1, 1], [], []>} : vector<24x128xf32>, vector<128x64xf32>, vector<24x64xf32> -> vector<24x64xf32>
    %259 = arith.addf %237, %258 : vector<24x64xf32>
    %260 = arith.addf %189, %259 : vector<24x64xf32>
    %261 = vector.broadcast %192 : vector<1x64xf32> to vector<24x64xf32>
    %262 = arith.addf %260, %261 : vector<24x64xf32>
    %cst_120 = arith.constant dense<0.000000e+00> : vector<24xf32>
    %263 = vector.multi_reduction <add>, %262, %cst_120 [1] : vector<24x64xf32> to vector<24xf32>
    %264 = vector.shape_cast %263 : vector<24xf32> to vector<24x1xf32>
    %cst_121 = arith.constant 6.400000e+01 : f32
    %265 = vector.broadcast %cst_121 : f32 to vector<24x1xf32>
    %266 = arith.divf %264, %265 : vector<24x1xf32>
    %267 = vector.broadcast %266 : vector<24x1xf32> to vector<24x64xf32>
    %268 = arith.subf %262, %267 : vector<24x64xf32>
    %269 = arith.mulf %268, %268 : vector<24x64xf32>
    %cst_122 = arith.constant dense<0.000000e+00> : vector<24xf32>
    %270 = vector.multi_reduction <add>, %269, %cst_122 [1] : vector<24x64xf32> to vector<24xf32>
    %271 = vector.shape_cast %270 : vector<24xf32> to vector<24x1xf32>
    %cst_123 = arith.constant 6.400000e+01 : f32
    %272 = vector.broadcast %cst_123 : f32 to vector<24x1xf32>
    %273 = arith.divf %271, %272 : vector<24x1xf32>
    %cst_124 = arith.constant 9.99999974E-6 : f32
    %274 = vector.broadcast %cst_124 : f32 to vector<24x1xf32>
    %275 = arith.addf %273, %274 : vector<24x1xf32>
    %276 = math.rsqrt %275 : vector<24x1xf32>
    %277 = vector.broadcast %276 : vector<24x1xf32> to vector<24x64xf32>
    %278 = arith.mulf %268, %277 : vector<24x64xf32>
    %279 = vector.broadcast %193 : vector<1x64xf32> to vector<24x64xf32>
    %280 = arith.mulf %278, %279 : vector<24x64xf32>
    %281 = vector.broadcast %194 : vector<1x64xf32> to vector<24x64xf32>
    %282 = arith.addf %280, %281 : vector<24x64xf32>
    %c640 = arith.constant 640 : index
    %c0_125 = arith.constant 0 : index
    %283 = vector.load %arg6[%c640, %c0_125] : memref<768x64xf32, #tpu.memory_space<vmem>>, vector<64x64xf32>
    %cst_126 = arith.constant dense<0.000000e+00> : vector<24x64xf32>
    %284 = tpu.matmul %282, %283, %cst_126 {dimension_numbers = #tpu.dot_dimension_numbers<[1], [0], [0], [1], [0, 0, 1, 1], [], []>} : vector<24x64xf32>, vector<64x64xf32>, vector<24x64xf32> -> vector<24x64xf32>
    %285 = vector.broadcast %195 : vector<1x64xf32> to vector<24x64xf32>
    %286 = arith.addf %284, %285 : vector<24x64xf32>
    %cst_127 = arith.constant 5.000000e-01 : f32
    %287 = vector.broadcast %cst_127 : f32 to vector<24x64xf32>
    %288 = arith.mulf %287, %286 : vector<24x64xf32>
    %cst_128 = arith.constant 0.707106769 : f32
    %289 = vector.broadcast %cst_128 : f32 to vector<24x64xf32>
    %290 = arith.mulf %286, %289 : vector<24x64xf32>
    %cst_129 = arith.constant 0.000000e+00 : f32
    %291 = vector.broadcast %cst_129 : f32 to vector<24x64xf32>
    %292 = arith.cmpf olt, %290, %291 : vector<24x64xf32>
    %cst_130 = arith.constant -1.000000e+00 : f32
    %cst_131 = arith.constant 1.000000e+00 : f32
    %293 = vector.broadcast %cst_130 : f32 to vector<24x64xf32>
    %294 = vector.broadcast %cst_131 : f32 to vector<24x64xf32>
    %295 = arith.select %292, %293, %294 : vector<24x64xi1>, vector<24x64xf32>
    %296 = math.absf %290 : vector<24x64xf32>
    %cst_132 = arith.constant 0.327591091 : f32
    %297 = vector.broadcast %cst_132 : f32 to vector<24x64xf32>
    %298 = arith.mulf %297, %296 : vector<24x64xf32>
    %cst_133 = arith.constant 1.000000e+00 : f32
    %299 = vector.broadcast %cst_133 : f32 to vector<24x64xf32>
    %300 = arith.addf %299, %298 : vector<24x64xf32>
    %cst_134 = arith.constant 1.000000e+00 : f32
    %301 = vector.broadcast %cst_134 : f32 to vector<24x64xf32>
    %302 = arith.divf %301, %300 : vector<24x64xf32>
    %cst_135 = arith.constant 1.06140542 : f32
    %303 = vector.broadcast %cst_135 : f32 to vector<24x64xf32>
    %304 = arith.mulf %303, %302 : vector<24x64xf32>
    %cst_136 = arith.constant -1.45315206 : f32
    %305 = vector.broadcast %cst_136 : f32 to vector<24x64xf32>
    %306 = arith.addf %304, %305 : vector<24x64xf32>
    %307 = arith.mulf %306, %302 : vector<24x64xf32>
    %cst_137 = arith.constant 1.42141378 : f32
    %308 = vector.broadcast %cst_137 : f32 to vector<24x64xf32>
    %309 = arith.addf %307, %308 : vector<24x64xf32>
    %310 = arith.mulf %309, %302 : vector<24x64xf32>
    %cst_138 = arith.constant -0.284496725 : f32
    %311 = vector.broadcast %cst_138 : f32 to vector<24x64xf32>
    %312 = arith.addf %310, %311 : vector<24x64xf32>
    %313 = arith.mulf %312, %302 : vector<24x64xf32>
    %cst_139 = arith.constant 0.254829586 : f32
    %314 = vector.broadcast %cst_139 : f32 to vector<24x64xf32>
    %315 = arith.addf %313, %314 : vector<24x64xf32>
    %316 = arith.mulf %315, %302 : vector<24x64xf32>
    %cst_140 = arith.constant 0.000000e+00 : f32
    %317 = vector.broadcast %cst_140 : f32 to vector<24x64xf32>
    %318 = arith.subf %317, %296 : vector<24x64xf32>
    %319 = arith.mulf %318, %296 : vector<24x64xf32>
    %320 = math.exp %319 : vector<24x64xf32>
    %321 = arith.mulf %316, %320 : vector<24x64xf32>
    %cst_141 = arith.constant 1.000000e+00 : f32
    %322 = vector.broadcast %cst_141 : f32 to vector<24x64xf32>
    %323 = arith.subf %322, %321 : vector<24x64xf32>
    %324 = arith.mulf %295, %323 : vector<24x64xf32>
    %cst_142 = arith.constant 1.000000e+00 : f32
    %325 = vector.broadcast %cst_142 : f32 to vector<24x64xf32>
    %326 = arith.addf %325, %324 : vector<24x64xf32>
    %327 = arith.mulf %288, %326 : vector<24x64xf32>
    %c704 = arith.constant 704 : index
    %c0_143 = arith.constant 0 : index
    %328 = vector.load %arg6[%c704, %c0_143] : memref<768x64xf32, #tpu.memory_space<vmem>>, vector<64x64xf32>
    %cst_144 = arith.constant dense<0.000000e+00> : vector<24x64xf32>
    %329 = tpu.matmul %327, %328, %cst_144 {dimension_numbers = #tpu.dot_dimension_numbers<[1], [0], [0], [1], [0, 0, 1, 1], [], []>} : vector<24x64xf32>, vector<64x64xf32>, vector<24x64xf32> -> vector<24x64xf32>
    %330 = arith.addf %262, %329 : vector<24x64xf32>
    %331 = vector.broadcast %196 : vector<1x64xf32> to vector<24x64xf32>
    %332 = arith.addf %330, %331 : vector<24x64xf32>
    %c0_145 = arith.constant 0 : index
    %c0_146 = arith.constant 0 : index
    %333 = vector.load %arg7[%c0_145, %c0_146] : memref<65x128xf32, #tpu.memory_space<vmem>>, vector<64x128xf32>
    %cst_147 = arith.constant dense<0.000000e+00> : vector<24x128xf32>
    %334 = tpu.matmul %332, %333, %cst_147 {dimension_numbers = #tpu.dot_dimension_numbers<[1], [0], [0], [1], [0, 0, 1, 1], [], []>} : vector<24x64xf32>, vector<64x128xf32>, vector<24x128xf32> -> vector<24x128xf32>
    %c64 = arith.constant 64 : index
    %c0_148 = arith.constant 0 : index
    %335 = vector.load %arg7[%c64, %c0_148] : memref<65x128xf32, #tpu.memory_space<vmem>>, vector<1x128xf32>
    %336 = vector.broadcast %335 : vector<1x128xf32> to vector<24x128xf32>
    %337 = arith.addf %334, %336 : vector<24x128xf32>
    %c0_149 = arith.constant 0 : index
    %c0_150 = arith.constant 0 : index
    %338 = vector.load %arg8[%c0_149, %c0_150] : memref<24x128xf32, #tpu.memory_space<vmem>>, vector<24x128xf32>
    tpu.vector_store %arg8[%c0_149, %c0_150], %337 {strides = array<i32>} : memref<24x128xf32, #tpu.memory_space<vmem>>, vector<24x128xf32>,
    return
  }
}

</mosaic_0001>

<llo_original>
// kernel: ptychovit_forward.1
$region0: #{ptychovit_forward.1}
  #allocation0 [shape = 'u32[]', space=smem, size = 0x4, offset = 0x4, fixed_abs, tag = 'smem constant byte address 0x4 - core index']
  #allocation1 [shape = 'u32[144,128]{1,0:T(1,128)}', space=vmem, size = 0x12000, scoped, tag = 'internal scratch']
  #allocation2 [shape = 'f32[24,64]{1,0:T(8,128)}', space=vmem, size = 0x3000, scoped, tag = 'scratch operand']
  %s0 = inlined_call_operand.vmem [shape: f32[16,16], index: 0, kind: input, shape index: {}]
  %s1 = inlined_call_operand.vmem [shape: f32[16,40], index: 1, kind: input, shape index: {}]
  %s2 = inlined_call_operand.vmem [shape: f32[2,32], index: 2, kind: input, shape index: {}]
  %s3 = inlined_call_operand.vmem [shape: f32[88,64], index: 3, kind: input, shape index: {}]
  %s4 = inlined_call_operand.vmem [shape: f32[16,64], index: 4, kind: input, shape index: {}]
  %s5 = inlined_call_operand.vmem [shape: f32[4,64,384], index: 5, kind: input, shape index: {}]
  %s6 = inlined_call_operand.vmem [shape: f32[768,64], index: 6, kind: input, shape index: {}]
  %s7 = inlined_call_operand.vmem [shape: f32[65,128], index: 7, kind: input, shape index: {}]
  %s8 = inlined_call_operand.vmem [shape: f32[24,128], index: 8, kind: output, shape index: {}]
  %s9 = sld [smem:[#allocation0]]
  $region42: #{ptychovit_forward.1} parent=0
    _
  %s11 = ssub.s32 1, %s9
  %s12 = scalar_select 0, %s11, %s9
  // Predicated region
  $region2: #{ptychovit_forward.1} parent=0 // pred_check
    _
  $region3: #{ptychovit_forward.1} parent=0 // pred_check_branch
    %14 = sbr.rel (0) target = $region5
  $region4: #{ptychovit_forward.1} parent=0 // pred_region
    _
  $region5: #{ptychovit_forward.1} parent=0 // pred_fallthru
    _
  // Predicated region
  $region6: #{ptychovit_forward.1} parent=0 // pred_check
    _
  $region7: #{ptychovit_forward.1} parent=0 // pred_check_branch
    %16 = sbr.rel (0) target = $region9
  $region8: #{ptychovit_forward.1} parent=0 // pred_region
    _
  $region9: #{ptychovit_forward.1} parent=0 // pred_fallthru
    _
  // Predicated region
  $region10: #{ptychovit_forward.1} parent=0 // pred_check
    _
  $region11: #{ptychovit_forward.1} parent=0 // pred_check_branch
    %18 = sbr.rel (0) target = $region13
  $region12: #{ptychovit_forward.1} parent=0 // pred_region
    _
  $region13: #{ptychovit_forward.1} parent=0 // pred_fallthru
    _
  // Predicated region
  $region14: #{ptychovit_forward.1} parent=0 // pred_check
    _
  $region15: #{ptychovit_forward.1} parent=0 // pred_check_branch
    %20 = sbr.rel (0) target = $region17
  $region16: #{ptychovit_forward.1} parent=0 // pred_region
    _
  $region17: #{ptychovit_forward.1} parent=0 // pred_fallthru
    _
  // Predicated region
  $region18: #{ptychovit_forward.1} parent=0 // pred_check
    _
  $region19: #{ptychovit_forward.1} parent=0 // pred_check_branch
    %22 = sbr.rel (0) target = $region21
  $region20: #{ptychovit_forward.1} parent=0 // pred_region
    _
  $region21: #{ptychovit_forward.1} parent=0 // pred_fallthru
    _
  // Predicated region
  $region22: #{ptychovit_forward.1} parent=0 // pred_check
    _
  $region23: #{ptychovit_forward.1} parent=0 // pred_check_branch
    %24 = sbr.rel (0) target = $region25
  $region24: #{ptychovit_forward.1} parent=0 // pred_region
    _
  $region25: #{ptychovit_forward.1} parent=0 // pred_fallthru
    _
  // Predicated region
  $region26: #{ptychovit_forward.1} parent=0 // pred_check
    _
  $region27: #{ptychovit_forward.1} parent=0 // pred_check_branch
    %26 = sbr.rel (0) target = $region29
  $region28: #{ptychovit_forward.1} parent=0 // pred_region
    _
  $region29: #{ptychovit_forward.1} parent=0 // pred_fallthru
    _
  // Predicated region
  $region30: #{ptychovit_forward.1} parent=0 // pred_check
    _
  $region31: #{ptychovit_forward.1} parent=0 // pred_check_branch
    %28 = sbr.rel (0) target = $region33
  $region32: #{ptychovit_forward.1} parent=0 // pred_region
    _
  $region33: #{ptychovit_forward.1} parent=0 // pred_fallthru
    _
  %v29 = vld [vmem:[%s0] sm:$0xff]
  %v30 = vld [vmem:[%s0 + $0x8] sm:$0xff]
  %v31 = vld [vmem:[%s3] sm:$0xff]
  %v32 = vld [vmem:[%s3 + $0x8] sm:$0xff]
  %v33 = vld [vmem:[%s1] sm:$0xff]
  %v34 = vld [vmem:[%s1 + $0x8] sm:$0xff]
  %v35 = vld [vmem:[%s3 + $0x10] sm:$0xff]
  %v36 = vld [vmem:[%s3 + $0x18] sm:$0xff]
  %v37 = vld [vmem:[%s3 + $0x20] sm:$0xff]
  %v38 = vld [vmem:[%s3 + $0x28] sm:$0xff]
  %v39 = vld [vmem:[%s3 + $0x30] sm:$0xff]
  %vm40 = vcmask 326656
  %v42 = vsel %vm40, %v33, 0
  %v45 = vsel %vm40, %v34, 0
  %47 = vmatprep.subr.mxu0 0.0
  %48 = vmatpush1.msra.mxu0 %v35
  %49 = vmatprep.subr.mxu0 0.0
  %50 = vmatpush1.msra.mxu0 %v36
  %51 = vmatprep.subr.mxu0 0.0
  %52 = vmatpush1.msra.mxu0 %v37
  %53 = vmatprep.subr.mxu0 0.0
  %54 = vmatpush1.msra.mxu0 %v38
  %55 = vmatprep.subr.mxu0 0.0
  %56 = vmatpush1.msra.mxu0 %v39
  %57 = vmatprep.subr.mxu0 0.0
  %58 = vmatpush1.msra.mxu0 0.0
  %59 = vmatprep.subr.mxu0 0.0
  %60 = vmatpush1.msra.mxu0 0.0
  %61 = vmatprep.subr.mxu0 0.0
  %62 = vmatpush1.msra.mxu0 0.0
  %63 = vmatprep.subr.mxu0 0.0
  %64 = vmatpush1.msra.mxu0 0.0
  %65 = vmatprep.subr.mxu0 0.0
  %66 = vmatpush1.msra.mxu0 0.0
  %67 = vmatprep.subr.mxu0 0.0
  %68 = vmatpush1.msra.mxu0 0.0
  %69 = vmatprep.subr.mxu0 0.0
  %70 = vmatpush1.msra.mxu0 0.0
  %71 = vmatprep.subr.mxu0 0.0
  %72 = vmatpush1.msra.mxu0 0.0
  %73 = vmatprep.subr.mxu0 0.0
  %74 = vmatpush1.msra.mxu0 0.0
  %75 = vmatprep.subr.mxu0 0.0
  %76 = vmatpush1.msra.mxu0 0.0
  %77 = vmatprep.subr.mxu0 0.0
  %78 = vmatpush1.msra.mxu0 0.0
  %79 = vmatprep.subr.mxu0 0.0
  %80 = vmatpush1.msra.mxu0 0.0
  %81 = vmatprep.subr.mxu0 0.0
  %82 = vmatpush1.msra.mxu0 0.0
  %83 = vmatprep.subr.mxu0 0.0
  %84 = vmatpush1.msra.mxu0 0.0
  %85 = vmatprep.subr.mxu0 0.0
  %86 = vmatpush1.msra.mxu0 0.0
  %87 = vmatprep.subr.mxu0 0.0
  %88 = vmatpush1.msra.mxu0 0.0
  %89 = vmatprep.subr.mxu0 0.0
  %90 = vmatpush1.msra.mxu0 0.0
  %91 = vmatprep.subr.mxu0 0.0
  %92 = vmatpush1.msra.mxu0 0.0
  %93 = vmatprep.subr.mxu0 0.0
  %94 = vmatpush1.msra.mxu0 0.0
  %95 = vmatprep.subr.mxu0 0.0
  %96 = vmatpush1.msra.mxu0 0.0
  %97 = vmatprep.subr.mxu0 0.0
  %98 = vmatpush1.msra.mxu0 0.0
  %99 = vmatprep.subr.mxu0 0.0
  %100 = vmatpush1.msra.mxu0 0.0
  %101 = vmatprep.subr.mxu0 0.0
  %102 = vmatpush1.msra.mxu0 0.0
  %103 = vmatprep.subr.mxu0 0.0
  %104 = vmatpush1.msra.mxu0 0.0
  %105 = vmatprep.subr.mxu0 0.0
  %106 = vmatpush1.msra.mxu0 0.0
  %107 = vmatprep.subr.mxu0 0.0
  %108 = vmatpush1.msra.mxu0 0.0
  %109 = vmatprep.subr.mxu0 0.0
  %110 = vmatpush1.msra.mxu0 0.0
  %111 = vmatprep.mubr.f32.mxu0 0.0
  %112 = vmatmul.mubr.f32.gmra.mrb[0].mxu0 %v42
  %v113 = vpop.f32.mrb[0].mxu0
  %v114 = vadd.f32 0.0, %v113
  %v115 = vpop.f32.mrb[0].mxu0
  %116 = vmatprep.mubr.f32.mxu0 0.0
  %117 = vmatmul.mubr.f32.gmra.mrb[0].mxu0 %v45
  %v118 = vpop.f32.mrb[0].mxu0
  %v119 = vadd.f32 0.0, %v118
  %v120 = vpop.f32.mrb[0].mxu0
  %121 = vdwg.mxu0
  %vm122 = vcmask 130048
  %v124 = vsel %vm122, %v29, 0
  %v127 = vsel %vm122, %v30, 0
  %129 = vmatprep.subr.mxu0 0.0
  %130 = vmatpush1.msra.mxu0 %v31
  %131 = vmatprep.subr.mxu0 0.0
  %132 = vmatpush1.msra.mxu0 %v32
  %133 = vmatprep.subr.mxu0 0.0
  %134 = vmatpush1.msra.mxu0 0.0
  %135 = vmatprep.subr.mxu0 0.0
  %136 = vmatpush1.msra.mxu0 0.0
  %137 = vmatprep.subr.mxu0 0.0
  %138 = vmatpush1.msra.mxu0 0.0
  %139 = vmatprep.subr.mxu0 0.0
  %140 = vmatpush1.msra.mxu0 0.0
  %141 = vmatprep.subr.mxu0 0.0
  %142 = vmatpush1.msra.mxu0 0.0
  %143 = vmatprep.subr.mxu0 0.0
  %144 = vmatpush1.msra.mxu0 0.0
  %145 = vmatprep.subr.mxu0 0.0
  %146 = vmatpush1.msra.mxu0 0.0
  %147 = vmatprep.subr.mxu0 0.0
  %148 = vmatpush1.msra.mxu0 0.0
  %149 = vmatprep.subr.mxu0 0.0
  %150 = vmatpush1.msra.mxu0 0.0
  %151 = vmatprep.subr.mxu0 0.0
  %152 = vmatpush1.msra.mxu0 0.0
  %153 = vmatprep.subr.mxu0 0.0
  %154 = vmatpush1.msra.mxu0 0.0
  %155 = vmatprep.subr.mxu0 0.0
  %156 = vmatpush1.msra.mxu0 0.0
  %157 = vmatprep.subr.mxu0 0.0
  %158 = vmatpush1.msra.mxu0 0.0
  %159 = vmatprep.subr.mxu0 0.0
  %160 = vmatpush1.msra.mxu0 0.0
  %161 = vmatprep.subr.mxu0 0.0
  %162 = vmatpush1.msra.mxu0 0.0
  %163 = vmatprep.subr.mxu0 0.0
  %164 = vmatpush1.msra.mxu0 0.0
  %165 = vmatprep.subr.mxu0 0.0
  %166 = vmatpush1.msra.mxu0 0.0
  %167 = vmatprep.subr.mxu0 0.0
  %168 = vmatpush1.msra.mxu0 0.0
  %169 = vmatprep.subr.mxu0 0.0
  %170 = vmatpush1.msra.mxu0 0.0
  %171 = vmatprep.subr.mxu0 0.0
  %172 = vmatpush1.msra.mxu0 0.0
  %173 = vmatprep.subr.mxu0 0.0
  %174 = vmatpush1.msra.mxu0 0.0
  %175 = vmatprep.subr.mxu0 0.0
  %176 = vmatpush1.msra.mxu0 0.0
  %177 = vmatprep.subr.mxu0 0.0
  %178 = vmatpush1.msra.mxu0 0.0
  %179 = vmatprep.subr.mxu0 0.0
  %180 = vmatpush1.msra.mxu0 0.0
  %181 = vmatprep.subr.mxu0 0.0
  %182 = vmatpush1.msra.mxu0 0.0
  %183 = vmatprep.subr.mxu0 0.0
  %184 = vmatpush1.msra.mxu0 0.0
  %185 = vmatprep.subr.mxu0 0.0
  %186 = vmatpush1.msra.mxu0 0.0
  %187 = vmatprep.subr.mxu0 0.0
  %188 = vmatpush1.msra.mxu0 0.0
  %189 = vmatprep.subr.mxu0 0.0
  %190 = vmatpush1.msra.mxu0 0.0
  %191 = vmatprep.subr.mxu0 0.0
  %192 = vmatpush1.msra.mxu0 0.0
  %193 = vmatprep.mubr.f32.mxu0 0.0
  %194 = vmatmul.mubr.f32.gmra.mrb[0].mxu0 %v124
  %v195 = vpop.f32.mrb[0].mxu0
  %v196 = vadd.f32 %v114, %v195
  %v197 = vpop.f32.mrb[0].mxu0
  %198 = vmatprep.mubr.f32.mxu0 0.0
  %199 = vmatmul.mubr.f32.gmra.mrb[0].mxu0 %v127
  %v200 = vpop.f32.mrb[0].mxu0
  %v201 = vadd.f32 %v119, %v200
  %v202 = vpop.f32.mrb[0].mxu0
  %203 = vdwg.mxu0
  %v204 = vld [vmem:[%s4] sm:$0x1]
  %v205 = vlaneseq
  %v206 = vshrl.u32 %v205, 7
  %v207 = vsub.s32 0, %v206
  %v208 = vrot.slane %v204, %v207
  %v209 = vadd.f32 %v196, %v208
  %v210 = vadd.f32 %v201, %v208
  %v211 = vld [vmem:[%s2] sm:$0x3]
  %v212 = vld [vmem:[%s3 + $0x38] sm:$0xff]
  %v213 = vld [vmem:[%s3 + $0x40] sm:$0xff]
  %v214 = vld [vmem:[%s3 + $0x48] sm:$0xff]
  %v215 = vld [vmem:[%s3 + $0x50] sm:$0xff]
  %v216 = vld [vmem:[%s4 + $0x1] sm:$0x1]
  %v217 = vlaneseq
  %v218 = vshrl.u32 %v217, 7
  %v219 = vsub.s32 0, %v218
  %v220 = vrot.slane %v216, %v219
  %vm221 = vcmask 261120
  %v223 = vsel %vm221, %v211, 0
  %225 = vmatprep.subr.mxu0 0.0
  %226 = vmatpush1.msra.mxu0 %v212
  %227 = vmatprep.subr.mxu0 0.0
  %228 = vmatpush1.msra.mxu0 %v213
  %229 = vmatprep.subr.mxu0 0.0
  %230 = vmatpush1.msra.mxu0 %v214
  %231 = vmatprep.subr.mxu0 0.0
  %232 = vmatpush1.msra.mxu0 %v215
  %233 = vmatprep.subr.mxu0 0.0
  %234 = vmatpush1.msra.mxu0 0.0
  %235 = vmatprep.subr.mxu0 0.0
  %236 = vmatpush1.msra.mxu0 0.0
  %237 = vmatprep.subr.mxu0 0.0
  %238 = vmatpush1.msra.mxu0 0.0
  %239 = vmatprep.subr.mxu0 0.0
  %240 = vmatpush1.msra.mxu0 0.0
  %241 = vmatprep.subr.mxu0 0.0
  %242 = vmatpush1.msra.mxu0 0.0
  %243 = vmatprep.subr.mxu0 0.0
  %244 = vmatpush1.msra.mxu0 0.0
  %245 = vmatprep.subr.mxu0 0.0
  %246 = vmatpush1.msra.mxu0 0.0
  %247 = vmatprep.subr.mxu0 0.0
  %248 = vmatpush1.msra.mxu0 0.0
  %249 = vmatprep.subr.mxu0 0.0
  %250 = vmatpush1.msra.mxu0 0.0
  %251 = vmatprep.subr.mxu0 0.0
  %252 = vmatpush1.msra.mxu0 0.0
  %253 = vmatprep.subr.mxu0 0.0
  %254 = vmatpush1.msra.mxu0 0.0
  %255 = vmatprep.subr.mxu0 0.0
  %256 = vmatpush1.msra.mxu0 0.0
  %257 = vmatprep.subr.mxu0 0.0
  %258 = vmatpush1.msra.mxu0 0.0
  %259 = vmatprep.subr.mxu0 0.0
  %260 = vmatpush1.msra.mxu0 0.0
  %261 = vmatprep.subr.mxu0 0.0
  %262 = vmatpush1.msra.mxu0 0.0
  %263 = vmatprep.subr.mxu0 0.0
  %264 = vmatpush1.msra.mxu0 0.0
  %265 = vmatprep.subr.mxu0 0.0
  %266 = vmatpush1.msra.mxu0 0.0
  %267 = vmatprep.subr.mxu0 0.0
  %268 = vmatpush1.msra.mxu0 0.0
  %269 = vmatprep.subr.mxu0 0.0
  %270 = vmatpush1.msra.mxu0 0.0
  %271 = vmatprep.subr.mxu0 0.0
  %272 = vmatpush1.msra.mxu0 0.0
  %273 = vmatprep.subr.mxu0 0.0
  %274 = vmatpush1.msra.mxu0 0.0
  %275 = vmatprep.subr.mxu0 0.0
  %276 = vmatpush1.msra.mxu0 0.0
  %277 = vmatprep.subr.mxu0 0.0
  %278 = vmatpush1.msra.mxu0 0.0
  %279 = vmatprep.subr.mxu0 0.0
  %280 = vmatpush1.msra.mxu0 0.0
  %281 = vmatprep.subr.mxu0 0.0
  %282 = vmatpush1.msra.mxu0 0.0
  %283 = vmatprep.subr.mxu0 0.0
  %284 = vmatpush1.msra.mxu0 0.0
  %285 = vmatprep.subr.mxu0 0.0
  %286 = vmatpush1.msra.mxu0 0.0
  %287 = vmatprep.subr.mxu0 0.0
  %288 = vmatpush1.msra.mxu0 0.0
  %289 = vmatprep.mubr.f32.mxu0 0.0
  %290 = vmatmul.mubr.f32.gmra.mrb[0].mxu0 %v223
  %v291 = vpop.f32.mrb[0].mxu0
  %v292 = vadd.f32 %v220, %v291
  %v293 = vpop.f32.mrb[0].mxu0
  %294 = vdwg.mxu0
  %vm295 = vcmask 523264
  %296 = vst.msk [vmem:[#allocation2] sm:$0xff] %vm295, 0.0
  %297 = vst.msk [vmem:[#allocation2 + $0x8] sm:$0xff] %vm295, 0.0
  %298 = vst.msk [vmem:[#allocation2 + $0x10] sm:$0xff] %vm295, 0.0
  %299 = vst.msk [vmem:[#allocation2] sm:$0xff] %vm295, %v209
  %300 = vst.msk [vmem:[#allocation2 + $0x8] sm:$0xff] %vm295, %v210
  %vm301 = vcmask 517120
  %302 = vst.msk [vmem:[#allocation2 + $0x10] sm:$0x3] %vm301, %v292
  %v303 = vld [vmem:[#allocation2] sm:$0xff]
  %v304 = vld [vmem:[#allocation2 + $0x8] sm:$0xff]
  %v305 = vld [vmem:[#allocation2 + $0x10] sm:$0xff]
  %v306 = vlaneseq
  %v307 = vshrl.u32 %v306, 7
  %v308 = vadd.s32 %v307, 8
  %v309 = vadd.s32 %v307, 16
  %v310 = vlaneseq
  %v311 = vand.u32 %v310, 127
  %vm312 = vcmp.lt.s32.totalorder %v307, 16
  %vm313 = vcmp.lt.s32.totalorder %v308, 16
  %vm314 = vcmp.lt.s32.totalorder %v309, 16
  %v315 = vshra.s32 %v307, 3
  %v316 = vshra.s32 %v308, 3
  %v317 = vshra.s32 %v309, 3
  %vm318 = vcmp.lt.s32.totalorder %v307, 18
  %vm319 = vcmp.lt.s32.totalorder %v308, 18
  %vm320 = vcmp.lt.s32.totalorder %v309, 18
  %v321 = vsub.s32 %v307, 16
  %v322 = vsub.s32 %v308, 16
  %v323 = vsel %vm318, %v321, %v307
  %v324 = vsel %vm319, %v322, %v308
  %v325 = vsel %vm320, %v307, %v309
  %v326 = vsel %vm312, %v315, %v323
  %v327 = vsel %vm313, %v316, %v324
  %v328 = vsel %vm314, %v317, %v325
  %vm329 = vcmp.lt.s32.totalorder %v311, 16
  %v330 = vshra.s32 %v311, 3
  %vm331 = vcmp.lt.s32.totalorder %v311, 18
  %v332 = vsub.s32 %v311, 16
  %v333 = vsel %vm331, %v332, %v311
  %v334 = vsel %vm329, %v330, %v333
  %vm335 = vcmp.eq.s32.totalorder %v326, %v334
  %vm336 = vcmp.eq.s32.totalorder %v327, %v334
  %vm337 = vcmp.eq.s32.totalorder %v328, %v334
  %v338 = vsel %vm335, 0.0, -1e+30
  %v339 = vsel %vm336, 0.0, -1e+30
  %v340 = vsel %vm337, 0.0, -1e+30
  %v341 = vld [vmem:[%s4 + $0x2] sm:$0x1]
  %v342 = vld [vmem:[%s4 + $0x3] sm:$0x1]
  %v343 = vld [vmem:[%s4 + $0x4] sm:$0x1]
  %v344 = vld [vmem:[%s4 + $0x5] sm:$0x1]
  %v345 = vld [vmem:[%s4 + $0x6] sm:$0x1]
  %v346 = vld [vmem:[%s4 + $0x7] sm:$0x1]
  %v347 = vld [vmem:[%s4 + $0x8] sm:$0x1]
  %v348 = vsel %vm295, %v303, 0.0
  %349 = vadd.xlane.f32.xlu0 %v348
  %v350 = vpop.xlane.xlu0 %349
  %v351 = vsel %vm295, %v304, 0.0
  %352 = vadd.xlane.f32.xlu0 %v351
  %v353 = vpop.xlane.xlu0 %352
  %v354 = vsel %vm295, %v305, 0.0
  %355 = vadd.xlane.f32.xlu0 %v354
  %v356 = vpop.xlane.xlu0 %355
  %v357 = vrcp.pop 64.0
  %v358 = vmul.f32 %v350, %v357
  %v359 = vmul.f32 %v353, %v357
  %v360 = vmul.f32 %v356, %v357
  %v361 = vsub.f32 %v303, %v358
  %v362 = vsub.f32 %v304, %v359
  %v363 = vsub.f32 %v305, %v360
  %v364 = vmul.f32 %v361, %v361
  %v365 = vmul.f32 %v362, %v362
  %v366 = vmul.f32 %v363, %v363
  %v367 = vsel %vm295, %v364, 0.0
  %368 = vadd.xlane.f32.xlu0 %v367
  %v369 = vpop.xlane.xlu0 %368
  %v370 = vsel %vm295, %v365, 0.0
  %371 = vadd.xlane.f32.xlu0 %v370
  %v372 = vpop.xlane.xlu0 %371
  %v373 = vsel %vm295, %v366, 0.0
  %374 = vadd.xlane.f32.xlu0 %v373
  %v375 = vpop.xlane.xlu0 %374
  %v376 = vmul.f32 %v369, %v357
  %v377 = vmul.f32 %v372, %v357
  %v378 = vmul.f32 %v375, %v357
  %v379 = vadd.f32 %v376, 1e-05
  %v380 = vadd.f32 %v377, 1e-05
  %v381 = vadd.f32 %v378, 1e-05
  %v382 = vrsqrt.pop %v379
  %v383 = vrsqrt.pop %v380
  %v384 = vrsqrt.pop %v381
  %v385 = vmul.f32 %v361, %v382
  %v386 = vmul.f32 %v362, %v383
  %v387 = vmul.f32 %v363, %v384
  %v388 = vlaneseq
  %v389 = vshrl.u32 %v388, 7
  %v390 = vsub.s32 0, %v389
  %v391 = vrot.slane %v341, %v390
  %v392 = vmul.f32 %v385, %v391
  %v393 = vmul.f32 %v386, %v391
  %v394 = vmul.f32 %v387, %v391
  %v395 = vlaneseq
  %v396 = vshrl.u32 %v395, 7
  %v397 = vsub.s32 0, %v396
  %v398 = vrot.slane %v342, %v397
  %v399 = vadd.f32 %v392, %v398
  %v400 = vadd.f32 %v393, %v398
  %v401 = vadd.f32 %v394, %v398
  %v402 = vld [vmem:[%s5] sm:$0xff]
  %v403 = vld [vmem:[%s5 + $0x8] sm:$0xff]
  %v404 = vld [vmem:[%s5 + $0x10] sm:$0xff]
  %v405 = vld [vmem:[%s5 + $0x18] sm:$0xff]
  %v406 = vld [vmem:[%s5 + $0x20] sm:$0xff]
  %v407 = vld [vmem:[%s5 + $0x28] sm:$0xff]
  %v408 = vld [vmem:[%s5 + $0x30] sm:$0xff]
  %v409 = vld [vmem:[%s5 + $0x38] sm:$0xff]
  %v410 = vld [vmem:[%s5 + $0x40] sm:$0xff]
  %v411 = vld [vmem:[%s5 + $0x48] sm:$0xff]
  %v412 = vld [vmem:[%s5 + $0x50] sm:$0xff]
  %v413 = vld [vmem:[%s5 + $0x58] sm:$0xff]
  %v414 = vld [vmem:[%s5 + $0x60] sm:$0xff]
  %v415 = vld [vmem:[%s5 + $0x68] sm:$0xff]
  %v416 = vld [vmem:[%s5 + $0x70] sm:$0xff]
  %v417 = vld [vmem:[%s5 + $0x78] sm:$0xff]
  %v418 = vld [vmem:[%s5 + $0x80] sm:$0xff]
  %v419 = vld [vmem:[%s5 + $0x88] sm:$0xff]
  %v420 = vld [vmem:[%s5 + $0x90] sm:$0xff]
  %v421 = vld [vmem:[%s5 + $0x98] sm:$0xff]
  %v422 = vld [vmem:[%s5 + $0xa0] sm:$0xff]
  %v423 = vld [vmem:[%s5 + $0xa8] sm:$0xff]
  %v424 = vld [vmem:[%s5 + $0xb0] sm:$0xff]
  %v425 = vld [vmem:[%s5 + $0xb8] sm:$0xff]
  %v427 = vsel %vm295, %v399, 0
  %v430 = vsel %vm295, %v400, 0
  %v433 = vsel %vm295, %v401, 0
  %435 = vmatprep.subr.mxu0 %v403
  %436 = vmatpush1.msra.mxu0 %v402
  %437 = vmatprep.subr.mxu0 %v406
  %438 = vmatpush1.msra.mxu0 %v405
  %439 = vmatprep.subr.mxu0 %v409
  %440 = vmatpush1.msra.mxu0 %v408
  %441 = vmatprep.subr.mxu0 %v412
  %442 = vmatpush1.msra.mxu0 %v411
  %443 = vmatprep.subr.mxu0 %v415
  %444 = vmatpush1.msra.mxu0 %v414
  %445 = vmatprep.subr.mxu0 %v418
  %446 = vmatpush1.msra.mxu0 %v417
  %447 = vmatprep.subr.mxu0 %v421
  %448 = vmatpush1.msra.mxu0 %v420
  %449 = vmatprep.subr.mxu0 %v424
  %450 = vmatpush1.msra.mxu0 %v423
  %451 = vmatprep.subr.mxu0 0.0
  %452 = vmatpush1.msra.mxu0 0.0
  %453 = vmatprep.subr.mxu0 0.0
  %454 = vmatpush1.msra.mxu0 0.0
  %455 = vmatprep.subr.mxu0 0.0
  %456 = vmatpush1.msra.mxu0 0.0
  %457 = vmatprep.subr.mxu0 0.0
  %458 = vmatpush1.msra.mxu0 0.0
  %459 = vmatprep.subr.mxu0 0.0
  %460 = vmatpush1.msra.mxu0 0.0
  %461 = vmatprep.subr.mxu0 0.0
  %462 = vmatpush1.msra.mxu0 0.0
  %463 = vmatprep.subr.mxu0 0.0
  %464 = vmatpush1.msra.mxu0 0.0
  %465 = vmatprep.subr.mxu0 0.0
  %466 = vmatpush1.msra.mxu0 0.0
  %467 = vmatprep.subr.mxu0 0.0
  %468 = vmatpush1.msra.mxu0 0.0
  %469 = vmatprep.subr.mxu0 0.0
  %470 = vmatpush1.msra.mxu0 0.0
  %471 = vmatprep.subr.mxu0 0.0
  %472 = vmatpush1.msra.mxu0 0.0
  %473 = vmatprep.subr.mxu0 0.0
  %474 = vmatpush1.msra.mxu0 0.0
  %475 = vmatprep.subr.mxu0 0.0
  %476 = vmatpush1.msra.mxu0 0.0
  %477 = vmatprep.subr.mxu0 0.0
  %478 = vmatpush1.msra.mxu0 0.0
  %479 = vmatprep.subr.mxu0 0.0
  %480 = vmatpush1.msra.mxu0 0.0
  %481 = vmatprep.subr.mxu0 0.0
  %482 = vmatpush1.msra.mxu0 0.0
  %483 = vmatprep.subr.mxu0 0.0
  %484 = vmatpush1.msra.mxu0 0.0
  %485 = vmatprep.subr.mxu0 0.0
  %486 = vmatpush1.msra.mxu0 0.0
  %487 = vmatprep.subr.mxu0 0.0
  %488 = vmatpush1.msra.mxu0 0.0
  %489 = vmatprep.subr.mxu0 0.0
  %490 = vmatpush1.msra.mxu0 0.0
  %491 = vmatprep.subr.mxu0 0.0
  %492 = vmatpush1.msra.mxu0 0.0
  %493 = vmatprep.subr.mxu0 0.0
  %494 = vmatpush1.msra.mxu0 0.0
  %495 = vmatprep.subr.mxu0 0.0
  %496 = vmatpush1.msra.mxu0 0.0
  %497 = vmatprep.subr.mxu0 0.0
  %498 = vmatpush1.msra.mxu0 0.0
  %499 = vmatprep.mubr.f32.mxu0 0.0
  %500 = vmatmul.mubr.f32.gmra.mrb[0].mxu0 %v427
  %v501 = vpop.f32.mrb[0].mxu0
  %v502 = vadd.f32 0.0, %v501
  %v503 = vpop.f32.mrb[0].mxu0
  %v504 = vadd.f32 0.0, %v503
  %505 = vmatprep.mubr.f32.mxu0 0.0
  %506 = vmatmul.mubr.f32.gmra.mrb[0].mxu0 %v430
  %v507 = vpop.f32.mrb[0].mxu0
  %v508 = vadd.f32 0.0, %v507
  %v509 = vpop.f32.mrb[0].mxu0
  %v510 = vadd.f32 0.0, %v509
  %511 = vmatprep.mubr.f32.mxu0 0.0
  %512 = vmatmul.mubr.f32.gmra.mrb[0].mxu0 %v433
  %v513 = vpop.f32.mrb[0].mxu0
  %v514 = vadd.f32 0.0, %v513
  %v515 = vpop.f32.mrb[0].mxu0
  %v516 = vadd.f32 0.0, %v515
  %517 = vdwg.mxu0
  %518 = vmatprep.subr.mxu0 0.0
  %519 = vmatpush1.msra.mxu0 %v404
  %520 = vmatprep.subr.mxu0 0.0
  %521 = vmatpush1.msra.mxu0 %v407
  %522 = vmatprep.subr.mxu0 0.0
  %523 = vmatpush1.msra.mxu0 %v410
  %524 = vmatprep.subr.mxu0 0.0
  %525 = vmatpush1.msra.mxu0 %v413
  %526 = vmatprep.subr.mxu0 0.0
  %527 = vmatpush1.msra.mxu0 %v416
  %528 = vmatprep.subr.mxu0 0.0
  %529 = vmatpush1.msra.mxu0 %v419
  %530 = vmatprep.subr.mxu0 0.0
  %531 = vmatpush1.msra.mxu0 %v422
  %532 = vmatprep.subr.mxu0 0.0
  %533 = vmatpush1.msra.mxu0 %v425
  %534 = vmatprep.subr.mxu0 0.0
  %535 = vmatpush1.msra.mxu0 0.0
  %536 = vmatprep.subr.mxu0 0.0
  %537 = vmatpush1.msra.mxu0 0.0
  %538 = vmatprep.subr.mxu0 0.0
  %539 = vmatpush1.msra.mxu0 0.0
  %540 = vmatprep.subr.mxu0 0.0
  %541 = vmatpush1.msra.mxu0 0.0
  %542 = vmatprep.subr.mxu0 0.0
  %543 = vmatpush1.msra.mxu0 0.0
  %544 = vmatprep.subr.mxu0 0.0
  %545 = vmatpush1.msra.mxu0 0.0
  %546 = vmatprep.subr.mxu0 0.0
  %547 = vmatpush1.msra.mxu0 0.0
  %548 = vmatprep.subr.mxu0 0.0
  %549 = vmatpush1.msra.mxu0 0.0
  %550 = vmatprep.subr.mxu0 0.0
  %551 = vmatpush1.msra.mxu0 0.0
  %552 = vmatprep.subr.mxu0 0.0
  %553 = vmatpush1.msra.mxu0 0.0
  %554 = vmatprep.subr.mxu0 0.0
  %555 = vmatpush1.msra.mxu0 0.0
  %556 = vmatprep.subr.mxu0 0.0
  %557 = vmatpush1.msra.mxu0 0.0
  %558 = vmatprep.subr.mxu0 0.0
  %559 = vmatpush1.msra.mxu0 0.0
  %560 = vmatprep.subr.mxu0 0.0
  %561 = vmatpush1.msra.mxu0 0.0
  %562 = vmatprep.subr.mxu0 0.0
  %563 = vmatpush1.msra.mxu0 0.0
  %564 = vmatprep.subr.mxu0 0.0
  %565 = vmatpush1.msra.mxu0 0.0
  %566 = vmatprep.subr.mxu0 0.0
  %567 = vmatpush1.msra.mxu0 0.0
  %568 = vmatprep.subr.mxu0 0.0
  %569 = vmatpush1.msra.mxu0 0.0
  %570 = vmatprep.subr.mxu0 0.0
  %571 = vmatpush1.msra.mxu0 0.0
  %572 = vmatprep.subr.mxu0 0.0
  %573 = vmatpush1.msra.mxu0 0.0
  %574 = vmatprep.subr.mxu0 0.0
  %575 = vmatpush1.msra.mxu0 0.0
  %576 = vmatprep.subr.mxu0 0.0
  %577 = vmatpush1.msra.mxu0 0.0
  %578 = vmatprep.subr.mxu0 0.0
  %579 = vmatpush1.msra.mxu0 0.0
  %580 = vmatprep.subr.mxu0 0.0
  %581 = vmatpush1.msra.mxu0 0.0
  %582 = vmatprep.mubr.f32.mxu0 0.0
  %583 = vmatmul.mubr.f32.gmra.mrb[0].mxu0 %v427
  %v584 = vpop.f32.mrb[0].mxu0
  %v585 = vadd.f32 0.0, %v584
  %v586 = vpop.f32.mrb[0].mxu0
  %587 = vmatprep.mubr.f32.mxu0 0.0
  %588 = vmatmul.mubr.f32.gmra.mrb[0].mxu0 %v430
  %v589 = vpop.f32.mrb[0].mxu0
  %v590 = vadd.f32 0.0, %v589
  %v591 = vpop.f32.mrb[0].mxu0
  %592 = vmatprep.mubr.f32.mxu0 0.0
  %593 = vmatmul.mubr.f32.gmra.mrb[0].mxu0 %v433
  %v594 = vpop.f32.mrb[0].mxu0
  %v595 = vadd.f32 0.0, %v594
  %v596 = vpop.f32.mrb[0].mxu0
  %597 = vdwg.mxu0
  %598 = vmatprep.subr.mxu0 0.0
  %599 = vmatpush1.xpose.msra.mxu0 %v504
  %600 = vmatprep.subr.mxu0 0.0
  %601 = vmatpush1.xpose.msra.mxu0 %v510
  %602 = vmatprep.subr.mxu0 0.0
  %603 = vmatpush1.xpose.msra.mxu0 %v516
  %604 = vmatprep.subr.mxu0 0.0
  %605 = vmatpush1.xpose.msra.mxu0 0.0
  %606 = vmatprep.subr.mxu0 0.0
  %607 = vmatpush1.xpose.msra.mxu0 0.0
  %608 = vmatprep.subr.mxu0 0.0
  %609 = vmatpush1.xpose.msra.mxu0 0.0
  %610 = vmatprep.subr.mxu0 0.0
  %611 = vmatpush1.xpose.msra.mxu0 0.0
  %612 = vmatprep.subr.mxu0 0.0
  %613 = vmatpush1.xpose.msra.mxu0 0.0
  %614 = vmatprep.subr.mxu0 0.0
  %615 = vmatpush1.xpose.msra.mxu0 0.0
  %616 = vmatprep.subr.mxu0 0.0
  %617 = vmatpush1.xpose.msra.mxu0 0.0
  %618 = vmatprep.subr.mxu0 0.0
  %619 = vmatpush1.xpose.msra.mxu0 0.0
  %620 = vmatprep.subr.mxu0 0.0
  %621 = vmatpush1.xpose.msra.mxu0 0.0
  %622 = vmatprep.subr.mxu0 0.0
  %623 = vmatpush1.xpose.msra.mxu0 0.0
  %624 = vmatprep.subr.mxu0 0.0
  %625 = vmatpush1.xpose.msra.mxu0 0.0
  %626 = vmatprep.subr.mxu0 0.0
  %627 = vmatpush1.xpose.msra.mxu0 0.0
  %628 = vmatprep.subr.mxu0 0.0
  %629 = vmatpush1.xpose.msra.mxu0 0.0
  %630 = vmatprep.subr.mxu0 0.0
  %631 = vmatpush1.xpose.msra.mxu0 0.0
  %632 = vmatprep.subr.mxu0 0.0
  %633 = vmatpush1.xpose.msra.mxu0 0.0
  %634 = vmatprep.subr.mxu0 0.0
  %635 = vmatpush1.xpose.msra.mxu0 0.0
  %636 = vmatprep.subr.mxu0 0.0
  %637 = vmatpush1.xpose.msra.mxu0 0.0
  %638 = vmatprep.subr.mxu0 0.0
  %639 = vmatpush1.xpose.msra.mxu0 0.0
  %640 = vmatprep.subr.mxu0 0.0
  %641 = vmatpush1.xpose.msra.mxu0 0.0
  %642 = vmatprep.subr.mxu0 0.0
  %643 = vmatpush1.xpose.msra.mxu0 0.0
  %644 = vmatprep.subr.mxu0 0.0
  %645 = vmatpush1.xpose.msra.mxu0 0.0
  %646 = vmatprep.subr.mxu0 0.0
  %647 = vmatpush1.xpose.msra.mxu0 0.0
  %648 = vmatprep.subr.mxu0 0.0
  %649 = vmatpush1.xpose.msra.mxu0 0.0
  %650 = vmatprep.subr.mxu0 0.0
  %651 = vmatpush1.xpose.msra.mxu0 0.0
  %652 = vmatprep.subr.mxu0 0.0
  %653 = vmatpush1.xpose.msra.mxu0 0.0
  %654 = vmatprep.subr.mxu0 0.0
  %655 = vmatpush1.xpose.msra.mxu0 0.0
  %656 = vmatprep.subr.mxu0 0.0
  %657 = vmatpush1.xpose.msra.mxu0 0.0
  %658 = vmatprep.subr.mxu0 0.0
  %659 = vmatpush1.xpose.msra.mxu0 0.0
  %660 = vmatprep.subr.mxu0 0.0
  %661 = vmatpush1.xpose.msra.mxu0 0.0
  %662 = vmatprep.mubr.f32.mxu0 0.0
  %663 = vmatmul.mubr.f32.gmra.mrb[0].mxu0 %v502
  %v664 = vpop.f32.mrb[0].mxu0
  %v665 = vadd.f32 %v338, %v664
  %v666 = vpop.f32.mrb[0].mxu0
  %667 = vmatprep.mubr.f32.mxu0 0.0
  %668 = vmatmul.mubr.f32.gmra.mrb[0].mxu0 %v508
  %v669 = vpop.f32.mrb[0].mxu0
  %v670 = vadd.f32 %v339, %v669
  %v671 = vpop.f32.mrb[0].mxu0
  %672 = vmatprep.mubr.f32.mxu0 0.0
  %673 = vmatmul.mubr.f32.gmra.mrb[0].mxu0 %v514
  %v674 = vpop.f32.mrb[0].mxu0
  %v675 = vadd.f32 %v340, %v674
  %v676 = vpop.f32.mrb[0].mxu0
  %677 = vdwg.mxu0
  %vm678 = vcmask 195584
  %v679 = vsel %vm678, %v665, -inf
  %680 = vmax.xlane.f32.xlu0 %v679
  %v681 = vpop.xlane.xlu0 %680
  %v682 = vsel %vm678, %v670, -inf
  %683 = vmax.xlane.f32.xlu0 %v682
  %v684 = vpop.xlane.xlu0 %683
  %v685 = vsel %vm678, %v675, -inf
  %686 = vmax.xlane.f32.xlu0 %v685
  %v687 = vpop.xlane.xlu0 %686
  %v688 = vsub.f32 %v665, %v681
  %v689 = vsub.f32 %v670, %v684
  %v690 = vsub.f32 %v675, %v687
  %v691 = vmul.f32 %v688, 1.442695
  %v692 = vpow.pop %v691
  %v693 = vmul.f32 %v689, 1.442695
  %v694 = vpow.pop %v693
  %v695 = vmul.f32 %v690, 1.442695
  %v696 = vpow.pop %v695
  %v697 = vsel %vm678, %v692, 0.0
  %698 = vadd.xlane.f32.xlu0 %v697
  %v699 = vpop.xlane.xlu0 %698
  %v700 = vsel %vm678, %v694, 0.0
  %701 = vadd.xlane.f32.xlu0 %v700
  %v702 = vpop.xlane.xlu0 %701
  %v703 = vsel %vm678, %v696, 0.0
  %704 = vadd.xlane.f32.xlu0 %v703
  %v705 = vpop.xlane.xlu0 %704
  %v706 = vrcp.pop %v699
  %v707 = vrcp.pop %v702
  %v708 = vrcp.pop %v705
  %v709 = vmul.f32 %v692, %v706
  %v710 = vmul.f32 %v694, %v707
  %v711 = vmul.f32 %v696, %v708
  %v713 = vsel %vm678, %v709, 0
  %v716 = vsel %vm678, %v710, 0
  %v719 = vsel %vm678, %v711, 0
  %721 = vmatprep.subr.mxu0 0.0
  %722 = vmatpush1.msra.mxu0 %v585
  %723 = vmatprep.subr.mxu0 0.0
  %724 = vmatpush1.msra.mxu0 %v590
  %725 = vmatprep.subr.mxu0 0.0
  %726 = vmatpush1.msra.mxu0 %v595
  %727 = vmatprep.subr.mxu0 0.0
  %728 = vmatpush1.msra.mxu0 0.0
  %729 = vmatprep.subr.mxu0 0.0
  %730 = vmatpush1.msra.mxu0 0.0
  %731 = vmatprep.subr.mxu0 0.0
  %732 = vmatpush1.msra.mxu0 0.0
  %733 = vmatprep.subr.mxu0 0.0
  %734 = vmatpush1.msra.mxu0 0.0
  %735 = vmatprep.subr.mxu0 0.0
  %736 = vmatpush1.msra.mxu0 0.0
  %737 = vmatprep.subr.mxu0 0.0
  %738 = vmatpush1.msra.mxu0 0.0
  %739 = vmatprep.subr.mxu0 0.0
  %740 = vmatpush1.msra.mxu0 0.0
  %741 = vmatprep.subr.mxu0 0.0
  %742 = vmatpush1.msra.mxu0 0.0
  %743 = vmatprep.subr.mxu0 0.0
  %744 = vmatpush1.msra.mxu0 0.0
  %745 = vmatprep.subr.mxu0 0.0
  %746 = vmatpush1.msra.mxu0 0.0
  %747 = vmatprep.subr.mxu0 0.0
  %748 = vmatpush1.msra.mxu0 0.0
  %749 = vmatprep.subr.mxu0 0.0
  %750 = vmatpush1.msra.mxu0 0.0
  %751 = vmatprep.subr.mxu0 0.0
  %752 = vmatpush1.msra.mxu0 0.0
  %753 = vmatprep.subr.mxu0 0.0
  %754 = vmatpush1.msra.mxu0 0.0
  %755 = vmatprep.subr.mxu0 0.0
  %756 = vmatpush1.msra.mxu0 0.0
  %757 = vmatprep.subr.mxu0 0.0
  %758 = vmatpush1.msra.mxu0 0.0
  %759 = vmatprep.subr.mxu0 0.0
  %760 = vmatpush1.msra.mxu0 0.0
  %761 = vmatprep.subr.mxu0 0.0
  %762 = vmatpush1.msra.mxu0 0.0
  %763 = vmatprep.subr.mxu0 0.0
  %764 = vmatpush1.msra.mxu0 0.0
  %765 = vmatprep.subr.mxu0 0.0
  %766 = vmatpush1.msra.mxu0 0.0
  %767 = vmatprep.subr.mxu0 0.0
  %768 = vmatpush1.msra.mxu0 0.0
  %769 = vmatprep.subr.mxu0 0.0
  %770 = vmatpush1.msra.mxu0 0.0
  %771 = vmatprep.subr.mxu0 0.0
  %772 = vmatpush1.msra.mxu0 0.0
  %773 = vmatprep.subr.mxu0 0.0
  %774 = vmatpush1.msra.mxu0 0.0
  %775 = vmatprep.subr.mxu0 0.0
  %776 = vmatpush1.msra.mxu0 0.0
  %777 = vmatprep.subr.mxu0 0.0
  %778 = vmatpush1.msra.mxu0 0.0
  %779 = vmatprep.subr.mxu0 0.0
  %780 = vmatpush1.msra.mxu0 0.0
  %781 = vmatprep.subr.mxu0 0.0
  %782 = vmatpush1.msra.mxu0 0.0
  %783 = vmatprep.subr.mxu0 0.0
  %784 = vmatpush1.msra.mxu0 0.0
  %785 = vmatprep.mubr.f32.mxu0 0.0
  %786 = vmatmul.mubr.f32.gmra.mrb[0].mxu0 %v713
  %v787 = vpop.f32.mrb[0].mxu0
  %v788 = vadd.f32 0.0, %v787
  %v789 = vpop.f32.mrb[0].mxu0
  %790 = vmatprep.mubr.f32.mxu0 0.0
  %791 = vmatmul.mubr.f32.gmra.mrb[0].mxu0 %v716
  %v792 = vpop.f32.mrb[0].mxu0
  %v793 = vadd.f32 0.0, %v792
  %v794 = vpop.f32.mrb[0].mxu0
  %795 = vmatprep.mubr.f32.mxu0 0.0
  %796 = vmatmul.mubr.f32.gmra.mrb[0].mxu0 %v719
  %v797 = vpop.f32.mrb[0].mxu0
  %v798 = vadd.f32 0.0, %v797
  %v799 = vpop.f32.mrb[0].mxu0
  %800 = vdwg.mxu0
  %v801 = vld [vmem:[%s6] sm:$0xff]
  %v802 = vld [vmem:[%s6 + $0x8] sm:$0xff]
  %v803 = vld [vmem:[%s6 + $0x10] sm:$0xff]
  %v804 = vld [vmem:[%s6 + $0x18] sm:$0xff]
  %v805 = vld [vmem:[%s6 + $0x20] sm:$0xff]
  %v806 = vld [vmem:[%s6 + $0x28] sm:$0xff]
  %v807 = vld [vmem:[%s6 + $0x30] sm:$0xff]
  %v808 = vld [vmem:[%s6 + $0x38] sm:$0xff]
  %v809 = vld [vmem:[%s6 + $0x40] sm:$0xff]
  %v810 = vld [vmem:[%s6 + $0x48] sm:$0xff]
  %v811 = vld [vmem:[%s6 + $0x50] sm:$0xff]
  %v812 = vld [vmem:[%s6 + $0x58] sm:$0xff]
  %v813 = vld [vmem:[%s6 + $0x60] sm:$0xff]
  %v814 = vld [vmem:[%s6 + $0x68] sm:$0xff]
  %v815 = vld [vmem:[%s6 + $0x70] sm:$0xff]
  %v816 = vld [vmem:[%s6 + $0x78] sm:$0xff]
  %s817 = scalar_lea.vmem %s5, 192
  %v818 = vld [vmem:[%s817] sm:$0xff]
  %v819 = vld [vmem:[%s817 + $0x8] sm:$0xff]
  %v820 = vld [vmem:[%s817 + $0x10] sm:$0xff]
  %v821 = vld [vmem:[%s817 + $0x18] sm:$0xff]
  %v822 = vld [vmem:[%s817 + $0x20] sm:$0xff]
  %v823 = vld [vmem:[%s817 + $0x28] sm:$0xff]
  %v824 = vld [vmem:[%s817 + $0x30] sm:$0xff]
  %v825 = vld [vmem:[%s817 + $0x38] sm:$0xff]
  %v826 = vld [vmem:[%s817 + $0x40] sm:$0xff]
  %v827 = vld [vmem:[%s817 + $0x48] sm:$0xff]
  %v828 = vld [vmem:[%s817 + $0x50] sm:$0xff]
  %v829 = vld [vmem:[%s817 + $0x58] sm:$0xff]
  %v830 = vld [vmem:[%s817 + $0x60] sm:$0xff]
  %v831 = vld [vmem:[%s817 + $0x68] sm:$0xff]
  %v832 = vld [vmem:[%s817 + $0x70] sm:$0xff]
  %v833 = vld [vmem:[%s817 + $0x78] sm:$0xff]
  %v834 = vld [vmem:[%s817 + $0x80] sm:$0xff]
  %v835 = vld [vmem:[%s817 + $0x88] sm:$0xff]
  %v836 = vld [vmem:[%s817 + $0x90] sm:$0xff]
  %v837 = vld [vmem:[%s817 + $0x98] sm:$0xff]
  %v838 = vld [vmem:[%s817 + $0xa0] sm:$0xff]
  %v839 = vld [vmem:[%s817 + $0xa8] sm:$0xff]
  %v840 = vld [vmem:[%s817 + $0xb0] sm:$0xff]
  %v841 = vld [vmem:[%s817 + $0xb8] sm:$0xff]
  %842 = vmatprep.subr.mxu0 %v819
  %843 = vmatpush1.msra.mxu0 %v818
  %844 = vmatprep.subr.mxu0 %v822
  %845 = vmatpush1.msra.mxu0 %v821
  %846 = vmatprep.subr.mxu0 %v825
  %847 = vmatpush1.msra.mxu0 %v824
  %848 = vmatprep.subr.mxu0 %v828
  %849 = vmatpush1.msra.mxu0 %v827
  %850 = vmatprep.subr.mxu0 %v831
  %851 = vmatpush1.msra.mxu0 %v830
  %852 = vmatprep.subr.mxu0 %v834
  %853 = vmatpush1.msra.mxu0 %v833
  %854 = vmatprep.subr.mxu0 %v837
  %855 = vmatpush1.msra.mxu0 %v836
  %856 = vmatprep.subr.mxu0 %v840
  %857 = vmatpush1.msra.mxu0 %v839
  %858 = vmatprep.subr.mxu0 0.0
  %859 = vmatpush1.msra.mxu0 0.0
  %860 = vmatprep.subr.mxu0 0.0
  %861 = vmatpush1.msra.mxu0 0.0
  %862 = vmatprep.subr.mxu0 0.0
  %863 = vmatpush1.msra.mxu0 0.0
  %864 = vmatprep.subr.mxu0 0.0
  %865 = vmatpush1.msra.mxu0 0.0
  %866 = vmatprep.subr.mxu0 0.0
  %867 = vmatpush1.msra.mxu0 0.0
  %868 = vmatprep.subr.mxu0 0.0
  %869 = vmatpush1.msra.mxu0 0.0
  %870 = vmatprep.subr.mxu0 0.0
  %871 = vmatpush1.msra.mxu0 0.0
  %872 = vmatprep.subr.mxu0 0.0
  %873 = vmatpush1.msra.mxu0 0.0
  %874 = vmatprep.subr.mxu0 0.0
  %875 = vmatpush1.msra.mxu0 0.0
  %876 = vmatprep.subr.mxu0 0.0
  %877 = vmatpush1.msra.mxu0 0.0
  %878 = vmatprep.subr.mxu0 0.0
  %879 = vmatpush1.msra.mxu0 0.0
  %880 = vmatprep.subr.mxu0 0.0
  %881 = vmatpush1.msra.mxu0 0.0
  %882 = vmatprep.subr.mxu0 0.0
  %883 = vmatpush1.msra.mxu0 0.0
  %884 = vmatprep.subr.mxu0 0.0
  %885 = vmatpush1.msra.mxu0 0.0
  %886 = vmatprep.subr.mxu0 0.0
  %887 = vmatpush1.msra.mxu0 0.0
  %888 = vmatprep.subr.mxu0 0.0
  %889 = vmatpush1.msra.mxu0 0.0
  %890 = vmatprep.subr.mxu0 0.0
  %891 = vmatpush1.msra.mxu0 0.0
  %892 = vmatprep.subr.mxu0 0.0
  %893 = vmatpush1.msra.mxu0 0.0
  %894 = vmatprep.subr.mxu0 0.0
  %895 = vmatpush1.msra.mxu0 0.0
  %896 = vmatprep.subr.mxu0 0.0
  %897 = vmatpush1.msra.mxu0 0.0
  %898 = vmatprep.subr.mxu0 0.0
  %899 = vmatpush1.msra.mxu0 0.0
  %900 = vmatprep.subr.mxu0 0.0
  %901 = vmatpush1.msra.mxu0 0.0
  %902 = vmatprep.subr.mxu0 0.0
  %903 = vmatpush1.msra.mxu0 0.0
  %904 = vmatprep.subr.mxu0 0.0
  %905 = vmatpush1.msra.mxu0 0.0
  %906 = vmatprep.mubr.f32.mxu0 0.0
  %907 = vmatmul.mubr.f32.gmra.mrb[0].mxu0 %v427
  %v908 = vpop.f32.mrb[0].mxu0
  %v909 = vadd.f32 0.0, %v908
  %v910 = vpop.f32.mrb[0].mxu0
  %v911 = vadd.f32 0.0, %v910
  %912 = vmatprep.mubr.f32.mxu0 0.0
  %913 = vmatmul.mubr.f32.gmra.mrb[0].mxu0 %v430
  %v914 = vpop.f32.mrb[0].mxu0
  %v915 = vadd.f32 0.0, %v914
  %v916 = vpop.f32.mrb[0].mxu0
  %v917 = vadd.f32 0.0, %v916
  %918 = vmatprep.mubr.f32.mxu0 0.0
  %919 = vmatmul.mubr.f32.gmra.mrb[0].mxu0 %v433
  %v920 = vpop.f32.mrb[0].mxu0
  %v921 = vadd.f32 0.0, %v920
  %v922 = vpop.f32.mrb[0].mxu0
  %v923 = vadd.f32 0.0, %v922
  %924 = vdwg.mxu0
  %925 = vmatprep.subr.mxu0 0.0
  %926 = vmatpush1.msra.mxu0 %v820
  %927 = vmatprep.subr.mxu0 0.0
  %928 = vmatpush1.msra.mxu0 %v823
  %929 = vmatprep.subr.mxu0 0.0
  %930 = vmatpush1.msra.mxu0 %v826
  %931 = vmatprep.subr.mxu0 0.0
  %932 = vmatpush1.msra.mxu0 %v829
  %933 = vmatprep.subr.mxu0 0.0
  %934 = vmatpush1.msra.mxu0 %v832
  %935 = vmatprep.subr.mxu0 0.0
  %936 = vmatpush1.msra.mxu0 %v835
  %937 = vmatprep.subr.mxu0 0.0
  %938 = vmatpush1.msra.mxu0 %v838
  %939 = vmatprep.subr.mxu0 0.0
  %940 = vmatpush1.msra.mxu0 %v841
  %941 = vmatprep.subr.mxu0 0.0
  %942 = vmatpush1.msra.mxu0 0.0
  %943 = vmatprep.subr.mxu0 0.0
  %944 = vmatpush1.msra.mxu0 0.0
  %945 = vmatprep.subr.mxu0 0.0
  %946 = vmatpush1.msra.mxu0 0.0
  %947 = vmatprep.subr.mxu0 0.0
  %948 = vmatpush1.msra.mxu0 0.0
  %949 = vmatprep.subr.mxu0 0.0
  %950 = vmatpush1.msra.mxu0 0.0
  %951 = vmatprep.subr.mxu0 0.0
  %952 = vmatpush1.msra.mxu0 0.0
  %953 = vmatprep.subr.mxu0 0.0
  %954 = vmatpush1.msra.mxu0 0.0
  %955 = vmatprep.subr.mxu0 0.0
  %956 = vmatpush1.msra.mxu0 0.0
  %957 = vmatprep.subr.mxu0 0.0
  %958 = vmatpush1.msra.mxu0 0.0
  %959 = vmatprep.subr.mxu0 0.0
  %960 = vmatpush1.msra.mxu0 0.0
  %961 = vmatprep.subr.mxu0 0.0
  %962 = vmatpush1.msra.mxu0 0.0
  %963 = vmatprep.subr.mxu0 0.0
  %964 = vmatpush1.msra.mxu0 0.0
  %965 = vmatprep.subr.mxu0 0.0
  %966 = vmatpush1.msra.mxu0 0.0
  %967 = vmatprep.subr.mxu0 0.0
  %968 = vmatpush1.msra.mxu0 0.0
  %969 = vmatprep.subr.mxu0 0.0
  %970 = vmatpush1.msra.mxu0 0.0
  %971 = vmatprep.subr.mxu0 0.0
  %972 = vmatpush1.msra.mxu0 0.0
  %973 = vmatprep.subr.mxu0 0.0
  %974 = vmatpush1.msra.mxu0 0.0
  %975 = vmatprep.subr.mxu0 0.0
  %976 = vmatpush1.msra.mxu0 0.0
  %977 = vmatprep.subr.mxu0 0.0
  %978 = vmatpush1.msra.mxu0 0.0
  %979 = vmatprep.subr.mxu0 0.0
  %980 = vmatpush1.msra.mxu0 0.0
  %981 = vmatprep.subr.mxu0 0.0
  %982 = vmatpush1.msra.mxu0 0.0
  %983 = vmatprep.subr.mxu0 0.0
  %984 = vmatpush1.msra.mxu0 0.0
  %985 = vmatprep.subr.mxu0 0.0
  %986 = vmatpush1.msra.mxu0 0.0
  %987 = vmatprep.subr.mxu0 0.0
  %988 = vmatpush1.msra.mxu0 0.0
  %989 = vmatprep.mubr.f32.mxu0 0.0
  %990 = vmatmul.mubr.f32.gmra.mrb[0].mxu0 %v427
  %v991 = vpop.f32.mrb[0].mxu0
  %v992 = vadd.f32 0.0, %v991
  %v993 = vpop.f32.mrb[0].mxu0
  %994 = vmatprep.mubr.f32.mxu0 0.0
  %995 = vmatmul.mubr.f32.gmra.mrb[0].mxu0 %v430
  %v996 = vpop.f32.mrb[0].mxu0
  %v997 = vadd.f32 0.0, %v996
  %v998 = vpop.f32.mrb[0].mxu0
  %999 = vmatprep.mubr.f32.mxu0 0.0
  %1000 = vmatmul.mubr.f32.gmra.mrb[0].mxu0 %v433
  %v1001 = vpop.f32.mrb[0].mxu0
  %v1002 = vadd.f32 0.0, %v1001
  %v1003 = vpop.f32.mrb[0].mxu0
  %1004 = vdwg.mxu0
  %1005 = vmatprep.subr.mxu0 0.0
  %1006 = vmatpush1.xpose.msra.mxu0 %v911
  %1007 = vmatprep.subr.mxu0 0.0
  %1008 = vmatpush1.xpose.msra.mxu0 %v917
  %1009 = vmatprep.subr.mxu0 0.0
  %1010 = vmatpush1.xpose.msra.mxu0 %v923
  %1011 = vmatprep.subr.mxu0 0.0
  %1012 = vmatpush1.xpose.msra.mxu0 0.0
  %1013 = vmatprep.subr.mxu0 0.0
  %1014 = vmatpush1.xpose.msra.mxu0 0.0
  %1015 = vmatprep.subr.mxu0 0.0
  %1016 = vmatpush1.xpose.msra.mxu0 0.0
  %1017 = vmatprep.subr.mxu0 0.0
  %1018 = vmatpush1.xpose.msra.mxu0 0.0
  %1019 = vmatprep.subr.mxu0 0.0
  %1020 = vmatpush1.xpose.msra.mxu0 0.0
  %1021 = vmatprep.subr.mxu0 0.0
  %1022 = vmatpush1.xpose.msra.mxu0 0.0
  %1023 = vmatprep.subr.mxu0 0.0
  %1024 = vmatpush1.xpose.msra.mxu0 0.0
  %1025 = vmatprep.subr.mxu0 0.0
  %1026 = vmatpush1.xpose.msra.mxu0 0.0
  %1027 = vmatprep.subr.mxu0 0.0
  %1028 = vmatpush1.xpose.msra.mxu0 0.0
  %1029 = vmatprep.subr.mxu0 0.0
  %1030 = vmatpush1.xpose.msra.mxu0 0.0
  %1031 = vmatprep.subr.mxu0 0.0
  %1032 = vmatpush1.xpose.msra.mxu0 0.0
  %1033 = vmatprep.subr.mxu0 0.0
  %1034 = vmatpush1.xpose.msra.mxu0 0.0
  %1035 = vmatprep.subr.mxu0 0.0
  %1036 = vmatpush1.xpose.msra.mxu0 0.0
  %1037 = vmatprep.subr.mxu0 0.0
  %1038 = vmatpush1.xpose.msra.mxu0 0.0
  %1039 = vmatprep.subr.mxu0 0.0
  %1040 = vmatpush1.xpose.msra.mxu0 0.0
  %1041 = vmatprep.subr.mxu0 0.0
  %1042 = vmatpush1.xpose.msra.mxu0 0.0
  %1043 = vmatprep.subr.mxu0 0.0
  %1044 = vmatpush1.xpose.msra.mxu0 0.0
  %1045 = vmatprep.subr.mxu0 0.0
  %1046 = vmatpush1.xpose.msra.mxu0 0.0
  %1047 = vmatprep.subr.mxu0 0.0
  %1048 = vmatpush1.xpose.msra.mxu0 0.0
  %1049 = vmatprep.subr.mxu0 0.0
  %1050 = vmatpush1.xpose.msra.mxu0 0.0
  %1051 = vmatprep.subr.mxu0 0.0
  %1052 = vmatpush1.xpose.msra.mxu0 0.0
  %1053 = vmatprep.subr.mxu0 0.0
  %1054 = vmatpush1.xpose.msra.mxu0 0.0
  %1055 = vmatprep.subr.mxu0 0.0
  %1056 = vmatpush1.xpose.msra.mxu0 0.0
  %1057 = vmatprep.subr.mxu0 0.0
  %1058 = vmatpush1.xpose.msra.mxu0 0.0
  %1059 = vmatprep.subr.mxu0 0.0
  %1060 = vmatpush1.xpose.msra.mxu0 0.0
  %1061 = vmatprep.subr.mxu0 0.0
  %1062 = vmatpush1.xpose.msra.mxu0 0.0
  %1063 = vmatprep.subr.mxu0 0.0
  %1064 = vmatpush1.xpose.msra.mxu0 0.0
  %1065 = vmatprep.subr.mxu0 0.0
  %1066 = vmatpush1.xpose.msra.mxu0 0.0
  %1067 = vmatprep.subr.mxu0 0.0
  %1068 = vmatpush1.xpose.msra.mxu0 0.0
  %1069 = vmatprep.mubr.f32.mxu0 0.0
  %1070 = vmatmul.mubr.f32.gmra.mrb[0].mxu0 %v909
  %v1071 = vpop.f32.mrb[0].mxu0
  %v1072 = vadd.f32 %v338, %v1071
  %v1073 = vpop.f32.mrb[0].mxu0
  %1074 = vmatprep.mubr.f32.mxu0 0.0
  %1075 = vmatmul.mubr.f32.gmra.mrb[0].mxu0 %v915
  %v1076 = vpop.f32.mrb[0].mxu0
  %v1077 = vadd.f32 %v339, %v1076
  %v1078 = vpop.f32.mrb[0].mxu0
  %1079 = vmatprep.mubr.f32.mxu0 0.0
  %1080 = vmatmul.mubr.f32.gmra.mrb[0].mxu0 %v921
  %v1081 = vpop.f32.mrb[0].mxu0
  %v1082 = vadd.f32 %v340, %v1081
  %v1083 = vpop.f32.mrb[0].mxu0
  %1084 = vdwg.mxu0
  %v1085 = vsel %vm678, %v1072, -inf
  %1086 = vmax.xlane.f32.xlu0 %v1085
  %v1087 = vpop.xlane.xlu0 %1086
  %v1088 = vsel %vm678, %v1077, -inf
  %1089 = vmax.xlane.f32.xlu0 %v1088
  %v1090 = vpop.xlane.xlu0 %1089
  %v1091 = vsel %vm678, %v1082, -inf
  %1092 = vmax.xlane.f32.xlu0 %v1091
  %v1093 = vpop.xlane.xlu0 %1092
  %v1094 = vsub.f32 %v1072, %v1087
  %v1095 = vsub.f32 %v1077, %v1090
  %v1096 = vsub.f32 %v1082, %v1093
  %v1097 = vmul.f32 %v1094, 1.442695
  %v1098 = vpow.pop %v1097
  %v1099 = vmul.f32 %v1095, 1.442695
  %v1100 = vpow.pop %v1099
  %v1101 = vmul.f32 %v1096, 1.442695
  %v1102 = vpow.pop %v1101
  %v1103 = vsel %vm678, %v1098, 0.0
  %1104 = vadd.xlane.f32.xlu0 %v1103
  %v1105 = vpop.xlane.xlu0 %1104
  %v1106 = vsel %vm678, %v1100, 0.0
  %1107 = vadd.xlane.f32.xlu0 %v1106
  %v1108 = vpop.xlane.xlu0 %1107
  %v1109 = vsel %vm678, %v1102, 0.0
  %1110 = vadd.xlane.f32.xlu0 %v1109
  %v1111 = vpop.xlane.xlu0 %1110
  %v1112 = vrcp.pop %v1105
  %v1113 = vrcp.pop %v1108
  %v1114 = vrcp.pop %v1111
  %v1115 = vmul.f32 %v1098, %v1112
  %v1116 = vmul.f32 %v1100, %v1113
  %v1117 = vmul.f32 %v1102, %v1114
  %v1119 = vsel %vm678, %v1115, 0
  %v1122 = vsel %vm678, %v1116, 0
  %v1125 = vsel %vm678, %v1117, 0
  %1127 = vmatprep.subr.mxu0 0.0
  %1128 = vmatpush1.msra.mxu0 %v992
  %1129 = vmatprep.subr.mxu0 0.0
  %1130 = vmatpush1.msra.mxu0 %v997
  %1131 = vmatprep.subr.mxu0 0.0
  %1132 = vmatpush1.msra.mxu0 %v1002
  %1133 = vmatprep.subr.mxu0 0.0
  %1134 = vmatpush1.msra.mxu0 0.0
  %1135 = vmatprep.subr.mxu0 0.0
  %1136 = vmatpush1.msra.mxu0 0.0
  %1137 = vmatprep.subr.mxu0 0.0
  %1138 = vmatpush1.msra.mxu0 0.0
  %1139 = vmatprep.subr.mxu0 0.0
  %1140 = vmatpush1.msra.mxu0 0.0
  %1141 = vmatprep.subr.mxu0 0.0
  %1142 = vmatpush1.msra.mxu0 0.0
  %1143 = vmatprep.subr.mxu0 0.0
  %1144 = vmatpush1.msra.mxu0 0.0
  %1145 = vmatprep.subr.mxu0 0.0
  %1146 = vmatpush1.msra.mxu0 0.0
  %1147 = vmatprep.subr.mxu0 0.0
  %1148 = vmatpush1.msra.mxu0 0.0
  %1149 = vmatprep.subr.mxu0 0.0
  %1150 = vmatpush1.msra.mxu0 0.0
  %1151 = vmatprep.subr.mxu0 0.0
  %1152 = vmatpush1.msra.mxu0 0.0
  %1153 = vmatprep.subr.mxu0 0.0
  %1154 = vmatpush1.msra.mxu0 0.0
  %1155 = vmatprep.subr.mxu0 0.0
  %1156 = vmatpush1.msra.mxu0 0.0
  %1157 = vmatprep.subr.mxu0 0.0
  %1158 = vmatpush1.msra.mxu0 0.0
  %1159 = vmatprep.subr.mxu0 0.0
  %1160 = vmatpush1.msra.mxu0 0.0
  %1161 = vmatprep.subr.mxu0 0.0
  %1162 = vmatpush1.msra.mxu0 0.0
  %1163 = vmatprep.subr.mxu0 0.0
  %1164 = vmatpush1.msra.mxu0 0.0
  %1165 = vmatprep.subr.mxu0 0.0
  %1166 = vmatpush1.msra.mxu0 0.0
  %1167 = vmatprep.subr.mxu0 0.0
  %1168 = vmatpush1.msra.mxu0 0.0
  %1169 = vmatprep.subr.mxu0 0.0
  %1170 = vmatpush1.msra.mxu0 0.0
  %1171 = vmatprep.subr.mxu0 0.0
  %1172 = vmatpush1.msra.mxu0 0.0
  %1173 = vmatprep.subr.mxu0 0.0
  %1174 = vmatpush1.msra.mxu0 0.0
  %1175 = vmatprep.subr.mxu0 0.0
  %1176 = vmatpush1.msra.mxu0 0.0
  %1177 = vmatprep.subr.mxu0 0.0
  %1178 = vmatpush1.msra.mxu0 0.0
  %1179 = vmatprep.subr.mxu0 0.0
  %1180 = vmatpush1.msra.mxu0 0.0
  %1181 = vmatprep.subr.mxu0 0.0
  %1182 = vmatpush1.msra.mxu0 0.0
  %1183 = vmatprep.subr.mxu0 0.0
  %1184 = vmatpush1.msra.mxu0 0.0
  %1185 = vmatprep.subr.mxu0 0.0
  %1186 = vmatpush1.msra.mxu0 0.0
  %1187 = vmatprep.subr.mxu0 0.0
  %1188 = vmatpush1.msra.mxu0 0.0
  %1189 = vmatprep.subr.mxu0 0.0
  %1190 = vmatpush1.msra.mxu0 0.0
  %1191 = vmatprep.mubr.f32.mxu0 0.0
  %1192 = vmatmul.mubr.f32.gmra.mrb[0].mxu0 %v1119
  %v1193 = vpop.f32.mrb[0].mxu0
  %v1194 = vadd.f32 0.0, %v1193
  %v1195 = vpop.f32.mrb[0].mxu0
  %1196 = vmatprep.mubr.f32.mxu0 0.0
  %1197 = vmatmul.mubr.f32.gmra.mrb[0].mxu0 %v1122
  %v1198 = vpop.f32.mrb[0].mxu0
  %v1199 = vadd.f32 0.0, %v1198
  %v1200 = vpop.f32.mrb[0].mxu0
  %1201 = vmatprep.mubr.f32.mxu0 0.0
  %1202 = vmatmul.mubr.f32.gmra.mrb[0].mxu0 %v1125
  %v1203 = vpop.f32.mrb[0].mxu0
  %v1204 = vadd.f32 0.0, %v1203
  %v1205 = vpop.f32.mrb[0].mxu0
  %1206 = vdwg.mxu0
  %v1207 = vld [vmem:[%s6 + $0x80] sm:$0xff]
  %v1208 = vld [vmem:[%s6 + $0x88] sm:$0xff]
  %v1209 = vld [vmem:[%s6 + $0x90] sm:$0xff]
  %v1210 = vld [vmem:[%s6 + $0x98] sm:$0xff]
  %v1211 = vld [vmem:[%s6 + $0xa0] sm:$0xff]
  %v1212 = vld [vmem:[%s6 + $0xa8] sm:$0xff]
  %v1213 = vld [vmem:[%s6 + $0xb0] sm:$0xff]
  %v1214 = vld [vmem:[%s6 + $0xb8] sm:$0xff]
  %v1215 = vld [vmem:[%s6 + $0xc0] sm:$0xff]
  %v1216 = vld [vmem:[%s6 + $0xc8] sm:$0xff]
  %v1217 = vld [vmem:[%s6 + $0xd0] sm:$0xff]
  %v1218 = vld [vmem:[%s6 + $0xd8] sm:$0xff]
  %v1219 = vld [vmem:[%s6 + $0xe0] sm:$0xff]
  %v1220 = vld [vmem:[%s6 + $0xe8] sm:$0xff]
  %v1221 = vld [vmem:[%s6 + $0xf0] sm:$0xff]
  %v1222 = vld [vmem:[%s6 + $0xf8] sm:$0xff]
  %1223 = vmatprep.subr.mxu0 0.0
  %1224 = vmatpush1.msra.mxu0 %v1207
  %1225 = vmatprep.subr.mxu0 0.0
  %1226 = vmatpush1.msra.mxu0 %v1208
  %1227 = vmatprep.subr.mxu0 0.0
  %1228 = vmatpush1.msra.mxu0 %v1209
  %1229 = vmatprep.subr.mxu0 0.0
  %1230 = vmatpush1.msra.mxu0 %v1210
  %1231 = vmatprep.subr.mxu0 0.0
  %1232 = vmatpush1.msra.mxu0 %v1211
  %1233 = vmatprep.subr.mxu0 0.0
  %1234 = vmatpush1.msra.mxu0 %v1212
  %1235 = vmatprep.subr.mxu0 0.0
  %1236 = vmatpush1.msra.mxu0 %v1213
  %1237 = vmatprep.subr.mxu0 0.0
  %1238 = vmatpush1.msra.mxu0 %v1214
  %1239 = vmatprep.subr.mxu0 0.0
  %1240 = vmatpush1.msra.mxu0 %v1215
  %1241 = vmatprep.subr.mxu0 0.0
  %1242 = vmatpush1.msra.mxu0 %v1216
  %1243 = vmatprep.subr.mxu0 0.0
  %1244 = vmatpush1.msra.mxu0 %v1217
  %1245 = vmatprep.subr.mxu0 0.0
  %1246 = vmatpush1.msra.mxu0 %v1218
  %1247 = vmatprep.subr.mxu0 0.0
  %1248 = vmatpush1.msra.mxu0 %v1219
  %1249 = vmatprep.subr.mxu0 0.0
  %1250 = vmatpush1.msra.mxu0 %v1220
  %1251 = vmatprep.subr.mxu0 0.0
  %1252 = vmatpush1.msra.mxu0 %v1221
  %1253 = vmatprep.subr.mxu0 0.0
  %1254 = vmatpush1.msra.mxu0 %v1222
  %1255 = vmatprep.subr.mxu0 0.0
  %1256 = vmatpush1.msra.mxu0 0.0
  %1257 = vmatprep.subr.mxu0 0.0
  %1258 = vmatpush1.msra.mxu0 0.0
  %1259 = vmatprep.subr.mxu0 0.0
  %1260 = vmatpush1.msra.mxu0 0.0
  %1261 = vmatprep.subr.mxu0 0.0
  %1262 = vmatpush1.msra.mxu0 0.0
  %1263 = vmatprep.subr.mxu0 0.0
  %1264 = vmatpush1.msra.mxu0 0.0
  %1265 = vmatprep.subr.mxu0 0.0
  %1266 = vmatpush1.msra.mxu0 0.0
  %1267 = vmatprep.subr.mxu0 0.0
  %1268 = vmatpush1.msra.mxu0 0.0
  %1269 = vmatprep.subr.mxu0 0.0
  %1270 = vmatpush1.msra.mxu0 0.0
  %1271 = vmatprep.subr.mxu0 0.0
  %1272 = vmatpush1.msra.mxu0 0.0
  %1273 = vmatprep.subr.mxu0 0.0
  %1274 = vmatpush1.msra.mxu0 0.0
  %1275 = vmatprep.subr.mxu0 0.0
  %1276 = vmatpush1.msra.mxu0 0.0
  %1277 = vmatprep.subr.mxu0 0.0
  %1278 = vmatpush1.msra.mxu0 0.0
  %1279 = vmatprep.subr.mxu0 0.0
  %1280 = vmatpush1.msra.mxu0 0.0
  %1281 = vmatprep.subr.mxu0 0.0
  %1282 = vmatpush1.msra.mxu0 0.0
  %1283 = vmatprep.subr.mxu0 0.0
  %1284 = vmatpush1.msra.mxu0 0.0
  %1285 = vmatprep.subr.mxu0 0.0
  %1286 = vmatpush1.msra.mxu0 0.0
  %1287 = vmatprep.mubr.f32.mxu0 0.0
  %1288 = vmatmul.mubr.f32.gmra.mrb[0].mxu0 %v1194
  %v1289 = vpop.f32.mrb[0].mxu0
  %v1290 = vadd.f32 0.0, %v1289
  %v1291 = vpop.f32.mrb[0].mxu0
  %1292 = vmatprep.mubr.f32.mxu0 0.0
  %1293 = vmatmul.mubr.f32.gmra.mrb[0].mxu0 %v1199
  %v1294 = vpop.f32.mrb[0].mxu0
  %v1295 = vadd.f32 0.0, %v1294
  %v1296 = vpop.f32.mrb[0].mxu0
  %1297 = vmatprep.mubr.f32.mxu0 0.0
  %1298 = vmatmul.mubr.f32.gmra.mrb[0].mxu0 %v1204
  %v1299 = vpop.f32.mrb[0].mxu0
  %v1300 = vadd.f32 0.0, %v1299
  %v1301 = vpop.f32.mrb[0].mxu0
  %1302 = vdwg.mxu0
  %1303 = vmatprep.subr.mxu0 0.0
  %1304 = vmatpush1.msra.mxu0 %v801
  %1305 = vmatprep.subr.mxu0 0.0
  %1306 = vmatpush1.msra.mxu0 %v802
  %1307 = vmatprep.subr.mxu0 0.0
  %1308 = vmatpush1.msra.mxu0 %v803
  %1309 = vmatprep.subr.mxu0 0.0
  %1310 = vmatpush1.msra.mxu0 %v804
  %1311 = vmatprep.subr.mxu0 0.0
  %1312 = vmatpush1.msra.mxu0 %v805
  %1313 = vmatprep.subr.mxu0 0.0
  %1314 = vmatpush1.msra.mxu0 %v806
  %1315 = vmatprep.subr.mxu0 0.0
  %1316 = vmatpush1.msra.mxu0 %v807
  %1317 = vmatprep.subr.mxu0 0.0
  %1318 = vmatpush1.msra.mxu0 %v808
  %1319 = vmatprep.subr.mxu0 0.0
  %1320 = vmatpush1.msra.mxu0 %v809
  %1321 = vmatprep.subr.mxu0 0.0
  %1322 = vmatpush1.msra.mxu0 %v810
  %1323 = vmatprep.subr.mxu0 0.0
  %1324 = vmatpush1.msra.mxu0 %v811
  %1325 = vmatprep.subr.mxu0 0.0
  %1326 = vmatpush1.msra.mxu0 %v812
  %1327 = vmatprep.subr.mxu0 0.0
  %1328 = vmatpush1.msra.mxu0 %v813
  %1329 = vmatprep.subr.mxu0 0.0
  %1330 = vmatpush1.msra.mxu0 %v814
  %1331 = vmatprep.subr.mxu0 0.0
  %1332 = vmatpush1.msra.mxu0 %v815
  %1333 = vmatprep.subr.mxu0 0.0
  %1334 = vmatpush1.msra.mxu0 %v816
  %1335 = vmatprep.subr.mxu0 0.0
  %1336 = vmatpush1.msra.mxu0 0.0
  %1337 = vmatprep.subr.mxu0 0.0
  %1338 = vmatpush1.msra.mxu0 0.0
  %1339 = vmatprep.subr.mxu0 0.0
  %1340 = vmatpush1.msra.mxu0 0.0
  %1341 = vmatprep.subr.mxu0 0.0
  %1342 = vmatpush1.msra.mxu0 0.0
  %1343 = vmatprep.subr.mxu0 0.0
  %1344 = vmatpush1.msra.mxu0 0.0
  %1345 = vmatprep.subr.mxu0 0.0
  %1346 = vmatpush1.msra.mxu0 0.0
  %1347 = vmatprep.subr.mxu0 0.0
  %1348 = vmatpush1.msra.mxu0 0.0
  %1349 = vmatprep.subr.mxu0 0.0
  %1350 = vmatpush1.msra.mxu0 0.0
  %1351 = vmatprep.subr.mxu0 0.0
  %1352 = vmatpush1.msra.mxu0 0.0
  %1353 = vmatprep.subr.mxu0 0.0
  %1354 = vmatpush1.msra.mxu0 0.0
  %1355 = vmatprep.subr.mxu0 0.0
  %1356 = vmatpush1.msra.mxu0 0.0
  %1357 = vmatprep.subr.mxu0 0.0
  %1358 = vmatpush1.msra.mxu0 0.0
  %1359 = vmatprep.subr.mxu0 0.0
  %1360 = vmatpush1.msra.mxu0 0.0
  %1361 = vmatprep.subr.mxu0 0.0
  %1362 = vmatpush1.msra.mxu0 0.0
  %1363 = vmatprep.subr.mxu0 0.0
  %1364 = vmatpush1.msra.mxu0 0.0
  %1365 = vmatprep.subr.mxu0 0.0
  %1366 = vmatpush1.msra.mxu0 0.0
  %1367 = vmatprep.mubr.f32.mxu0 0.0
  %1368 = vmatmul.mubr.f32.gmra.mrb[0].mxu0 %v788
  %v1369 = vpop.f32.mrb[0].mxu0
  %v1370 = vadd.f32 %v1290, %v1369
  %v1371 = vpop.f32.mrb[0].mxu0
  %1372 = vmatprep.mubr.f32.mxu0 0.0
  %1373 = vmatmul.mubr.f32.gmra.mrb[0].mxu0 %v793
  %v1374 = vpop.f32.mrb[0].mxu0
  %v1375 = vadd.f32 %v1295, %v1374
  %v1376 = vpop.f32.mrb[0].mxu0
  %1377 = vmatprep.mubr.f32.mxu0 0.0
  %1378 = vmatmul.mubr.f32.gmra.mrb[0].mxu0 %v798
  %v1379 = vpop.f32.mrb[0].mxu0
  %v1380 = vadd.f32 %v1300, %v1379
  %v1381 = vpop.f32.mrb[0].mxu0
  %1382 = vdwg.mxu0
  %v1383 = vadd.f32 %v303, %v1370
  %v1384 = vadd.f32 %v304, %v1375
  %v1385 = vadd.f32 %v305, %v1380
  %v1386 = vlaneseq
  %v1387 = vshrl.u32 %v1386, 7
  %v1388 = vsub.s32 0, %v1387
  %v1389 = vrot.slane %v343, %v1388
  %v1390 = vadd.f32 %v1383, %v1389
  %v1391 = vadd.f32 %v1384, %v1389
  %v1392 = vadd.f32 %v1385, %v1389
  %v1393 = vsel %vm295, %v1390, 0.0
  %1394 = vadd.xlane.f32.xlu0 %v1393
  %v1395 = vpop.xlane.xlu0 %1394
  %v1396 = vsel %vm295, %v1391, 0.0
  %1397 = vadd.xlane.f32.xlu0 %v1396
  %v1398 = vpop.xlane.xlu0 %1397
  %v1399 = vsel %vm295, %v1392, 0.0
  %1400 = vadd.xlane.f32.xlu0 %v1399
  %v1401 = vpop.xlane.xlu0 %1400
  %v1402 = vmul.f32 %v1395, %v357
  %v1403 = vmul.f32 %v1398, %v357
  %v1404 = vmul.f32 %v1401, %v357
  %v1405 = vsub.f32 %v1390, %v1402
  %v1406 = vsub.f32 %v1391, %v1403
  %v1407 = vsub.f32 %v1392, %v1404
  %v1408 = vmul.f32 %v1405, %v1405
  %v1409 = vmul.f32 %v1406, %v1406
  %v1410 = vmul.f32 %v1407, %v1407
  %v1411 = vsel %vm295, %v1408, 0.0
  %1412 = vadd.xlane.f32.xlu0 %v1411
  %v1413 = vpop.xlane.xlu0 %1412
  %v1414 = vsel %vm295, %v1409, 0.0
  %1415 = vadd.xlane.f32.xlu0 %v1414
  %v1416 = vpop.xlane.xlu0 %1415
  %v1417 = vsel %vm295, %v1410, 0.0
  %1418 = vadd.xlane.f32.xlu0 %v1417
  %v1419 = vpop.xlane.xlu0 %1418
  %v1420 = vmul.f32 %v1413, %v357
  %v1421 = vmul.f32 %v1416, %v357
  %v1422 = vmul.f32 %v1419, %v357
  %v1423 = vadd.f32 %v1420, 1e-05
  %v1424 = vadd.f32 %v1421, 1e-05
  %v1425 = vadd.f32 %v1422, 1e-05
  %v1426 = vrsqrt.pop %v1423
  %v1427 = vrsqrt.pop %v1424
  %v1428 = vrsqrt.pop %v1425
  %v1429 = vmul.f32 %v1405, %v1426
  %v1430 = vmul.f32 %v1406, %v1427
  %v1431 = vmul.f32 %v1407, %v1428
  %v1432 = vlaneseq
  %v1433 = vshrl.u32 %v1432, 7
  %v1434 = vsub.s32 0, %v1433
  %v1435 = vrot.slane %v344, %v1434
  %v1436 = vmul.f32 %v1429, %v1435
  %v1437 = vmul.f32 %v1430, %v1435
  %v1438 = vmul.f32 %v1431, %v1435
  %v1439 = vlaneseq
  %v1440 = vshrl.u32 %v1439, 7
  %v1441 = vsub.s32 0, %v1440
  %v1442 = vrot.slane %v345, %v1441
  %v1443 = vadd.f32 %v1436, %v1442
  %v1444 = vadd.f32 %v1437, %v1442
  %v1445 = vadd.f32 %v1438, %v1442
  %v1446 = vld [vmem:[%s6 + $0x100] sm:$0xff]
  %v1447 = vld [vmem:[%s6 + $0x108] sm:$0xff]
  %v1448 = vld [vmem:[%s6 + $0x110] sm:$0xff]
  %v1449 = vld [vmem:[%s6 + $0x118] sm:$0xff]
  %v1450 = vld [vmem:[%s6 + $0x120] sm:$0xff]
  %v1451 = vld [vmem:[%s6 + $0x128] sm:$0xff]
  %v1452 = vld [vmem:[%s6 + $0x130] sm:$0xff]
  %v1453 = vld [vmem:[%s6 + $0x138] sm:$0xff]
  %v1454 = vlaneseq
  %v1455 = vshrl.u32 %v1454, 7
  %v1456 = vsub.s32 0, %v1455
  %v1457 = vrot.slane %v346, %v1456
  %v1459 = vsel %vm295, %v1443, 0
  %v1462 = vsel %vm295, %v1444, 0
  %v1465 = vsel %vm295, %v1445, 0
  %1467 = vmatprep.subr.mxu0 0.0
  %1468 = vmatpush1.msra.mxu0 %v1446
  %1469 = vmatprep.subr.mxu0 0.0
  %1470 = vmatpush1.msra.mxu0 %v1447
  %1471 = vmatprep.subr.mxu0 0.0
  %1472 = vmatpush1.msra.mxu0 %v1448
  %1473 = vmatprep.subr.mxu0 0.0
  %1474 = vmatpush1.msra.mxu0 %v1449
  %1475 = vmatprep.subr.mxu0 0.0
  %1476 = vmatpush1.msra.mxu0 %v1450
  %1477 = vmatprep.subr.mxu0 0.0
  %1478 = vmatpush1.msra.mxu0 %v1451
  %1479 = vmatprep.subr.mxu0 0.0
  %1480 = vmatpush1.msra.mxu0 %v1452
  %1481 = vmatprep.subr.mxu0 0.0
  %1482 = vmatpush1.msra.mxu0 %v1453
  %1483 = vmatprep.subr.mxu0 0.0
  %1484 = vmatpush1.msra.mxu0 0.0
  %1485 = vmatprep.subr.mxu0 0.0
  %1486 = vmatpush1.msra.mxu0 0.0
  %1487 = vmatprep.subr.mxu0 0.0
  %1488 = vmatpush1.msra.mxu0 0.0
  %1489 = vmatprep.subr.mxu0 0.0
  %1490 = vmatpush1.msra.mxu0 0.0
  %1491 = vmatprep.subr.mxu0 0.0
  %1492 = vmatpush1.msra.mxu0 0.0
  %1493 = vmatprep.subr.mxu0 0.0
  %1494 = vmatpush1.msra.mxu0 0.0
  %1495 = vmatprep.subr.mxu0 0.0
  %1496 = vmatpush1.msra.mxu0 0.0
  %1497 = vmatprep.subr.mxu0 0.0
  %1498 = vmatpush1.msra.mxu0 0.0
  %1499 = vmatprep.subr.mxu0 0.0
  %1500 = vmatpush1.msra.mxu0 0.0
  %1501 = vmatprep.subr.mxu0 0.0
  %1502 = vmatpush1.msra.mxu0 0.0
  %1503 = vmatprep.subr.mxu0 0.0
  %1504 = vmatpush1.msra.mxu0 0.0
  %1505 = vmatprep.subr.mxu0 0.0
  %1506 = vmatpush1.msra.mxu0 0.0
  %1507 = vmatprep.subr.mxu0 0.0
  %1508 = vmatpush1.msra.mxu0 0.0
  %1509 = vmatprep.subr.mxu0 0.0
  %1510 = vmatpush1.msra.mxu0 0.0
  %1511 = vmatprep.subr.mxu0 0.0
  %1512 = vmatpush1.msra.mxu0 0.0
  %1513 = vmatprep.subr.mxu0 0.0
  %1514 = vmatpush1.msra.mxu0 0.0
  %1515 = vmatprep.subr.mxu0 0.0
  %1516 = vmatpush1.msra.mxu0 0.0
  %1517 = vmatprep.subr.mxu0 0.0
  %1518 = vmatpush1.msra.mxu0 0.0
  %1519 = vmatprep.subr.mxu0 0.0
  %1520 = vmatpush1.msra.mxu0 0.0
  %1521 = vmatprep.subr.mxu0 0.0
  %1522 = vmatpush1.msra.mxu0 0.0
  %1523 = vmatprep.subr.mxu0 0.0
  %1524 = vmatpush1.msra.mxu0 0.0
  %1525 = vmatprep.subr.mxu0 0.0
  %1526 = vmatpush1.msra.mxu0 0.0
  %1527 = vmatprep.subr.mxu0 0.0
  %1528 = vmatpush1.msra.mxu0 0.0
  %1529 = vmatprep.subr.mxu0 0.0
  %1530 = vmatpush1.msra.mxu0 0.0
  %1531 = vmatprep.mubr.f32.mxu0 0.0
  %1532 = vmatmul.mubr.f32.gmra.mrb[0].mxu0 %v1459
  %v1533 = vpop.f32.mrb[0].mxu0
  %v1534 = vadd.f32 %v1457, %v1533
  %v1535 = vpop.f32.mrb[0].mxu0
  %1536 = vmatprep.mubr.f32.mxu0 0.0
  %1537 = vmatmul.mubr.f32.gmra.mrb[0].mxu0 %v1462
  %v1538 = vpop.f32.mrb[0].mxu0
  %v1539 = vadd.f32 %v1457, %v1538
  %v1540 = vpop.f32.mrb[0].mxu0
  %1541 = vmatprep.mubr.f32.mxu0 0.0
  %1542 = vmatmul.mubr.f32.gmra.mrb[0].mxu0 %v1465
  %v1543 = vpop.f32.mrb[0].mxu0
  %v1544 = vadd.f32 %v1457, %v1543
  %v1545 = vpop.f32.mrb[0].mxu0
  %1546 = vdwg.mxu0
  %v1547 = vmul.f32 %v1534, 0.5
  %v1548 = vmul.f32 %v1539, 0.5
  %v1549 = vmul.f32 %v1544, 0.5
  %v1550 = vmul.f32 %v1534, 0.70710677
  %v1551 = vmul.f32 %v1539, 0.70710677
  %v1552 = vmul.f32 %v1544, 0.70710677
  %vm1553 = vcmp.lt.f32.partialorder %v1550, 0.0
  %vm1554 = vcmp.lt.f32.partialorder %v1551, 0.0
  %vm1555 = vcmp.lt.f32.partialorder %v1552, 0.0
  %v1556 = vsel %vm1553, -1.0, 1.0
  %v1557 = vsel %vm1554, -1.0, 1.0
  %v1558 = vsel %vm1555, -1.0, 1.0
  %v1559 = vand.u32 2147483647, %v1550
  %v1560 = vand.u32 2147483647, %v1551
  %v1561 = vand.u32 2147483647, %v1552
  %v1562 = vmul.f32 %v1559, 0.3275911
  %v1563 = vmul.f32 %v1560, 0.3275911
  %v1564 = vmul.f32 %v1561, 0.3275911
  %v1565 = vadd.f32 %v1562, 1.0
  %v1566 = vadd.f32 %v1563, 1.0
  %v1567 = vadd.f32 %v1564, 1.0
  %v1568 = vrcp.pop %v1565
  %v1569 = vmul.f32 1.0, %v1568
  %v1570 = vrcp.pop %v1566
  %v1571 = vmul.f32 1.0, %v1570
  %v1572 = vrcp.pop %v1567
  %v1573 = vmul.f32 1.0, %v1572
  %v1574 = vmul.f32 %v1569, 1.0614054
  %v1575 = vmul.f32 %v1571, 1.0614054
  %v1576 = vmul.f32 %v1573, 1.0614054
  %v1577 = vadd.f32 %v1574, -1.4531521
  %v1578 = vadd.f32 %v1575, -1.4531521
  %v1579 = vadd.f32 %v1576, -1.4531521
  %v1580 = vmul.f32 %v1577, %v1569
  %v1581 = vmul.f32 %v1578, %v1571
  %v1582 = vmul.f32 %v1579, %v1573
  %v1583 = vadd.f32 %v1580, 1.4214138
  %v1584 = vadd.f32 %v1581, 1.4214138
  %v1585 = vadd.f32 %v1582, 1.4214138
  %v1586 = vmul.f32 %v1583, %v1569
  %v1587 = vmul.f32 %v1584, %v1571
  %v1588 = vmul.f32 %v1585, %v1573
  %v1589 = vadd.f32 %v1586, -0.28449672
  %v1590 = vadd.f32 %v1587, -0.28449672
  %v1591 = vadd.f32 %v1588, -0.28449672
  %v1592 = vmul.f32 %v1589, %v1569
  %v1593 = vmul.f32 %v1590, %v1571
  %v1594 = vmul.f32 %v1591, %v1573
  %v1595 = vadd.f32 %v1592, 0.2548296
  %v1596 = vadd.f32 %v1593, 0.2548296
  %v1597 = vadd.f32 %v1594, 0.2548296
  %v1598 = vmul.f32 %v1595, %v1569
  %v1599 = vmul.f32 %v1596, %v1571
  %v1600 = vmul.f32 %v1597, %v1573
  %v1601 = vsub.f32 0.0, %v1559
  %v1602 = vsub.f32 0.0, %v1560
  %v1603 = vsub.f32 0.0, %v1561
  %v1604 = vmul.f32 %v1601, %v1559
  %v1605 = vmul.f32 %v1602, %v1560
  %v1606 = vmul.f32 %v1603, %v1561
  %v1607 = vmul.f32 %v1604, 1.442695
  %v1608 = vpow.pop %v1607
  %v1609 = vmul.f32 %v1605, 1.442695
  %v1610 = vpow.pop %v1609
  %v1611 = vmul.f32 %v1606, 1.442695
  %v1612 = vpow.pop %v1611
  %v1613 = vmul.f32 %v1598, %v1608
  %v1614 = vmul.f32 %v1599, %v1610
  %v1615 = vmul.f32 %v1600, %v1612
  %v1616 = vsub.f32 1.0, %v1613
  %v1617 = vsub.f32 1.0, %v1614
  %v1618 = vsub.f32 1.0, %v1615
  %v1619 = vmul.f32 %v1556, %v1616
  %v1620 = vmul.f32 %v1557, %v1617
  %v1621 = vmul.f32 %v1558, %v1618
  %v1622 = vadd.f32 %v1619, 1.0
  %v1623 = vadd.f32 %v1620, 1.0
  %v1624 = vadd.f32 %v1621, 1.0
  %v1625 = vmul.f32 %v1547, %v1622
  %v1626 = vmul.f32 %v1548, %v1623
  %v1627 = vmul.f32 %v1549, %v1624
  %v1628 = vld [vmem:[%s6 + $0x140] sm:$0xff]
  %v1629 = vld [vmem:[%s6 + $0x148] sm:$0xff]
  %v1630 = vld [vmem:[%s6 + $0x150] sm:$0xff]
  %v1631 = vld [vmem:[%s6 + $0x158] sm:$0xff]
  %v1632 = vld [vmem:[%s6 + $0x160] sm:$0xff]
  %v1633 = vld [vmem:[%s6 + $0x168] sm:$0xff]
  %v1634 = vld [vmem:[%s6 + $0x170] sm:$0xff]
  %v1635 = vld [vmem:[%s6 + $0x178] sm:$0xff]
  %v1637 = vsel %vm295, %v1625, 0
  %v1640 = vsel %vm295, %v1626, 0
  %v1643 = vsel %vm295, %v1627, 0
  %1645 = vmatprep.subr.mxu0 0.0
  %1646 = vmatpush1.msra.mxu0 %v1628
  %1647 = vmatprep.subr.mxu0 0.0
  %1648 = vmatpush1.msra.mxu0 %v1629
  %1649 = vmatprep.subr.mxu0 0.0
  %1650 = vmatpush1.msra.mxu0 %v1630
  %1651 = vmatprep.subr.mxu0 0.0
  %1652 = vmatpush1.msra.mxu0 %v1631
  %1653 = vmatprep.subr.mxu0 0.0
  %1654 = vmatpush1.msra.mxu0 %v1632
  %1655 = vmatprep.subr.mxu0 0.0
  %1656 = vmatpush1.msra.mxu0 %v1633
  %1657 = vmatprep.subr.mxu0 0.0
  %1658 = vmatpush1.msra.mxu0 %v1634
  %1659 = vmatprep.subr.mxu0 0.0
  %1660 = vmatpush1.msra.mxu0 %v1635
  %1661 = vmatprep.subr.mxu0 0.0
  %1662 = vmatpush1.msra.mxu0 0.0
  %1663 = vmatprep.subr.mxu0 0.0
  %1664 = vmatpush1.msra.mxu0 0.0
  %1665 = vmatprep.subr.mxu0 0.0
  %1666 = vmatpush1.msra.mxu0 0.0
  %1667 = vmatprep.subr.mxu0 0.0
  %1668 = vmatpush1.msra.mxu0 0.0
  %1669 = vmatprep.subr.mxu0 0.0
  %1670 = vmatpush1.msra.mxu0 0.0
  %1671 = vmatprep.subr.mxu0 0.0
  %1672 = vmatpush1.msra.mxu0 0.0
  %1673 = vmatprep.subr.mxu0 0.0
  %1674 = vmatpush1.msra.mxu0 0.0
  %1675 = vmatprep.subr.mxu0 0.0
  %1676 = vmatpush1.msra.mxu0 0.0
  %1677 = vmatprep.subr.mxu0 0.0
  %1678 = vmatpush1.msra.mxu0 0.0
  %1679 = vmatprep.subr.mxu0 0.0
  %1680 = vmatpush1.msra.mxu0 0.0
  %1681 = vmatprep.subr.mxu0 0.0
  %1682 = vmatpush1.msra.mxu0 0.0
  %1683 = vmatprep.subr.mxu0 0.0
  %1684 = vmatpush1.msra.mxu0 0.0
  %1685 = vmatprep.subr.mxu0 0.0
  %1686 = vmatpush1.msra.mxu0 0.0
  %1687 = vmatprep.subr.mxu0 0.0
  %1688 = vmatpush1.msra.mxu0 0.0
  %1689 = vmatprep.subr.mxu0 0.0
  %1690 = vmatpush1.msra.mxu0 0.0
  %1691 = vmatprep.subr.mxu0 0.0
  %1692 = vmatpush1.msra.mxu0 0.0
  %1693 = vmatprep.subr.mxu0 0.0
  %1694 = vmatpush1.msra.mxu0 0.0
  %1695 = vmatprep.subr.mxu0 0.0
  %1696 = vmatpush1.msra.mxu0 0.0
  %1697 = vmatprep.subr.mxu0 0.0
  %1698 = vmatpush1.msra.mxu0 0.0
  %1699 = vmatprep.subr.mxu0 0.0
  %1700 = vmatpush1.msra.mxu0 0.0
  %1701 = vmatprep.subr.mxu0 0.0
  %1702 = vmatpush1.msra.mxu0 0.0
  %1703 = vmatprep.subr.mxu0 0.0
  %1704 = vmatpush1.msra.mxu0 0.0
  %1705 = vmatprep.subr.mxu0 0.0
  %1706 = vmatpush1.msra.mxu0 0.0
  %1707 = vmatprep.subr.mxu0 0.0
  %1708 = vmatpush1.msra.mxu0 0.0
  %1709 = vmatprep.mubr.f32.mxu0 0.0
  %1710 = vmatmul.mubr.f32.gmra.mrb[0].mxu0 %v1637
  %v1711 = vpop.f32.mrb[0].mxu0
  %v1712 = vadd.f32 0.0, %v1711
  %v1713 = vpop.f32.mrb[0].mxu0
  %1714 = vmatprep.mubr.f32.mxu0 0.0
  %1715 = vmatmul.mubr.f32.gmra.mrb[0].mxu0 %v1640
  %v1716 = vpop.f32.mrb[0].mxu0
  %v1717 = vadd.f32 0.0, %v1716
  %v1718 = vpop.f32.mrb[0].mxu0
  %1719 = vmatprep.mubr.f32.mxu0 0.0
  %1720 = vmatmul.mubr.f32.gmra.mrb[0].mxu0 %v1643
  %v1721 = vpop.f32.mrb[0].mxu0
  %v1722 = vadd.f32 0.0, %v1721
  %v1723 = vpop.f32.mrb[0].mxu0
  %1724 = vdwg.mxu0
  %v1725 = vadd.f32 %v1390, %v1712
  %v1726 = vadd.f32 %v1391, %v1717
  %v1727 = vadd.f32 %v1392, %v1722
  %v1728 = vlaneseq
  %v1729 = vshrl.u32 %v1728, 7
  %v1730 = vsub.s32 0, %v1729
  %v1731 = vrot.slane %v347, %v1730
  %v1732 = vadd.f32 %v1725, %v1731
  %v1733 = vadd.f32 %v1726, %v1731
  %v1734 = vadd.f32 %v1727, %v1731
  %v1735 = vld [vmem:[%s4 + $0x9] sm:$0x1]
  %v1736 = vld [vmem:[%s4 + $0xa] sm:$0x1]
  %v1737 = vld [vmem:[%s4 + $0xb] sm:$0x1]
  %v1738 = vld [vmem:[%s4 + $0xc] sm:$0x1]
  %v1739 = vld [vmem:[%s4 + $0xd] sm:$0x1]
  %v1740 = vld [vmem:[%s4 + $0xe] sm:$0x1]
  %v1741 = vld [vmem:[%s4 + $0xf] sm:$0x1]
  %v1742 = vsel %vm295, %v1732, 0.0
  %1743 = vadd.xlane.f32.xlu0 %v1742
  %v1744 = vpop.xlane.xlu0 %1743
  %v1745 = vsel %vm295, %v1733, 0.0
  %1746 = vadd.xlane.f32.xlu0 %v1745
  %v1747 = vpop.xlane.xlu0 %1746
  %v1748 = vsel %vm295, %v1734, 0.0
  %1749 = vadd.xlane.f32.xlu0 %v1748
  %v1750 = vpop.xlane.xlu0 %1749
  %v1751 = vmul.f32 %v1744, %v357
  %v1752 = vmul.f32 %v1747, %v357
  %v1753 = vmul.f32 %v1750, %v357
  %v1754 = vsub.f32 %v1732, %v1751
  %v1755 = vsub.f32 %v1733, %v1752
  %v1756 = vsub.f32 %v1734, %v1753
  %v1757 = vmul.f32 %v1754, %v1754
  %v1758 = vmul.f32 %v1755, %v1755
  %v1759 = vmul.f32 %v1756, %v1756
  %v1760 = vsel %vm295, %v1757, 0.0
  %1761 = vadd.xlane.f32.xlu0 %v1760
  %v1762 = vpop.xlane.xlu0 %1761
  %v1763 = vsel %vm295, %v1758, 0.0
  %1764 = vadd.xlane.f32.xlu0 %v1763
  %v1765 = vpop.xlane.xlu0 %1764
  %v1766 = vsel %vm295, %v1759, 0.0
  %1767 = vadd.xlane.f32.xlu0 %v1766
  %v1768 = vpop.xlane.xlu0 %1767
  %v1769 = vmul.f32 %v1762, %v357
  %v1770 = vmul.f32 %v1765, %v357
  %v1771 = vmul.f32 %v1768, %v357
  %v1772 = vadd.f32 %v1769, 1e-05
  %v1773 = vadd.f32 %v1770, 1e-05
  %v1774 = vadd.f32 %v1771, 1e-05
  %v1775 = vrsqrt.pop %v1772
  %v1776 = vrsqrt.pop %v1773
  %v1777 = vrsqrt.pop %v1774
  %v1778 = vmul.f32 %v1754, %v1775
  %v1779 = vmul.f32 %v1755, %v1776
  %v1780 = vmul.f32 %v1756, %v1777
  %v1781 = vlaneseq
  %v1782 = vshrl.u32 %v1781, 7
  %v1783 = vsub.s32 0, %v1782
  %v1784 = vrot.slane %v1735, %v1783
  %v1785 = vmul.f32 %v1778, %v1784
  %v1786 = vmul.f32 %v1779, %v1784
  %v1787 = vmul.f32 %v1780, %v1784
  %v1788 = vlaneseq
  %v1789 = vshrl.u32 %v1788, 7
  %v1790 = vsub.s32 0, %v1789
  %v1791 = vrot.slane %v1736, %v1790
  %v1792 = vadd.f32 %v1785, %v1791
  %v1793 = vadd.f32 %v1786, %v1791
  %v1794 = vadd.f32 %v1787, %v1791
  %s1795 = scalar_lea.vmem %s5, 384
  %v1796 = vld [vmem:[%s1795] sm:$0xff]
  %v1797 = vld [vmem:[%s1795 + $0x8] sm:$0xff]
  %v1798 = vld [vmem:[%s1795 + $0x10] sm:$0xff]
  %v1799 = vld [vmem:[%s1795 + $0x18] sm:$0xff]
  %v1800 = vld [vmem:[%s1795 + $0x20] sm:$0xff]
  %v1801 = vld [vmem:[%s1795 + $0x28] sm:$0xff]
  %v1802 = vld [vmem:[%s1795 + $0x30] sm:$0xff]
  %v1803 = vld [vmem:[%s1795 + $0x38] sm:$0xff]
  %v1804 = vld [vmem:[%s1795 + $0x40] sm:$0xff]
  %v1805 = vld [vmem:[%s1795 + $0x48] sm:$0xff]
  %v1806 = vld [vmem:[%s1795 + $0x50] sm:$0xff]
  %v1807 = vld [vmem:[%s1795 + $0x58] sm:$0xff]
  %v1808 = vld [vmem:[%s1795 + $0x60] sm:$0xff]
  %v1809 = vld [vmem:[%s1795 + $0x68] sm:$0xff]
  %v1810 = vld [vmem:[%s1795 + $0x70] sm:$0xff]
  %v1811 = vld [vmem:[%s1795 + $0x78] sm:$0xff]
  %v1812 = vld [vmem:[%s1795 + $0x80] sm:$0xff]
  %v1813 = vld [vmem:[%s1795 + $0x88] sm:$0xff]
  %v1814 = vld [vmem:[%s1795 + $0x90] sm:$0xff]
  %v1815 = vld [vmem:[%s1795 + $0x98] sm:$0xff]
  %v1816 = vld [vmem:[%s1795 + $0xa0] sm:$0xff]
  %v1817 = vld [vmem:[%s1795 + $0xa8] sm:$0xff]
  %v1818 = vld [vmem:[%s1795 + $0xb0] sm:$0xff]
  %v1819 = vld [vmem:[%s1795 + $0xb8] sm:$0xff]
  %v1821 = vsel %vm295, %v1792, 0
  %v1824 = vsel %vm295, %v1793, 0
  %v1827 = vsel %vm295, %v1794, 0
  %1829 = vmatprep.subr.mxu0 %v1797
  %1830 = vmatpush1.msra.mxu0 %v1796
  %1831 = vmatprep.subr.mxu0 %v1800
  %1832 = vmatpush1.msra.mxu0 %v1799
  %1833 = vmatprep.subr.mxu0 %v1803
  %1834 = vmatpush1.msra.mxu0 %v1802
  %1835 = vmatprep.subr.mxu0 %v1806
  %1836 = vmatpush1.msra.mxu0 %v1805
  %1837 = vmatprep.subr.mxu0 %v1809
  %1838 = vmatpush1.msra.mxu0 %v1808
  %1839 = vmatprep.subr.mxu0 %v1812
  %1840 = vmatpush1.msra.mxu0 %v1811
  %1841 = vmatprep.subr.mxu0 %v1815
  %1842 = vmatpush1.msra.mxu0 %v1814
  %1843 = vmatprep.subr.mxu0 %v1818
  %1844 = vmatpush1.msra.mxu0 %v1817
  %1845 = vmatprep.subr.mxu0 0.0
  %1846 = vmatpush1.msra.mxu0 0.0
  %1847 = vmatprep.subr.mxu0 0.0
  %1848 = vmatpush1.msra.mxu0 0.0
  %1849 = vmatprep.subr.mxu0 0.0
  %1850 = vmatpush1.msra.mxu0 0.0
  %1851 = vmatprep.subr.mxu0 0.0
  %1852 = vmatpush1.msra.mxu0 0.0
  %1853 = vmatprep.subr.mxu0 0.0
  %1854 = vmatpush1.msra.mxu0 0.0
  %1855 = vmatprep.subr.mxu0 0.0
  %1856 = vmatpush1.msra.mxu0 0.0
  %1857 = vmatprep.subr.mxu0 0.0
  %1858 = vmatpush1.msra.mxu0 0.0
  %1859 = vmatprep.subr.mxu0 0.0
  %1860 = vmatpush1.msra.mxu0 0.0
  %1861 = vmatprep.subr.mxu0 0.0
  %1862 = vmatpush1.msra.mxu0 0.0
  %1863 = vmatprep.subr.mxu0 0.0
  %1864 = vmatpush1.msra.mxu0 0.0
  %1865 = vmatprep.subr.mxu0 0.0
  %1866 = vmatpush1.msra.mxu0 0.0
  %1867 = vmatprep.subr.mxu0 0.0
  %1868 = vmatpush1.msra.mxu0 0.0
  %1869 = vmatprep.subr.mxu0 0.0
  %1870 = vmatpush1.msra.mxu0 0.0
  %1871 = vmatprep.subr.mxu0 0.0
  %1872 = vmatpush1.msra.mxu0 0.0
  %1873 = vmatprep.subr.mxu0 0.0
  %1874 = vmatpush1.msra.mxu0 0.0
  %1875 = vmatprep.subr.mxu0 0.0
  %1876 = vmatpush1.msra.mxu0 0.0
  %1877 = vmatprep.subr.mxu0 0.0
  %1878 = vmatpush1.msra.mxu0 0.0
  %1879 = vmatprep.subr.mxu0 0.0
  %1880 = vmatpush1.msra.mxu0 0.0
  %1881 = vmatprep.subr.mxu0 0.0
  %1882 = vmatpush1.msra.mxu0 0.0
  %1883 = vmatprep.subr.mxu0 0.0
  %1884 = vmatpush1.msra.mxu0 0.0
  %1885 = vmatprep.subr.mxu0 0.0
  %1886 = vmatpush1.msra.mxu0 0.0
  %1887 = vmatprep.subr.mxu0 0.0
  %1888 = vmatpush1.msra.mxu0 0.0
  %1889 = vmatprep.subr.mxu0 0.0
  %1890 = vmatpush1.msra.mxu0 0.0
  %1891 = vmatprep.subr.mxu0 0.0
  %1892 = vmatpush1.msra.mxu0 0.0
  %1893 = vmatprep.mubr.f32.mxu0 0.0
  %1894 = vmatmul.mubr.f32.gmra.mrb[0].mxu0 %v1821
  %v1895 = vpop.f32.mrb[0].mxu0
  %v1896 = vadd.f32 0.0, %v1895
  %v1897 = vpop.f32.mrb[0].mxu0
  %v1898 = vadd.f32 0.0, %v1897
  %1899 = vmatprep.mubr.f32.mxu0 0.0
  %1900 = vmatmul.mubr.f32.gmra.mrb[0].mxu0 %v1824
  %v1901 = vpop.f32.mrb[0].mxu0
  %v1902 = vadd.f32 0.0, %v1901
  %v1903 = vpop.f32.mrb[0].mxu0
  %v1904 = vadd.f32 0.0, %v1903
  %1905 = vmatprep.mubr.f32.mxu0 0.0
  %1906 = vmatmul.mubr.f32.gmra.mrb[0].mxu0 %v1827
  %v1907 = vpop.f32.mrb[0].mxu0
  %v1908 = vadd.f32 0.0, %v1907
  %v1909 = vpop.f32.mrb[0].mxu0
  %v1910 = vadd.f32 0.0, %v1909
  %1911 = vdwg.mxu0
  %1912 = vmatprep.subr.mxu0 0.0
  %1913 = vmatpush1.msra.mxu0 %v1798
  %1914 = vmatprep.subr.mxu0 0.0
  %1915 = vmatpush1.msra.mxu0 %v1801
  %1916 = vmatprep.subr.mxu0 0.0
  %1917 = vmatpush1.msra.mxu0 %v1804
  %1918 = vmatprep.subr.mxu0 0.0
  %1919 = vmatpush1.msra.mxu0 %v1807
  %1920 = vmatprep.subr.mxu0 0.0
  %1921 = vmatpush1.msra.mxu0 %v1810
  %1922 = vmatprep.subr.mxu0 0.0
  %1923 = vmatpush1.msra.mxu0 %v1813
  %1924 = vmatprep.subr.mxu0 0.0
  %1925 = vmatpush1.msra.mxu0 %v1816
  %1926 = vmatprep.subr.mxu0 0.0
  %1927 = vmatpush1.msra.mxu0 %v1819
  %1928 = vmatprep.subr.mxu0 0.0
  %1929 = vmatpush1.msra.mxu0 0.0
  %1930 = vmatprep.subr.mxu0 0.0
  %1931 = vmatpush1.msra.mxu0 0.0
  %1932 = vmatprep.subr.mxu0 0.0
  %1933 = vmatpush1.msra.mxu0 0.0
  %1934 = vmatprep.subr.mxu0 0.0
  %1935 = vmatpush1.msra.mxu0 0.0
  %1936 = vmatprep.subr.mxu0 0.0
  %1937 = vmatpush1.msra.mxu0 0.0
  %1938 = vmatprep.subr.mxu0 0.0
  %1939 = vmatpush1.msra.mxu0 0.0
  %1940 = vmatprep.subr.mxu0 0.0
  %1941 = vmatpush1.msra.mxu0 0.0
  %1942 = vmatprep.subr.mxu0 0.0
  %1943 = vmatpush1.msra.mxu0 0.0
  %1944 = vmatprep.subr.mxu0 0.0
  %1945 = vmatpush1.msra.mxu0 0.0
  %1946 = vmatprep.subr.mxu0 0.0
  %1947 = vmatpush1.msra.mxu0 0.0
  %1948 = vmatprep.subr.mxu0 0.0
  %1949 = vmatpush1.msra.mxu0 0.0
  %1950 = vmatprep.subr.mxu0 0.0
  %1951 = vmatpush1.msra.mxu0 0.0
  %1952 = vmatprep.subr.mxu0 0.0
  %1953 = vmatpush1.msra.mxu0 0.0
  %1954 = vmatprep.subr.mxu0 0.0
  %1955 = vmatpush1.msra.mxu0 0.0
  %1956 = vmatprep.subr.mxu0 0.0
  %1957 = vmatpush1.msra.mxu0 0.0
  %1958 = vmatprep.subr.mxu0 0.0
  %1959 = vmatpush1.msra.mxu0 0.0
  %1960 = vmatprep.subr.mxu0 0.0
  %1961 = vmatpush1.msra.mxu0 0.0
  %1962 = vmatprep.subr.mxu0 0.0
  %1963 = vmatpush1.msra.mxu0 0.0
  %1964 = vmatprep.subr.mxu0 0.0
  %1965 = vmatpush1.msra.mxu0 0.0
  %1966 = vmatprep.subr.mxu0 0.0
  %1967 = vmatpush1.msra.mxu0 0.0
  %1968 = vmatprep.subr.mxu0 0.0
  %1969 = vmatpush1.msra.mxu0 0.0
  %1970 = vmatprep.subr.mxu0 0.0
  %1971 = vmatpush1.msra.mxu0 0.0
  %1972 = vmatprep.subr.mxu0 0.0
  %1973 = vmatpush1.msra.mxu0 0.0
  %1974 = vmatprep.subr.mxu0 0.0
  %1975 = vmatpush1.msra.mxu0 0.0
  %1976 = vmatprep.mubr.f32.mxu0 0.0
  %1977 = vmatmul.mubr.f32.gmra.mrb[0].mxu0 %v1821
  %v1978 = vpop.f32.mrb[0].mxu0
  %v1979 = vadd.f32 0.0, %v1978
  %v1980 = vpop.f32.mrb[0].mxu0
  %1981 = vmatprep.mubr.f32.mxu0 0.0
  %1982 = vmatmul.mubr.f32.gmra.mrb[0].mxu0 %v1824
  %v1983 = vpop.f32.mrb[0].mxu0
  %v1984 = vadd.f32 0.0, %v1983
  %v1985 = vpop.f32.mrb[0].mxu0
  %1986 = vmatprep.mubr.f32.mxu0 0.0
  %1987 = vmatmul.mubr.f32.gmra.mrb[0].mxu0 %v1827
  %v1988 = vpop.f32.mrb[0].mxu0
  %v1989 = vadd.f32 0.0, %v1988
  %v1990 = vpop.f32.mrb[0].mxu0
  %1991 = vdwg.mxu0
  %1992 = vmatprep.subr.mxu0 0.0
  %1993 = vmatpush1.xpose.msra.mxu0 %v1898
  %1994 = vmatprep.subr.mxu0 0.0
  %1995 = vmatpush1.xpose.msra.mxu0 %v1904
  %1996 = vmatprep.subr.mxu0 0.0
  %1997 = vmatpush1.xpose.msra.mxu0 %v1910
  %1998 = vmatprep.subr.mxu0 0.0
  %1999 = vmatpush1.xpose.msra.mxu0 0.0
  %2000 = vmatprep.subr.mxu0 0.0
  %2001 = vmatpush1.xpose.msra.mxu0 0.0
  %2002 = vmatprep.subr.mxu0 0.0
  %2003 = vmatpush1.xpose.msra.mxu0 0.0
  %2004 = vmatprep.subr.mxu0 0.0
  %2005 = vmatpush1.xpose.msra.mxu0 0.0
  %2006 = vmatprep.subr.mxu0 0.0
  %2007 = vmatpush1.xpose.msra.mxu0 0.0
  %2008 = vmatprep.subr.mxu0 0.0
  %2009 = vmatpush1.xpose.msra.mxu0 0.0
  %2010 = vmatprep.subr.mxu0 0.0
  %2011 = vmatpush1.xpose.msra.mxu0 0.0
  %2012 = vmatprep.subr.mxu0 0.0
  %2013 = vmatpush1.xpose.msra.mxu0 0.0
  %2014 = vmatprep.subr.mxu0 0.0
  %2015 = vmatpush1.xpose.msra.mxu0 0.0
  %2016 = vmatprep.subr.mxu0 0.0
  %2017 = vmatpush1.xpose.msra.mxu0 0.0
  %2018 = vmatprep.subr.mxu0 0.0
  %2019 = vmatpush1.xpose.msra.mxu0 0.0
  %2020 = vmatprep.subr.mxu0 0.0
  %2021 = vmatpush1.xpose.msra.mxu0 0.0
  %2022 = vmatprep.subr.mxu0 0.0
  %2023 = vmatpush1.xpose.msra.mxu0 0.0
  %2024 = vmatprep.subr.mxu0 0.0
  %2025 = vmatpush1.xpose.msra.mxu0 0.0
  %2026 = vmatprep.subr.mxu0 0.0
  %2027 = vmatpush1.xpose.msra.mxu0 0.0
  %2028 = vmatprep.subr.mxu0 0.0
  %2029 = vmatpush1.xpose.msra.mxu0 0.0
  %2030 = vmatprep.subr.mxu0 0.0
  %2031 = vmatpush1.xpose.msra.mxu0 0.0
  %2032 = vmatprep.subr.mxu0 0.0
  %2033 = vmatpush1.xpose.msra.mxu0 0.0
  %2034 = vmatprep.subr.mxu0 0.0
  %2035 = vmatpush1.xpose.msra.mxu0 0.0
  %2036 = vmatprep.subr.mxu0 0.0
  %2037 = vmatpush1.xpose.msra.mxu0 0.0
  %2038 = vmatprep.subr.mxu0 0.0
  %2039 = vmatpush1.xpose.msra.mxu0 0.0
  %2040 = vmatprep.subr.mxu0 0.0
  %2041 = vmatpush1.xpose.msra.mxu0 0.0
  %2042 = vmatprep.subr.mxu0 0.0
  %2043 = vmatpush1.xpose.msra.mxu0 0.0
  %2044 = vmatprep.subr.mxu0 0.0
  %2045 = vmatpush1.xpose.msra.mxu0 0.0
  %2046 = vmatprep.subr.mxu0 0.0
  %2047 = vmatpush1.xpose.msra.mxu0 0.0
  %2048 = vmatprep.subr.mxu0 0.0
  %2049 = vmatpush1.xpose.msra.mxu0 0.0
  %2050 = vmatprep.subr.mxu0 0.0
  %2051 = vmatpush1.xpose.msra.mxu0 0.0
  %2052 = vmatprep.subr.mxu0 0.0
  %2053 = vmatpush1.xpose.msra.mxu0 0.0
  %2054 = vmatprep.subr.mxu0 0.0
  %2055 = vmatpush1.xpose.msra.mxu0 0.0
  %2056 = vmatprep.mubr.f32.mxu0 0.0
  %2057 = vmatmul.mubr.f32.gmra.mrb[0].mxu0 %v1896
  %v2058 = vpop.f32.mrb[0].mxu0
  %v2059 = vadd.f32 %v338, %v2058
  %v2060 = vpop.f32.mrb[0].mxu0
  %2061 = vmatprep.mubr.f32.mxu0 0.0
  %2062 = vmatmul.mubr.f32.gmra.mrb[0].mxu0 %v1902
  %v2063 = vpop.f32.mrb[0].mxu0
  %v2064 = vadd.f32 %v339, %v2063
  %v2065 = vpop.f32.mrb[0].mxu0
  %2066 = vmatprep.mubr.f32.mxu0 0.0
  %2067 = vmatmul.mubr.f32.gmra.mrb[0].mxu0 %v1908
  %v2068 = vpop.f32.mrb[0].mxu0
  %v2069 = vadd.f32 %v340, %v2068
  %v2070 = vpop.f32.mrb[0].mxu0
  %2071 = vdwg.mxu0
  %v2072 = vsel %vm678, %v2059, -inf
  %2073 = vmax.xlane.f32.xlu0 %v2072
  %v2074 = vpop.xlane.xlu0 %2073
  %v2075 = vsel %vm678, %v2064, -inf
  %2076 = vmax.xlane.f32.xlu0 %v2075
  %v2077 = vpop.xlane.xlu0 %2076
  %v2078 = vsel %vm678, %v2069, -inf
  %2079 = vmax.xlane.f32.xlu0 %v2078
  %v2080 = vpop.xlane.xlu0 %2079
  %v2081 = vsub.f32 %v2059, %v2074
  %v2082 = vsub.f32 %v2064, %v2077
  %v2083 = vsub.f32 %v2069, %v2080
  %v2084 = vmul.f32 %v2081, 1.442695
  %v2085 = vpow.pop %v2084
  %v2086 = vmul.f32 %v2082, 1.442695
  %v2087 = vpow.pop %v2086
  %v2088 = vmul.f32 %v2083, 1.442695
  %v2089 = vpow.pop %v2088
  %v2090 = vsel %vm678, %v2085, 0.0
  %2091 = vadd.xlane.f32.xlu0 %v2090
  %v2092 = vpop.xlane.xlu0 %2091
  %v2093 = vsel %vm678, %v2087, 0.0
  %2094 = vadd.xlane.f32.xlu0 %v2093
  %v2095 = vpop.xlane.xlu0 %2094
  %v2096 = vsel %vm678, %v2089, 0.0
  %2097 = vadd.xlane.f32.xlu0 %v2096
  %v2098 = vpop.xlane.xlu0 %2097
  %v2099 = vrcp.pop %v2092
  %v2100 = vrcp.pop %v2095
  %v2101 = vrcp.pop %v2098
  %v2102 = vmul.f32 %v2085, %v2099
  %v2103 = vmul.f32 %v2087, %v2100
  %v2104 = vmul.f32 %v2089, %v2101
  %v2106 = vsel %vm678, %v2102, 0
  %v2109 = vsel %vm678, %v2103, 0
  %v2112 = vsel %vm678, %v2104, 0
  %2114 = vmatprep.subr.mxu0 0.0
  %2115 = vmatpush1.msra.mxu0 %v1979
  %2116 = vmatprep.subr.mxu0 0.0
  %2117 = vmatpush1.msra.mxu0 %v1984
  %2118 = vmatprep.subr.mxu0 0.0
  %2119 = vmatpush1.msra.mxu0 %v1989
  %2120 = vmatprep.subr.mxu0 0.0
  %2121 = vmatpush1.msra.mxu0 0.0
  %2122 = vmatprep.subr.mxu0 0.0
  %2123 = vmatpush1.msra.mxu0 0.0
  %2124 = vmatprep.subr.mxu0 0.0
  %2125 = vmatpush1.msra.mxu0 0.0
  %2126 = vmatprep.subr.mxu0 0.0
  %2127 = vmatpush1.msra.mxu0 0.0
  %2128 = vmatprep.subr.mxu0 0.0
  %2129 = vmatpush1.msra.mxu0 0.0
  %2130 = vmatprep.subr.mxu0 0.0
  %2131 = vmatpush1.msra.mxu0 0.0
  %2132 = vmatprep.subr.mxu0 0.0
  %2133 = vmatpush1.msra.mxu0 0.0
  %2134 = vmatprep.subr.mxu0 0.0
  %2135 = vmatpush1.msra.mxu0 0.0
  %2136 = vmatprep.subr.mxu0 0.0
  %2137 = vmatpush1.msra.mxu0 0.0
  %2138 = vmatprep.subr.mxu0 0.0
  %2139 = vmatpush1.msra.mxu0 0.0
  %2140 = vmatprep.subr.mxu0 0.0
  %2141 = vmatpush1.msra.mxu0 0.0
  %2142 = vmatprep.subr.mxu0 0.0
  %2143 = vmatpush1.msra.mxu0 0.0
  %2144 = vmatprep.subr.mxu0 0.0
  %2145 = vmatpush1.msra.mxu0 0.0
  %2146 = vmatprep.subr.mxu0 0.0
  %2147 = vmatpush1.msra.mxu0 0.0
  %2148 = vmatprep.subr.mxu0 0.0
  %2149 = vmatpush1.msra.mxu0 0.0
  %2150 = vmatprep.subr.mxu0 0.0
  %2151 = vmatpush1.msra.mxu0 0.0
  %2152 = vmatprep.subr.mxu0 0.0
  %2153 = vmatpush1.msra.mxu0 0.0
  %2154 = vmatprep.subr.mxu0 0.0
  %2155 = vmatpush1.msra.mxu0 0.0
  %2156 = vmatprep.subr.mxu0 0.0
  %2157 = vmatpush1.msra.mxu0 0.0
  %2158 = vmatprep.subr.mxu0 0.0
  %2159 = vmatpush1.msra.mxu0 0.0
  %2160 = vmatprep.subr.mxu0 0.0
  %2161 = vmatpush1.msra.mxu0 0.0
  %2162 = vmatprep.subr.mxu0 0.0
  %2163 = vmatpush1.msra.mxu0 0.0
  %2164 = vmatprep.subr.mxu0 0.0
  %2165 = vmatpush1.msra.mxu0 0.0
  %2166 = vmatprep.subr.mxu0 0.0
  %2167 = vmatpush1.msra.mxu0 0.0
  %2168 = vmatprep.subr.mxu0 0.0
  %2169 = vmatpush1.msra.mxu0 0.0
  %2170 = vmatprep.subr.mxu0 0.0
  %2171 = vmatpush1.msra.mxu0 0.0
  %2172 = vmatprep.subr.mxu0 0.0
  %2173 = vmatpush1.msra.mxu0 0.0
  %2174 = vmatprep.subr.mxu0 0.0
  %2175 = vmatpush1.msra.mxu0 0.0
  %2176 = vmatprep.subr.mxu0 0.0
  %2177 = vmatpush1.msra.mxu0 0.0
  %2178 = vmatprep.mubr.f32.mxu0 0.0
  %2179 = vmatmul.mubr.f32.gmra.mrb[0].mxu0 %v2106
  %v2180 = vpop.f32.mrb[0].mxu0
  %v2181 = vadd.f32 0.0, %v2180
  %v2182 = vpop.f32.mrb[0].mxu0
  %2183 = vmatprep.mubr.f32.mxu0 0.0
  %2184 = vmatmul.mubr.f32.gmra.mrb[0].mxu0 %v2109
  %v2185 = vpop.f32.mrb[0].mxu0
  %v2186 = vadd.f32 0.0, %v2185
  %v2187 = vpop.f32.mrb[0].mxu0
  %2188 = vmatprep.mubr.f32.mxu0 0.0
  %2189 = vmatmul.mubr.f32.gmra.mrb[0].mxu0 %v2112
  %v2190 = vpop.f32.mrb[0].mxu0
  %v2191 = vadd.f32 0.0, %v2190
  %v2192 = vpop.f32.mrb[0].mxu0
  %2193 = vdwg.mxu0
  %v2194 = vld [vmem:[%s6 + $0x180] sm:$0xff]
  %v2195 = vld [vmem:[%s6 + $0x188] sm:$0xff]
  %v2196 = vld [vmem:[%s6 + $0x190] sm:$0xff]
  %v2197 = vld [vmem:[%s6 + $0x198] sm:$0xff]
  %v2198 = vld [vmem:[%s6 + $0x1a0] sm:$0xff]
  %v2199 = vld [vmem:[%s6 + $0x1a8] sm:$0xff]
  %v2200 = vld [vmem:[%s6 + $0x1b0] sm:$0xff]
  %v2201 = vld [vmem:[%s6 + $0x1b8] sm:$0xff]
  %v2202 = vld [vmem:[%s6 + $0x1c0] sm:$0xff]
  %v2203 = vld [vmem:[%s6 + $0x1c8] sm:$0xff]
  %v2204 = vld [vmem:[%s6 + $0x1d0] sm:$0xff]
  %v2205 = vld [vmem:[%s6 + $0x1d8] sm:$0xff]
  %v2206 = vld [vmem:[%s6 + $0x1e0] sm:$0xff]
  %v2207 = vld [vmem:[%s6 + $0x1e8] sm:$0xff]
  %v2208 = vld [vmem:[%s6 + $0x1f0] sm:$0xff]
  %v2209 = vld [vmem:[%s6 + $0x1f8] sm:$0xff]
  %s2210 = scalar_lea.vmem %s5, 576
  %v2211 = vld [vmem:[%s2210] sm:$0xff]
  %v2212 = vld [vmem:[%s2210 + $0x8] sm:$0xff]
  %v2213 = vld [vmem:[%s2210 + $0x10] sm:$0xff]
  %v2214 = vld [vmem:[%s2210 + $0x18] sm:$0xff]
  %v2215 = vld [vmem:[%s2210 + $0x20] sm:$0xff]
  %v2216 = vld [vmem:[%s2210 + $0x28] sm:$0xff]
  %v2217 = vld [vmem:[%s2210 + $0x30] sm:$0xff]
  %v2218 = vld [vmem:[%s2210 + $0x38] sm:$0xff]
  %v2219 = vld [vmem:[%s2210 + $0x40] sm:$0xff]
  %v2220 = vld [vmem:[%s2210 + $0x48] sm:$0xff]
  %v2221 = vld [vmem:[%s2210 + $0x50] sm:$0xff]
  %v2222 = vld [vmem:[%s2210 + $0x58] sm:$0xff]
  %v2223 = vld [vmem:[%s2210 + $0x60] sm:$0xff]
  %v2224 = vld [vmem:[%s2210 + $0x68] sm:$0xff]
  %v2225 = vld [vmem:[%s2210 + $0x70] sm:$0xff]
  %v2226 = vld [vmem:[%s2210 + $0x78] sm:$0xff]
  %v2227 = vld [vmem:[%s2210 + $0x80] sm:$0xff]
  %v2228 = vld [vmem:[%s2210 + $0x88] sm:$0xff]
  %v2229 = vld [vmem:[%s2210 + $0x90] sm:$0xff]
  %v2230 = vld [vmem:[%s2210 + $0x98] sm:$0xff]
  %v2231 = vld [vmem:[%s2210 + $0xa0] sm:$0xff]
  %v2232 = vld [vmem:[%s2210 + $0xa8] sm:$0xff]
  %v2233 = vld [vmem:[%s2210 + $0xb0] sm:$0xff]
  %v2234 = vld [vmem:[%s2210 + $0xb8] sm:$0xff]
  %2235 = vmatprep.subr.mxu0 %v2212
  %2236 = vmatpush1.msra.mxu0 %v2211
  %2237 = vmatprep.subr.mxu0 %v2215
  %2238 = vmatpush1.msra.mxu0 %v2214
  %2239 = vmatprep.subr.mxu0 %v2218
  %2240 = vmatpush1.msra.mxu0 %v2217
  %2241 = vmatprep.subr.mxu0 %v2221
  %2242 = vmatpush1.msra.mxu0 %v2220
  %2243 = vmatprep.subr.mxu0 %v2224
  %2244 = vmatpush1.msra.mxu0 %v2223
  %2245 = vmatprep.subr.mxu0 %v2227
  %2246 = vmatpush1.msra.mxu0 %v2226
  %2247 = vmatprep.subr.mxu0 %v2230
  %2248 = vmatpush1.msra.mxu0 %v2229
  %2249 = vmatprep.subr.mxu0 %v2233
  %2250 = vmatpush1.msra.mxu0 %v2232
  %2251 = vmatprep.subr.mxu0 0.0
  %2252 = vmatpush1.msra.mxu0 0.0
  %2253 = vmatprep.subr.mxu0 0.0
  %2254 = vmatpush1.msra.mxu0 0.0
  %2255 = vmatprep.subr.mxu0 0.0
  %2256 = vmatpush1.msra.mxu0 0.0
  %2257 = vmatprep.subr.mxu0 0.0
  %2258 = vmatpush1.msra.mxu0 0.0
  %2259 = vmatprep.subr.mxu0 0.0
  %2260 = vmatpush1.msra.mxu0 0.0
  %2261 = vmatprep.subr.mxu0 0.0
  %2262 = vmatpush1.msra.mxu0 0.0
  %2263 = vmatprep.subr.mxu0 0.0
  %2264 = vmatpush1.msra.mxu0 0.0
  %2265 = vmatprep.subr.mxu0 0.0
  %2266 = vmatpush1.msra.mxu0 0.0
  %2267 = vmatprep.subr.mxu0 0.0
  %2268 = vmatpush1.msra.mxu0 0.0
  %2269 = vmatprep.subr.mxu0 0.0
  %2270 = vmatpush1.msra.mxu0 0.0
  %2271 = vmatprep.subr.mxu0 0.0
  %2272 = vmatpush1.msra.mxu0 0.0
  %2273 = vmatprep.subr.mxu0 0.0
  %2274 = vmatpush1.msra.mxu0 0.0
  %2275 = vmatprep.subr.mxu0 0.0
  %2276 = vmatpush1.msra.mxu0 0.0
  %2277 = vmatprep.subr.mxu0 0.0
  %2278 = vmatpush1.msra.mxu0 0.0
  %2279 = vmatprep.subr.mxu0 0.0
  %2280 = vmatpush1.msra.mxu0 0.0
  %2281 = vmatprep.subr.mxu0 0.0
  %2282 = vmatpush1.msra.mxu0 0.0
  %2283 = vmatprep.subr.mxu0 0.0
  %2284 = vmatpush1.msra.mxu0 0.0
  %2285 = vmatprep.subr.mxu0 0.0
  %2286 = vmatpush1.msra.mxu0 0.0
  %2287 = vmatprep.subr.mxu0 0.0
  %2288 = vmatpush1.msra.mxu0 0.0
  %2289 = vmatprep.subr.mxu0 0.0
  %2290 = vmatpush1.msra.mxu0 0.0
  %2291 = vmatprep.subr.mxu0 0.0
  %2292 = vmatpush1.msra.mxu0 0.0
  %2293 = vmatprep.subr.mxu0 0.0
  %2294 = vmatpush1.msra.mxu0 0.0
  %2295 = vmatprep.subr.mxu0 0.0
  %2296 = vmatpush1.msra.mxu0 0.0
  %2297 = vmatprep.subr.mxu0 0.0
  %2298 = vmatpush1.msra.mxu0 0.0
  %2299 = vmatprep.mubr.f32.mxu0 0.0
  %2300 = vmatmul.mubr.f32.gmra.mrb[0].mxu0 %v1821
  %v2301 = vpop.f32.mrb[0].mxu0
  %v2302 = vadd.f32 0.0, %v2301
  %v2303 = vpop.f32.mrb[0].mxu0
  %v2304 = vadd.f32 0.0, %v2303
  %2305 = vmatprep.mubr.f32.mxu0 0.0
  %2306 = vmatmul.mubr.f32.gmra.mrb[0].mxu0 %v1824
  %v2307 = vpop.f32.mrb[0].mxu0
  %v2308 = vadd.f32 0.0, %v2307
  %v2309 = vpop.f32.mrb[0].mxu0
  %v2310 = vadd.f32 0.0, %v2309
  %2311 = vmatprep.mubr.f32.mxu0 0.0
  %2312 = vmatmul.mubr.f32.gmra.mrb[0].mxu0 %v1827
  %v2313 = vpop.f32.mrb[0].mxu0
  %v2314 = vadd.f32 0.0, %v2313
  %v2315 = vpop.f32.mrb[0].mxu0
  %v2316 = vadd.f32 0.0, %v2315
  %2317 = vdwg.mxu0
  %2318 = vmatprep.subr.mxu0 0.0
  %2319 = vmatpush1.msra.mxu0 %v2213
  %2320 = vmatprep.subr.mxu0 0.0
  %2321 = vmatpush1.msra.mxu0 %v2216
  %2322 = vmatprep.subr.mxu0 0.0
  %2323 = vmatpush1.msra.mxu0 %v2219
  %2324 = vmatprep.subr.mxu0 0.0
  %2325 = vmatpush1.msra.mxu0 %v2222
  %2326 = vmatprep.subr.mxu0 0.0
  %2327 = vmatpush1.msra.mxu0 %v2225
  %2328 = vmatprep.subr.mxu0 0.0
  %2329 = vmatpush1.msra.mxu0 %v2228
  %2330 = vmatprep.subr.mxu0 0.0
  %2331 = vmatpush1.msra.mxu0 %v2231
  %2332 = vmatprep.subr.mxu0 0.0
  %2333 = vmatpush1.msra.mxu0 %v2234
  %2334 = vmatprep.subr.mxu0 0.0
  %2335 = vmatpush1.msra.mxu0 0.0
  %2336 = vmatprep.subr.mxu0 0.0
  %2337 = vmatpush1.msra.mxu0 0.0
  %2338 = vmatprep.subr.mxu0 0.0
  %2339 = vmatpush1.msra.mxu0 0.0
  %2340 = vmatprep.subr.mxu0 0.0
  %2341 = vmatpush1.msra.mxu0 0.0
  %2342 = vmatprep.subr.mxu0 0.0
  %2343 = vmatpush1.msra.mxu0 0.0
  %2344 = vmatprep.subr.mxu0 0.0
  %2345 = vmatpush1.msra.mxu0 0.0
  %2346 = vmatprep.subr.mxu0 0.0
  %2347 = vmatpush1.msra.mxu0 0.0
  %2348 = vmatprep.subr.mxu0 0.0
  %2349 = vmatpush1.msra.mxu0 0.0
  %2350 = vmatprep.subr.mxu0 0.0
  %2351 = vmatpush1.msra.mxu0 0.0
  %2352 = vmatprep.subr.mxu0 0.0
  %2353 = vmatpush1.msra.mxu0 0.0
  %2354 = vmatprep.subr.mxu0 0.0
  %2355 = vmatpush1.msra.mxu0 0.0
  %2356 = vmatprep.subr.mxu0 0.0
  %2357 = vmatpush1.msra.mxu0 0.0
  %2358 = vmatprep.subr.mxu0 0.0
  %2359 = vmatpush1.msra.mxu0 0.0
  %2360 = vmatprep.subr.mxu0 0.0
  %2361 = vmatpush1.msra.mxu0 0.0
  %2362 = vmatprep.subr.mxu0 0.0
  %2363 = vmatpush1.msra.mxu0 0.0
  %2364 = vmatprep.subr.mxu0 0.0
  %2365 = vmatpush1.msra.mxu0 0.0
  %2366 = vmatprep.subr.mxu0 0.0
  %2367 = vmatpush1.msra.mxu0 0.0
  %2368 = vmatprep.subr.mxu0 0.0
  %2369 = vmatpush1.msra.mxu0 0.0
  %2370 = vmatprep.subr.mxu0 0.0
  %2371 = vmatpush1.msra.mxu0 0.0
  %2372 = vmatprep.subr.mxu0 0.0
  %2373 = vmatpush1.msra.mxu0 0.0
  %2374 = vmatprep.subr.mxu0 0.0
  %2375 = vmatpush1.msra.mxu0 0.0
  %2376 = vmatprep.subr.mxu0 0.0
  %2377 = vmatpush1.msra.mxu0 0.0
  %2378 = vmatprep.subr.mxu0 0.0
  %2379 = vmatpush1.msra.mxu0 0.0
  %2380 = vmatprep.subr.mxu0 0.0
  %2381 = vmatpush1.msra.mxu0 0.0
  %2382 = vmatprep.mubr.f32.mxu0 0.0
  %2383 = vmatmul.mubr.f32.gmra.mrb[0].mxu0 %v1821
  %v2384 = vpop.f32.mrb[0].mxu0
  %v2385 = vadd.f32 0.0, %v2384
  %v2386 = vpop.f32.mrb[0].mxu0
  %2387 = vmatprep.mubr.f32.mxu0 0.0
  %2388 = vmatmul.mubr.f32.gmra.mrb[0].mxu0 %v1824
  %v2389 = vpop.f32.mrb[0].mxu0
  %v2390 = vadd.f32 0.0, %v2389
  %v2391 = vpop.f32.mrb[0].mxu0
  %2392 = vmatprep.mubr.f32.mxu0 0.0
  %2393 = vmatmul.mubr.f32.gmra.mrb[0].mxu0 %v1827
  %v2394 = vpop.f32.mrb[0].mxu0
  %v2395 = vadd.f32 0.0, %v2394
  %v2396 = vpop.f32.mrb[0].mxu0
  %2397 = vdwg.mxu0
  %2398 = vmatprep.subr.mxu0 0.0
  %2399 = vmatpush1.xpose.msra.mxu0 %v2304
  %2400 = vmatprep.subr.mxu0 0.0
  %2401 = vmatpush1.xpose.msra.mxu0 %v2310
  %2402 = vmatprep.subr.mxu0 0.0
  %2403 = vmatpush1.xpose.msra.mxu0 %v2316
  %2404 = vmatprep.subr.mxu0 0.0
  %2405 = vmatpush1.xpose.msra.mxu0 0.0
  %2406 = vmatprep.subr.mxu0 0.0
  %2407 = vmatpush1.xpose.msra.mxu0 0.0
  %2408 = vmatprep.subr.mxu0 0.0
  %2409 = vmatpush1.xpose.msra.mxu0 0.0
  %2410 = vmatprep.subr.mxu0 0.0
  %2411 = vmatpush1.xpose.msra.mxu0 0.0
  %2412 = vmatprep.subr.mxu0 0.0
  %2413 = vmatpush1.xpose.msra.mxu0 0.0
  %2414 = vmatprep.subr.mxu0 0.0
  %2415 = vmatpush1.xpose.msra.mxu0 0.0
  %2416 = vmatprep.subr.mxu0 0.0
  %2417 = vmatpush1.xpose.msra.mxu0 0.0
  %2418 = vmatprep.subr.mxu0 0.0
  %2419 = vmatpush1.xpose.msra.mxu0 0.0
  %2420 = vmatprep.subr.mxu0 0.0
  %2421 = vmatpush1.xpose.msra.mxu0 0.0
  %2422 = vmatprep.subr.mxu0 0.0
  %2423 = vmatpush1.xpose.msra.mxu0 0.0
  %2424 = vmatprep.subr.mxu0 0.0
  %2425 = vmatpush1.xpose.msra.mxu0 0.0
  %2426 = vmatprep.subr.mxu0 0.0
  %2427 = vmatpush1.xpose.msra.mxu0 0.0
  %2428 = vmatprep.subr.mxu0 0.0
  %2429 = vmatpush1.xpose.msra.mxu0 0.0
  %2430 = vmatprep.subr.mxu0 0.0
  %2431 = vmatpush1.xpose.msra.mxu0 0.0
  %2432 = vmatprep.subr.mxu0 0.0
  %2433 = vmatpush1.xpose.msra.mxu0 0.0
  %2434 = vmatprep.subr.mxu0 0.0
  %2435 = vmatpush1.xpose.msra.mxu0 0.0
  %2436 = vmatprep.subr.mxu0 0.0
  %2437 = vmatpush1.xpose.msra.mxu0 0.0
  %2438 = vmatprep.subr.mxu0 0.0
  %2439 = vmatpush1.xpose.msra.mxu0 0.0
  %2440 = vmatprep.subr.mxu0 0.0
  %2441 = vmatpush1.xpose.msra.mxu0 0.0
  %2442 = vmatprep.subr.mxu0 0.0
  %2443 = vmatpush1.xpose.msra.mxu0 0.0
  %2444 = vmatprep.subr.mxu0 0.0
  %2445 = vmatpush1.xpose.msra.mxu0 0.0
  %2446 = vmatprep.subr.mxu0 0.0
  %2447 = vmatpush1.xpose.msra.mxu0 0.0
  %2448 = vmatprep.subr.mxu0 0.0
  %2449 = vmatpush1.xpose.msra.mxu0 0.0
  %2450 = vmatprep.subr.mxu0 0.0
  %2451 = vmatpush1.xpose.msra.mxu0 0.0
  %2452 = vmatprep.subr.mxu0 0.0
  %2453 = vmatpush1.xpose.msra.mxu0 0.0
  %2454 = vmatprep.subr.mxu0 0.0
  %2455 = vmatpush1.xpose.msra.mxu0 0.0
  %2456 = vmatprep.subr.mxu0 0.0
  %2457 = vmatpush1.xpose.msra.mxu0 0.0
  %2458 = vmatprep.subr.mxu0 0.0
  %2459 = vmatpush1.xpose.msra.mxu0 0.0
  %2460 = vmatprep.subr.mxu0 0.0
  %2461 = vmatpush1.xpose.msra.mxu0 0.0
  %2462 = vmatprep.mubr.f32.mxu0 0.0
  %2463 = vmatmul.mubr.f32.gmra.mrb[0].mxu0 %v2302
  %v2464 = vpop.f32.mrb[0].mxu0
  %v2465 = vadd.f32 %v338, %v2464
  %v2466 = vpop.f32.mrb[0].mxu0
  %2467 = vmatprep.mubr.f32.mxu0 0.0
  %2468 = vmatmul.mubr.f32.gmra.mrb[0].mxu0 %v2308
  %v2469 = vpop.f32.mrb[0].mxu0
  %v2470 = vadd.f32 %v339, %v2469
  %v2471 = vpop.f32.mrb[0].mxu0
  %2472 = vmatprep.mubr.f32.mxu0 0.0
  %2473 = vmatmul.mubr.f32.gmra.mrb[0].mxu0 %v2314
  %v2474 = vpop.f32.mrb[0].mxu0
  %v2475 = vadd.f32 %v340, %v2474
  %v2476 = vpop.f32.mrb[0].mxu0
  %2477 = vdwg.mxu0
  %v2478 = vsel %vm678, %v2465, -inf
  %2479 = vmax.xlane.f32.xlu0 %v2478
  %v2480 = vpop.xlane.xlu0 %2479
  %v2481 = vsel %vm678, %v2470, -inf
  %2482 = vmax.xlane.f32.xlu0 %v2481
  %v2483 = vpop.xlane.xlu0 %2482
  %v2484 = vsel %vm678, %v2475, -inf
  %2485 = vmax.xlane.f32.xlu0 %v2484
  %v2486 = vpop.xlane.xlu0 %2485
  %v2487 = vsub.f32 %v2465, %v2480
  %v2488 = vsub.f32 %v2470, %v2483
  %v2489 = vsub.f32 %v2475, %v2486
  %v2490 = vmul.f32 %v2487, 1.442695
  %v2491 = vpow.pop %v2490
  %v2492 = vmul.f32 %v2488, 1.442695
  %v2493 = vpow.pop %v2492
  %v2494 = vmul.f32 %v2489, 1.442695
  %v2495 = vpow.pop %v2494
  %v2496 = vsel %vm678, %v2491, 0.0
  %2497 = vadd.xlane.f32.xlu0 %v2496
  %v2498 = vpop.xlane.xlu0 %2497
  %v2499 = vsel %vm678, %v2493, 0.0
  %2500 = vadd.xlane.f32.xlu0 %v2499
  %v2501 = vpop.xlane.xlu0 %2500
  %v2502 = vsel %vm678, %v2495, 0.0
  %2503 = vadd.xlane.f32.xlu0 %v2502
  %v2504 = vpop.xlane.xlu0 %2503
  %v2505 = vrcp.pop %v2498
  %v2506 = vrcp.pop %v2501
  %v2507 = vrcp.pop %v2504
  %v2508 = vmul.f32 %v2491, %v2505
  %v2509 = vmul.f32 %v2493, %v2506
  %v2510 = vmul.f32 %v2495, %v2507
  %v2512 = vsel %vm678, %v2508, 0
  %v2515 = vsel %vm678, %v2509, 0
  %v2518 = vsel %vm678, %v2510, 0
  %2520 = vmatprep.subr.mxu0 0.0
  %2521 = vmatpush1.msra.mxu0 %v2385
  %2522 = vmatprep.subr.mxu0 0.0
  %2523 = vmatpush1.msra.mxu0 %v2390
  %2524 = vmatprep.subr.mxu0 0.0
  %2525 = vmatpush1.msra.mxu0 %v2395
  %2526 = vmatprep.subr.mxu0 0.0
  %2527 = vmatpush1.msra.mxu0 0.0
  %2528 = vmatprep.subr.mxu0 0.0
  %2529 = vmatpush1.msra.mxu0 0.0
  %2530 = vmatprep.subr.mxu0 0.0
  %2531 = vmatpush1.msra.mxu0 0.0
  %2532 = vmatprep.subr.mxu0 0.0
  %2533 = vmatpush1.msra.mxu0 0.0
  %2534 = vmatprep.subr.mxu0 0.0
  %2535 = vmatpush1.msra.mxu0 0.0
  %2536 = vmatprep.subr.mxu0 0.0
  %2537 = vmatpush1.msra.mxu0 0.0
  %2538 = vmatprep.subr.mxu0 0.0
  %2539 = vmatpush1.msra.mxu0 0.0
  %2540 = vmatprep.subr.mxu0 0.0
  %2541 = vmatpush1.msra.mxu0 0.0
  %2542 = vmatprep.subr.mxu0 0.0
  %2543 = vmatpush1.msra.mxu0 0.0
  %2544 = vmatprep.subr.mxu0 0.0
  %2545 = vmatpush1.msra.mxu0 0.0
  %2546 = vmatprep.subr.mxu0 0.0
  %2547 = vmatpush1.msra.mxu0 0.0
  %2548 = vmatprep.subr.mxu0 0.0
  %2549 = vmatpush1.msra.mxu0 0.0
  %2550 = vmatprep.subr.mxu0 0.0
  %2551 = vmatpush1.msra.mxu0 0.0
  %2552 = vmatprep.subr.mxu0 0.0
  %2553 = vmatpush1.msra.mxu0 0.0
  %2554 = vmatprep.subr.mxu0 0.0
  %2555 = vmatpush1.msra.mxu0 0.0
  %2556 = vmatprep.subr.mxu0 0.0
  %2557 = vmatpush1.msra.mxu0 0.0
  %2558 = vmatprep.subr.mxu0 0.0
  %2559 = vmatpush1.msra.mxu0 0.0
  %2560 = vmatprep.subr.mxu0 0.0
  %2561 = vmatpush1.msra.mxu0 0.0
  %2562 = vmatprep.subr.mxu0 0.0
  %2563 = vmatpush1.msra.mxu0 0.0
  %2564 = vmatprep.subr.mxu0 0.0
  %2565 = vmatpush1.msra.mxu0 0.0
  %2566 = vmatprep.subr.mxu0 0.0
  %2567 = vmatpush1.msra.mxu0 0.0
  %2568 = vmatprep.subr.mxu0 0.0
  %2569 = vmatpush1.msra.mxu0 0.0
  %2570 = vmatprep.subr.mxu0 0.0
  %2571 = vmatpush1.msra.mxu0 0.0
  %2572 = vmatprep.subr.mxu0 0.0
  %2573 = vmatpush1.msra.mxu0 0.0
  %2574 = vmatprep.subr.mxu0 0.0
  %2575 = vmatpush1.msra.mxu0 0.0
  %2576 = vmatprep.subr.mxu0 0.0
  %2577 = vmatpush1.msra.mxu0 0.0
  %2578 = vmatprep.subr.mxu0 0.0
  %2579 = vmatpush1.msra.mxu0 0.0
  %2580 = vmatprep.subr.mxu0 0.0
  %2581 = vmatpush1.msra.mxu0 0.0
  %2582 = vmatprep.subr.mxu0 0.0
  %2583 = vmatpush1.msra.mxu0 0.0
  %2584 = vmatprep.mubr.f32.mxu0 0.0
  %2585 = vmatmul.mubr.f32.gmra.mrb[0].mxu0 %v2512
  %v2586 = vpop.f32.mrb[0].mxu0
  %v2587 = vadd.f32 0.0, %v2586
  %v2588 = vpop.f32.mrb[0].mxu0
  %2589 = vmatprep.mubr.f32.mxu0 0.0
  %2590 = vmatmul.mubr.f32.gmra.mrb[0].mxu0 %v2515
  %v2591 = vpop.f32.mrb[0].mxu0
  %v2592 = vadd.f32 0.0, %v2591
  %v2593 = vpop.f32.mrb[0].mxu0
  %2594 = vmatprep.mubr.f32.mxu0 0.0
  %2595 = vmatmul.mubr.f32.gmra.mrb[0].mxu0 %v2518
  %v2596 = vpop.f32.mrb[0].mxu0
  %v2597 = vadd.f32 0.0, %v2596
  %v2598 = vpop.f32.mrb[0].mxu0
  %2599 = vdwg.mxu0
  %v2600 = vld [vmem:[%s6 + $0x200] sm:$0xff]
  %v2601 = vld [vmem:[%s6 + $0x208] sm:$0xff]
  %v2602 = vld [vmem:[%s6 + $0x210] sm:$0xff]
  %v2603 = vld [vmem:[%s6 + $0x218] sm:$0xff]
  %v2604 = vld [vmem:[%s6 + $0x220] sm:$0xff]
  %v2605 = vld [vmem:[%s6 + $0x228] sm:$0xff]
  %v2606 = vld [vmem:[%s6 + $0x230] sm:$0xff]
  %v2607 = vld [vmem:[%s6 + $0x238] sm:$0xff]
  %v2608 = vld [vmem:[%s6 + $0x240] sm:$0xff]
  %v2609 = vld [vmem:[%s6 + $0x248] sm:$0xff]
  %v2610 = vld [vmem:[%s6 + $0x250] sm:$0xff]
  %v2611 = vld [vmem:[%s6 + $0x258] sm:$0xff]
  %v2612 = vld [vmem:[%s6 + $0x260] sm:$0xff]
  %v2613 = vld [vmem:[%s6 + $0x268] sm:$0xff]
  %v2614 = vld [vmem:[%s6 + $0x270] sm:$0xff]
  %v2615 = vld [vmem:[%s6 + $0x278] sm:$0xff]
  %2616 = vmatprep.subr.mxu0 0.0
  %2617 = vmatpush1.msra.mxu0 %v2600
  %2618 = vmatprep.subr.mxu0 0.0
  %2619 = vmatpush1.msra.mxu0 %v2601
  %2620 = vmatprep.subr.mxu0 0.0
  %2621 = vmatpush1.msra.mxu0 %v2602
  %2622 = vmatprep.subr.mxu0 0.0
  %2623 = vmatpush1.msra.mxu0 %v2603
  %2624 = vmatprep.subr.mxu0 0.0
  %2625 = vmatpush1.msra.mxu0 %v2604
  %2626 = vmatprep.subr.mxu0 0.0
  %2627 = vmatpush1.msra.mxu0 %v2605
  %2628 = vmatprep.subr.mxu0 0.0
  %2629 = vmatpush1.msra.mxu0 %v2606
  %2630 = vmatprep.subr.mxu0 0.0
  %2631 = vmatpush1.msra.mxu0 %v2607
  %2632 = vmatprep.subr.mxu0 0.0
  %2633 = vmatpush1.msra.mxu0 %v2608
  %2634 = vmatprep.subr.mxu0 0.0
  %2635 = vmatpush1.msra.mxu0 %v2609
  %2636 = vmatprep.subr.mxu0 0.0
  %2637 = vmatpush1.msra.mxu0 %v2610
  %2638 = vmatprep.subr.mxu0 0.0
  %2639 = vmatpush1.msra.mxu0 %v2611
  %2640 = vmatprep.subr.mxu0 0.0
  %2641 = vmatpush1.msra.mxu0 %v2612
  %2642 = vmatprep.subr.mxu0 0.0
  %2643 = vmatpush1.msra.mxu0 %v2613
  %2644 = vmatprep.subr.mxu0 0.0
  %2645 = vmatpush1.msra.mxu0 %v2614
  %2646 = vmatprep.subr.mxu0 0.0
  %2647 = vmatpush1.msra.mxu0 %v2615
  %2648 = vmatprep.subr.mxu0 0.0
  %2649 = vmatpush1.msra.mxu0 0.0
  %2650 = vmatprep.subr.mxu0 0.0
  %2651 = vmatpush1.msra.mxu0 0.0
  %2652 = vmatprep.subr.mxu0 0.0
  %2653 = vmatpush1.msra.mxu0 0.0
  %2654 = vmatprep.subr.mxu0 0.0
  %2655 = vmatpush1.msra.mxu0 0.0
  %2656 = vmatprep.subr.mxu0 0.0
  %2657 = vmatpush1.msra.mxu0 0.0
  %2658 = vmatprep.subr.mxu0 0.0
  %2659 = vmatpush1.msra.mxu0 0.0
  %2660 = vmatprep.subr.mxu0 0.0
  %2661 = vmatpush1.msra.mxu0 0.0
  %2662 = vmatprep.subr.mxu0 0.0
  %2663 = vmatpush1.msra.mxu0 0.0
  %2664 = vmatprep.subr.mxu0 0.0
  %2665 = vmatpush1.msra.mxu0 0.0
  %2666 = vmatprep.subr.mxu0 0.0
  %2667 = vmatpush1.msra.mxu0 0.0
  %2668 = vmatprep.subr.mxu0 0.0
  %2669 = vmatpush1.msra.mxu0 0.0
  %2670 = vmatprep.subr.mxu0 0.0
  %2671 = vmatpush1.msra.mxu0 0.0
  %2672 = vmatprep.subr.mxu0 0.0
  %2673 = vmatpush1.msra.mxu0 0.0
  %2674 = vmatprep.subr.mxu0 0.0
  %2675 = vmatpush1.msra.mxu0 0.0
  %2676 = vmatprep.subr.mxu0 0.0
  %2677 = vmatpush1.msra.mxu0 0.0
  %2678 = vmatprep.subr.mxu0 0.0
  %2679 = vmatpush1.msra.mxu0 0.0
  %2680 = vmatprep.mubr.f32.mxu0 0.0
  %2681 = vmatmul.mubr.f32.gmra.mrb[0].mxu0 %v2587
  %v2682 = vpop.f32.mrb[0].mxu0
  %v2683 = vadd.f32 0.0, %v2682
  %v2684 = vpop.f32.mrb[0].mxu0
  %2685 = vmatprep.mubr.f32.mxu0 0.0
  %2686 = vmatmul.mubr.f32.gmra.mrb[0].mxu0 %v2592
  %v2687 = vpop.f32.mrb[0].mxu0
  %v2688 = vadd.f32 0.0, %v2687
  %v2689 = vpop.f32.mrb[0].mxu0
  %2690 = vmatprep.mubr.f32.mxu0 0.0
  %2691 = vmatmul.mubr.f32.gmra.mrb[0].mxu0 %v2597
  %v2692 = vpop.f32.mrb[0].mxu0
  %v2693 = vadd.f32 0.0, %v2692
  %v2694 = vpop.f32.mrb[0].mxu0
  %2695 = vdwg.mxu0
  %2696 = vmatprep.subr.mxu0 0.0
  %2697 = vmatpush1.msra.mxu0 %v2194
  %2698 = vmatprep.subr.mxu0 0.0
  %2699 = vmatpush1.msra.mxu0 %v2195
  %2700 = vmatprep.subr.mxu0 0.0
  %2701 = vmatpush1.msra.mxu0 %v2196
  %2702 = vmatprep.subr.mxu0 0.0
  %2703 = vmatpush1.msra.mxu0 %v2197
  %2704 = vmatprep.subr.mxu0 0.0
  %2705 = vmatpush1.msra.mxu0 %v2198
  %2706 = vmatprep.subr.mxu0 0.0
  %2707 = vmatpush1.msra.mxu0 %v2199
  %2708 = vmatprep.subr.mxu0 0.0
  %2709 = vmatpush1.msra.mxu0 %v2200
  %2710 = vmatprep.subr.mxu0 0.0
  %2711 = vmatpush1.msra.mxu0 %v2201
  %2712 = vmatprep.subr.mxu0 0.0
  %2713 = vmatpush1.msra.mxu0 %v2202
  %2714 = vmatprep.subr.mxu0 0.0
  %2715 = vmatpush1.msra.mxu0 %v2203
  %2716 = vmatprep.subr.mxu0 0.0
  %2717 = vmatpush1.msra.mxu0 %v2204
  %2718 = vmatprep.subr.mxu0 0.0
  %2719 = vmatpush1.msra.mxu0 %v2205
  %2720 = vmatprep.subr.mxu0 0.0
  %2721 = vmatpush1.msra.mxu0 %v2206
  %2722 = vmatprep.subr.mxu0 0.0
  %2723 = vmatpush1.msra.mxu0 %v2207
  %2724 = vmatprep.subr.mxu0 0.0
  %2725 = vmatpush1.msra.mxu0 %v2208
  %2726 = vmatprep.subr.mxu0 0.0
  %2727 = vmatpush1.msra.mxu0 %v2209
  %2728 = vmatprep.subr.mxu0 0.0
  %2729 = vmatpush1.msra.mxu0 0.0
  %2730 = vmatprep.subr.mxu0 0.0
  %2731 = vmatpush1.msra.mxu0 0.0
  %2732 = vmatprep.subr.mxu0 0.0
  %2733 = vmatpush1.msra.mxu0 0.0
  %2734 = vmatprep.subr.mxu0 0.0
  %2735 = vmatpush1.msra.mxu0 0.0
  %2736 = vmatprep.subr.mxu0 0.0
  %2737 = vmatpush1.msra.mxu0 0.0
  %2738 = vmatprep.subr.mxu0 0.0
  %2739 = vmatpush1.msra.mxu0 0.0
  %2740 = vmatprep.subr.mxu0 0.0
  %2741 = vmatpush1.msra.mxu0 0.0
  %2742 = vmatprep.subr.mxu0 0.0
  %2743 = vmatpush1.msra.mxu0 0.0
  %2744 = vmatprep.subr.mxu0 0.0
  %2745 = vmatpush1.msra.mxu0 0.0
  %2746 = vmatprep.subr.mxu0 0.0
  %2747 = vmatpush1.msra.mxu0 0.0
  %2748 = vmatprep.subr.mxu0 0.0
  %2749 = vmatpush1.msra.mxu0 0.0
  %2750 = vmatprep.subr.mxu0 0.0
  %2751 = vmatpush1.msra.mxu0 0.0
  %2752 = vmatprep.subr.mxu0 0.0
  %2753 = vmatpush1.msra.mxu0 0.0
  %2754 = vmatprep.subr.mxu0 0.0
  %2755 = vmatpush1.msra.mxu0 0.0
  %2756 = vmatprep.subr.mxu0 0.0
  %2757 = vmatpush1.msra.mxu0 0.0
  %2758 = vmatprep.subr.mxu0 0.0
  %2759 = vmatpush1.msra.mxu0 0.0
  %2760 = vmatprep.mubr.f32.mxu0 0.0
  %2761 = vmatmul.mubr.f32.gmra.mrb[0].mxu0 %v2181
  %v2762 = vpop.f32.mrb[0].mxu0
  %v2763 = vadd.f32 %v2683, %v2762
  %v2764 = vpop.f32.mrb[0].mxu0
  %2765 = vmatprep.mubr.f32.mxu0 0.0
  %2766 = vmatmul.mubr.f32.gmra.mrb[0].mxu0 %v2186
  %v2767 = vpop.f32.mrb[0].mxu0
  %v2768 = vadd.f32 %v2688, %v2767
  %v2769 = vpop.f32.mrb[0].mxu0
  %2770 = vmatprep.mubr.f32.mxu0 0.0
  %2771 = vmatmul.mubr.f32.gmra.mrb[0].mxu0 %v2191
  %v2772 = vpop.f32.mrb[0].mxu0
  %v2773 = vadd.f32 %v2693, %v2772
  %v2774 = vpop.f32.mrb[0].mxu0
  %2775 = vdwg.mxu0
  %v2776 = vadd.f32 %v1732, %v2763
  %v2777 = vadd.f32 %v1733, %v2768
  %v2778 = vadd.f32 %v1734, %v2773
  %v2779 = vlaneseq
  %v2780 = vshrl.u32 %v2779, 7
  %v2781 = vsub.s32 0, %v2780
  %v2782 = vrot.slane %v1737, %v2781
  %v2783 = vadd.f32 %v2776, %v2782
  %v2784 = vadd.f32 %v2777, %v2782
  %v2785 = vadd.f32 %v2778, %v2782
  %v2786 = vsel %vm295, %v2783, 0.0
  %2787 = vadd.xlane.f32.xlu0 %v2786
  %v2788 = vpop.xlane.xlu0 %2787
  %v2789 = vsel %vm295, %v2784, 0.0
  %2790 = vadd.xlane.f32.xlu0 %v2789
  %v2791 = vpop.xlane.xlu0 %2790
  %v2792 = vsel %vm295, %v2785, 0.0
  %2793 = vadd.xlane.f32.xlu0 %v2792
  %v2794 = vpop.xlane.xlu0 %2793
  %v2795 = vmul.f32 %v2788, %v357
  %v2796 = vmul.f32 %v2791, %v357
  %v2797 = vmul.f32 %v2794, %v357
  %v2798 = vsub.f32 %v2783, %v2795
  %v2799 = vsub.f32 %v2784, %v2796
  %v2800 = vsub.f32 %v2785, %v2797
  %v2801 = vmul.f32 %v2798, %v2798
  %v2802 = vmul.f32 %v2799, %v2799
  %v2803 = vmul.f32 %v2800, %v2800
  %v2804 = vsel %vm295, %v2801, 0.0
  %2805 = vadd.xlane.f32.xlu0 %v2804
  %v2806 = vpop.xlane.xlu0 %2805
  %v2807 = vsel %vm295, %v2802, 0.0
  %2808 = vadd.xlane.f32.xlu0 %v2807
  %v2809 = vpop.xlane.xlu0 %2808
  %v2810 = vsel %vm295, %v2803, 0.0
  %2811 = vadd.xlane.f32.xlu0 %v2810
  %v2812 = vpop.xlane.xlu0 %2811
  %v2813 = vmul.f32 %v2806, %v357
  %v2814 = vmul.f32 %v2809, %v357
  %v2815 = vmul.f32 %v2812, %v357
  %v2816 = vadd.f32 %v2813, 1e-05
  %v2817 = vadd.f32 %v2814, 1e-05
  %v2818 = vadd.f32 %v2815, 1e-05
  %v2819 = vrsqrt.pop %v2816
  %v2820 = vrsqrt.pop %v2817
  %v2821 = vrsqrt.pop %v2818
  %v2822 = vmul.f32 %v2798, %v2819
  %v2823 = vmul.f32 %v2799, %v2820
  %v2824 = vmul.f32 %v2800, %v2821
  %v2825 = vlaneseq
  %v2826 = vshrl.u32 %v2825, 7
  %v2827 = vsub.s32 0, %v2826
  %v2828 = vrot.slane %v1738, %v2827
  %v2829 = vmul.f32 %v2822, %v2828
  %v2830 = vmul.f32 %v2823, %v2828
  %v2831 = vmul.f32 %v2824, %v2828
  %v2832 = vlaneseq
  %v2833 = vshrl.u32 %v2832, 7
  %v2834 = vsub.s32 0, %v2833
  %v2835 = vrot.slane %v1739, %v2834
  %v2836 = vadd.f32 %v2829, %v2835
  %v2837 = vadd.f32 %v2830, %v2835
  %v2838 = vadd.f32 %v2831, %v2835
  %v2839 = vld [vmem:[%s6 + $0x280] sm:$0xff]
  %v2840 = vld [vmem:[%s6 + $0x288] sm:$0xff]
  %v2841 = vld [vmem:[%s6 + $0x290] sm:$0xff]
  %v2842 = vld [vmem:[%s6 + $0x298] sm:$0xff]
  %v2843 = vld [vmem:[%s6 + $0x2a0] sm:$0xff]
  %v2844 = vld [vmem:[%s6 + $0x2a8] sm:$0xff]
  %v2845 = vld [vmem:[%s6 + $0x2b0] sm:$0xff]
  %v2846 = vld [vmem:[%s6 + $0x2b8] sm:$0xff]
  %v2847 = vlaneseq
  %v2848 = vshrl.u32 %v2847, 7
  %v2849 = vsub.s32 0, %v2848
  %v2850 = vrot.slane %v1740, %v2849
  %v2852 = vsel %vm295, %v2836, 0
  %v2855 = vsel %vm295, %v2837, 0
  %v2858 = vsel %vm295, %v2838, 0
  %2860 = vmatprep.subr.mxu0 0.0
  %2861 = vmatpush1.msra.mxu0 %v2839
  %2862 = vmatprep.subr.mxu0 0.0
  %2863 = vmatpush1.msra.mxu0 %v2840
  %2864 = vmatprep.subr.mxu0 0.0
  %2865 = vmatpush1.msra.mxu0 %v2841
  %2866 = vmatprep.subr.mxu0 0.0
  %2867 = vmatpush1.msra.mxu0 %v2842
  %2868 = vmatprep.subr.mxu0 0.0
  %2869 = vmatpush1.msra.mxu0 %v2843
  %2870 = vmatprep.subr.mxu0 0.0
  %2871 = vmatpush1.msra.mxu0 %v2844
  %2872 = vmatprep.subr.mxu0 0.0
  %2873 = vmatpush1.msra.mxu0 %v2845
  %2874 = vmatprep.subr.mxu0 0.0
  %2875 = vmatpush1.msra.mxu0 %v2846
  %2876 = vmatprep.subr.mxu0 0.0
  %2877 = vmatpush1.msra.mxu0 0.0
  %2878 = vmatprep.subr.mxu0 0.0
  %2879 = vmatpush1.msra.mxu0 0.0
  %2880 = vmatprep.subr.mxu0 0.0
  %2881 = vmatpush1.msra.mxu0 0.0
  %2882 = vmatprep.subr.mxu0 0.0
  %2883 = vmatpush1.msra.mxu0 0.0
  %2884 = vmatprep.subr.mxu0 0.0
  %2885 = vmatpush1.msra.mxu0 0.0
  %2886 = vmatprep.subr.mxu0 0.0
  %2887 = vmatpush1.msra.mxu0 0.0
  %2888 = vmatprep.subr.mxu0 0.0
  %2889 = vmatpush1.msra.mxu0 0.0
  %2890 = vmatprep.subr.mxu0 0.0
  %2891 = vmatpush1.msra.mxu0 0.0
  %2892 = vmatprep.subr.mxu0 0.0
  %2893 = vmatpush1.msra.mxu0 0.0
  %2894 = vmatprep.subr.mxu0 0.0
  %2895 = vmatpush1.msra.mxu0 0.0
  %2896 = vmatprep.subr.mxu0 0.0
  %2897 = vmatpush1.msra.mxu0 0.0
  %2898 = vmatprep.subr.mxu0 0.0
  %2899 = vmatpush1.msra.mxu0 0.0
  %2900 = vmatprep.subr.mxu0 0.0
  %2901 = vmatpush1.msra.mxu0 0.0
  %2902 = vmatprep.subr.mxu0 0.0
  %2903 = vmatpush1.msra.mxu0 0.0
  %2904 = vmatprep.subr.mxu0 0.0
  %2905 = vmatpush1.msra.mxu0 0.0
  %2906 = vmatprep.subr.mxu0 0.0
  %2907 = vmatpush1.msra.mxu0 0.0
  %2908 = vmatprep.subr.mxu0 0.0
  %2909 = vmatpush1.msra.mxu0 0.0
  %2910 = vmatprep.subr.mxu0 0.0
  %2911 = vmatpush1.msra.mxu0 0.0
  %2912 = vmatprep.subr.mxu0 0.0
  %2913 = vmatpush1.msra.mxu0 0.0
  %2914 = vmatprep.subr.mxu0 0.0
  %2915 = vmatpush1.msra.mxu0 0.0
  %2916 = vmatprep.subr.mxu0 0.0
  %2917 = vmatpush1.msra.mxu0 0.0
  %2918 = vmatprep.subr.mxu0 0.0
  %2919 = vmatpush1.msra.mxu0 0.0
  %2920 = vmatprep.subr.mxu0 0.0
  %2921 = vmatpush1.msra.mxu0 0.0
  %2922 = vmatprep.subr.mxu0 0.0
  %2923 = vmatpush1.msra.mxu0 0.0
  %2924 = vmatprep.mubr.f32.mxu0 0.0
  %2925 = vmatmul.mubr.f32.gmra.mrb[0].mxu0 %v2852
  %v2926 = vpop.f32.mrb[0].mxu0
  %v2927 = vadd.f32 %v2850, %v2926
  %v2928 = vpop.f32.mrb[0].mxu0
  %2929 = vmatprep.mubr.f32.mxu0 0.0
  %2930 = vmatmul.mubr.f32.gmra.mrb[0].mxu0 %v2855
  %v2931 = vpop.f32.mrb[0].mxu0
  %v2932 = vadd.f32 %v2850, %v2931
  %v2933 = vpop.f32.mrb[0].mxu0
  %2934 = vmatprep.mubr.f32.mxu0 0.0
  %2935 = vmatmul.mubr.f32.gmra.mrb[0].mxu0 %v2858
  %v2936 = vpop.f32.mrb[0].mxu0
  %v2937 = vadd.f32 %v2850, %v2936
  %v2938 = vpop.f32.mrb[0].mxu0
  %2939 = vdwg.mxu0
  %v2940 = vmul.f32 %v2927, 0.5
  %v2941 = vmul.f32 %v2932, 0.5
  %v2942 = vmul.f32 %v2937, 0.5
  %v2943 = vmul.f32 %v2927, 0.70710677
  %v2944 = vmul.f32 %v2932, 0.70710677
  %v2945 = vmul.f32 %v2937, 0.70710677
  %vm2946 = vcmp.lt.f32.partialorder %v2943, 0.0
  %vm2947 = vcmp.lt.f32.partialorder %v2944, 0.0
  %vm2948 = vcmp.lt.f32.partialorder %v2945, 0.0
  %v2949 = vsel %vm2946, -1.0, 1.0
  %v2950 = vsel %vm2947, -1.0, 1.0
  %v2951 = vsel %vm2948, -1.0, 1.0
  %v2952 = vand.u32 2147483647, %v2943
  %v2953 = vand.u32 2147483647, %v2944
  %v2954 = vand.u32 2147483647, %v2945
  %v2955 = vmul.f32 %v2952, 0.3275911
  %v2956 = vmul.f32 %v2953, 0.3275911
  %v2957 = vmul.f32 %v2954, 0.3275911
  %v2958 = vadd.f32 %v2955, 1.0
  %v2959 = vadd.f32 %v2956, 1.0
  %v2960 = vadd.f32 %v2957, 1.0
  %v2961 = vrcp.pop %v2958
  %v2962 = vmul.f32 1.0, %v2961
  %v2963 = vrcp.pop %v2959
  %v2964 = vmul.f32 1.0, %v2963
  %v2965 = vrcp.pop %v2960
  %v2966 = vmul.f32 1.0, %v2965
  %v2967 = vmul.f32 %v2962, 1.0614054
  %v2968 = vmul.f32 %v2964, 1.0614054
  %v2969 = vmul.f32 %v2966, 1.0614054
  %v2970 = vadd.f32 %v2967, -1.4531521
  %v2971 = vadd.f32 %v2968, -1.4531521
  %v2972 = vadd.f32 %v2969, -1.4531521
  %v2973 = vmul.f32 %v2970, %v2962
  %v2974 = vmul.f32 %v2971, %v2964
  %v2975 = vmul.f32 %v2972, %v2966
  %v2976 = vadd.f32 %v2973, 1.4214138
  %v2977 = vadd.f32 %v2974, 1.4214138
  %v2978 = vadd.f32 %v2975, 1.4214138
  %v2979 = vmul.f32 %v2976, %v2962
  %v2980 = vmul.f32 %v2977, %v2964
  %v2981 = vmul.f32 %v2978, %v2966
  %v2982 = vadd.f32 %v2979, -0.28449672
  %v2983 = vadd.f32 %v2980, -0.28449672
  %v2984 = vadd.f32 %v2981, -0.28449672
  %v2985 = vmul.f32 %v2982, %v2962
  %v2986 = vmul.f32 %v2983, %v2964
  %v2987 = vmul.f32 %v2984, %v2966
  %v2988 = vadd.f32 %v2985, 0.2548296
  %v2989 = vadd.f32 %v2986, 0.2548296
  %v2990 = vadd.f32 %v2987, 0.2548296
  %v2991 = vmul.f32 %v2988, %v2962
  %v2992 = vmul.f32 %v2989, %v2964
  %v2993 = vmul.f32 %v2990, %v2966
  %v2994 = vsub.f32 0.0, %v2952
  %v2995 = vsub.f32 0.0, %v2953
  %v2996 = vsub.f32 0.0, %v2954
  %v2997 = vmul.f32 %v2994, %v2952
  %v2998 = vmul.f32 %v2995, %v2953
  %v2999 = vmul.f32 %v2996, %v2954
  %v3000 = vmul.f32 %v2997, 1.442695
  %v3001 = vpow.pop %v3000
  %v3002 = vmul.f32 %v2998, 1.442695
  %v3003 = vpow.pop %v3002
  %v3004 = vmul.f32 %v2999, 1.442695
  %v3005 = vpow.pop %v3004
  %v3006 = vmul.f32 %v2991, %v3001
  %v3007 = vmul.f32 %v2992, %v3003
  %v3008 = vmul.f32 %v2993, %v3005
  %v3009 = vsub.f32 1.0, %v3006
  %v3010 = vsub.f32 1.0, %v3007
  %v3011 = vsub.f32 1.0, %v3008
  %v3012 = vmul.f32 %v2949, %v3009
  %v3013 = vmul.f32 %v2950, %v3010
  %v3014 = vmul.f32 %v2951, %v3011
  %v3015 = vadd.f32 %v3012, 1.0
  %v3016 = vadd.f32 %v3013, 1.0
  %v3017 = vadd.f32 %v3014, 1.0
  %v3018 = vmul.f32 %v2940, %v3015
  %v3019 = vmul.f32 %v2941, %v3016
  %v3020 = vmul.f32 %v2942, %v3017
  %v3021 = vld [vmem:[%s6 + $0x2c0] sm:$0xff]
  %v3022 = vld [vmem:[%s6 + $0x2c8] sm:$0xff]
  %v3023 = vld [vmem:[%s6 + $0x2d0] sm:$0xff]
  %v3024 = vld [vmem:[%s6 + $0x2d8] sm:$0xff]
  %v3025 = vld [vmem:[%s6 + $0x2e0] sm:$0xff]
  %v3026 = vld [vmem:[%s6 + $0x2e8] sm:$0xff]
  %v3027 = vld [vmem:[%s6 + $0x2f0] sm:$0xff]
  %v3028 = vld [vmem:[%s6 + $0x2f8] sm:$0xff]
  %v3030 = vsel %vm295, %v3018, 0
  %v3033 = vsel %vm295, %v3019, 0
  %v3036 = vsel %vm295, %v3020, 0
  %3038 = vmatprep.subr.mxu0 0.0
  %3039 = vmatpush1.msra.mxu0 %v3021
  %3040 = vmatprep.subr.mxu0 0.0
  %3041 = vmatpush1.msra.mxu0 %v3022
  %3042 = vmatprep.subr.mxu0 0.0
  %3043 = vmatpush1.msra.mxu0 %v3023
  %3044 = vmatprep.subr.mxu0 0.0
  %3045 = vmatpush1.msra.mxu0 %v3024
  %3046 = vmatprep.subr.mxu0 0.0
  %3047 = vmatpush1.msra.mxu0 %v3025
  %3048 = vmatprep.subr.mxu0 0.0
  %3049 = vmatpush1.msra.mxu0 %v3026
  %3050 = vmatprep.subr.mxu0 0.0
  %3051 = vmatpush1.msra.mxu0 %v3027
  %3052 = vmatprep.subr.mxu0 0.0
  %3053 = vmatpush1.msra.mxu0 %v3028
  %3054 = vmatprep.subr.mxu0 0.0
  %3055 = vmatpush1.msra.mxu0 0.0
  %3056 = vmatprep.subr.mxu0 0.0
  %3057 = vmatpush1.msra.mxu0 0.0
  %3058 = vmatprep.subr.mxu0 0.0
  %3059 = vmatpush1.msra.mxu0 0.0
  %3060 = vmatprep.subr.mxu0 0.0
  %3061 = vmatpush1.msra.mxu0 0.0
  %3062 = vmatprep.subr.mxu0 0.0
  %3063 = vmatpush1.msra.mxu0 0.0
  %3064 = vmatprep.subr.mxu0 0.0
  %3065 = vmatpush1.msra.mxu0 0.0
  %3066 = vmatprep.subr.mxu0 0.0
  %3067 = vmatpush1.msra.mxu0 0.0
  %3068 = vmatprep.subr.mxu0 0.0
  %3069 = vmatpush1.msra.mxu0 0.0
  %3070 = vmatprep.subr.mxu0 0.0
  %3071 = vmatpush1.msra.mxu0 0.0
  %3072 = vmatprep.subr.mxu0 0.0
  %3073 = vmatpush1.msra.mxu0 0.0
  %3074 = vmatprep.subr.mxu0 0.0
  %3075 = vmatpush1.msra.mxu0 0.0
  %3076 = vmatprep.subr.mxu0 0.0
  %3077 = vmatpush1.msra.mxu0 0.0
  %3078 = vmatprep.subr.mxu0 0.0
  %3079 = vmatpush1.msra.mxu0 0.0
  %3080 = vmatprep.subr.mxu0 0.0
  %3081 = vmatpush1.msra.mxu0 0.0
  %3082 = vmatprep.subr.mxu0 0.0
  %3083 = vmatpush1.msra.mxu0 0.0
  %3084 = vmatprep.subr.mxu0 0.0
  %3085 = vmatpush1.msra.mxu0 0.0
  %3086 = vmatprep.subr.mxu0 0.0
  %3087 = vmatpush1.msra.mxu0 0.0
  %3088 = vmatprep.subr.mxu0 0.0
  %3089 = vmatpush1.msra.mxu0 0.0
  %3090 = vmatprep.subr.mxu0 0.0
  %3091 = vmatpush1.msra.mxu0 0.0
  %3092 = vmatprep.subr.mxu0 0.0
  %3093 = vmatpush1.msra.mxu0 0.0
  %3094 = vmatprep.subr.mxu0 0.0
  %3095 = vmatpush1.msra.mxu0 0.0
  %3096 = vmatprep.subr.mxu0 0.0
  %3097 = vmatpush1.msra.mxu0 0.0
  %3098 = vmatprep.subr.mxu0 0.0
  %3099 = vmatpush1.msra.mxu0 0.0
  %3100 = vmatprep.subr.mxu0 0.0
  %3101 = vmatpush1.msra.mxu0 0.0
  %3102 = vmatprep.mubr.f32.mxu0 0.0
  %3103 = vmatmul.mubr.f32.gmra.mrb[0].mxu0 %v3030
  %v3104 = vpop.f32.mrb[0].mxu0
  %v3105 = vadd.f32 0.0, %v3104
  %v3106 = vpop.f32.mrb[0].mxu0
  %3107 = vmatprep.mubr.f32.mxu0 0.0
  %3108 = vmatmul.mubr.f32.gmra.mrb[0].mxu0 %v3033
  %v3109 = vpop.f32.mrb[0].mxu0
  %v3110 = vadd.f32 0.0, %v3109
  %v3111 = vpop.f32.mrb[0].mxu0
  %3112 = vmatprep.mubr.f32.mxu0 0.0
  %3113 = vmatmul.mubr.f32.gmra.mrb[0].mxu0 %v3036
  %v3114 = vpop.f32.mrb[0].mxu0
  %v3115 = vadd.f32 0.0, %v3114
  %v3116 = vpop.f32.mrb[0].mxu0
  %3117 = vdwg.mxu0
  %v3118 = vadd.f32 %v2783, %v3105
  %v3119 = vadd.f32 %v2784, %v3110
  %v3120 = vadd.f32 %v2785, %v3115
  %v3121 = vlaneseq
  %v3122 = vshrl.u32 %v3121, 7
  %v3123 = vsub.s32 0, %v3122
  %v3124 = vrot.slane %v1741, %v3123
  %v3125 = vadd.f32 %v3118, %v3124
  %v3126 = vadd.f32 %v3119, %v3124
  %v3127 = vadd.f32 %v3120, %v3124
  %v3128 = vld [vmem:[%s7] sm:$0xff]
  %v3129 = vld [vmem:[%s7 + $0x8] sm:$0xff]
  %v3130 = vld [vmem:[%s7 + $0x10] sm:$0xff]
  %v3131 = vld [vmem:[%s7 + $0x18] sm:$0xff]
  %v3132 = vld [vmem:[%s7 + $0x20] sm:$0xff]
  %v3133 = vld [vmem:[%s7 + $0x28] sm:$0xff]
  %v3134 = vld [vmem:[%s7 + $0x30] sm:$0xff]
  %v3135 = vld [vmem:[%s7 + $0x38] sm:$0xff]
  %v3136 = vld [vmem:[%s7 + $0x40] sm:$0x1]
  %v3137 = vlaneseq
  %v3138 = vshrl.u32 %v3137, 7
  %v3139 = vsub.s32 0, %v3138
  %v3140 = vrot.slane %v3136, %v3139
  %v3142 = vsel %vm295, %v3125, 0
  %v3145 = vsel %vm295, %v3126, 0
  %v3148 = vsel %vm295, %v3127, 0
  %3150 = vmatprep.subr.mxu0 0.0
  %3151 = vmatpush1.msra.mxu0 %v3128
  %3152 = vmatprep.subr.mxu0 0.0
  %3153 = vmatpush1.msra.mxu0 %v3129
  %3154 = vmatprep.subr.mxu0 0.0
  %3155 = vmatpush1.msra.mxu0 %v3130
  %3156 = vmatprep.subr.mxu0 0.0
  %3157 = vmatpush1.msra.mxu0 %v3131
  %3158 = vmatprep.subr.mxu0 0.0
  %3159 = vmatpush1.msra.mxu0 %v3132
  %3160 = vmatprep.subr.mxu0 0.0
  %3161 = vmatpush1.msra.mxu0 %v3133
  %3162 = vmatprep.subr.mxu0 0.0
  %3163 = vmatpush1.msra.mxu0 %v3134
  %3164 = vmatprep.subr.mxu0 0.0
  %3165 = vmatpush1.msra.mxu0 %v3135
  %3166 = vmatprep.subr.mxu0 0.0
  %3167 = vmatpush1.msra.mxu0 0.0
  %3168 = vmatprep.subr.mxu0 0.0
  %3169 = vmatpush1.msra.mxu0 0.0
  %3170 = vmatprep.subr.mxu0 0.0
  %3171 = vmatpush1.msra.mxu0 0.0
  %3172 = vmatprep.subr.mxu0 0.0
  %3173 = vmatpush1.msra.mxu0 0.0
  %3174 = vmatprep.subr.mxu0 0.0
  %3175 = vmatpush1.msra.mxu0 0.0
  %3176 = vmatprep.subr.mxu0 0.0
  %3177 = vmatpush1.msra.mxu0 0.0
  %3178 = vmatprep.subr.mxu0 0.0
  %3179 = vmatpush1.msra.mxu0 0.0
  %3180 = vmatprep.subr.mxu0 0.0
  %3181 = vmatpush1.msra.mxu0 0.0
  %3182 = vmatprep.subr.mxu0 0.0
  %3183 = vmatpush1.msra.mxu0 0.0
  %3184 = vmatprep.subr.mxu0 0.0
  %3185 = vmatpush1.msra.mxu0 0.0
  %3186 = vmatprep.subr.mxu0 0.0
  %3187 = vmatpush1.msra.mxu0 0.0
  %3188 = vmatprep.subr.mxu0 0.0
  %3189 = vmatpush1.msra.mxu0 0.0
  %3190 = vmatprep.subr.mxu0 0.0
  %3191 = vmatpush1.msra.mxu0 0.0
  %3192 = vmatprep.subr.mxu0 0.0
  %3193 = vmatpush1.msra.mxu0 0.0
  %3194 = vmatprep.subr.mxu0 0.0
  %3195 = vmatpush1.msra.mxu0 0.0
  %3196 = vmatprep.subr.mxu0 0.0
  %3197 = vmatpush1.msra.mxu0 0.0
  %3198 = vmatprep.subr.mxu0 0.0
  %3199 = vmatpush1.msra.mxu0 0.0
  %3200 = vmatprep.subr.mxu0 0.0
  %3201 = vmatpush1.msra.mxu0 0.0
  %3202 = vmatprep.subr.mxu0 0.0
  %3203 = vmatpush1.msra.mxu0 0.0
  %3204 = vmatprep.subr.mxu0 0.0
  %3205 = vmatpush1.msra.mxu0 0.0
  %3206 = vmatprep.subr.mxu0 0.0
  %3207 = vmatpush1.msra.mxu0 0.0
  %3208 = vmatprep.subr.mxu0 0.0
  %3209 = vmatpush1.msra.mxu0 0.0
  %3210 = vmatprep.subr.mxu0 0.0
  %3211 = vmatpush1.msra.mxu0 0.0
  %3212 = vmatprep.subr.mxu0 0.0
  %3213 = vmatpush1.msra.mxu0 0.0
  %3214 = vmatprep.mubr.f32.mxu0 0.0
  %3215 = vmatmul.mubr.f32.gmra.mrb[0].mxu0 %v3142
  %v3216 = vpop.f32.mrb[0].mxu0
  %v3217 = vadd.f32 %v3140, %v3216
  %v3218 = vpop.f32.mrb[0].mxu0
  %3219 = vmatprep.mubr.f32.mxu0 0.0
  %3220 = vmatmul.mubr.f32.gmra.mrb[0].mxu0 %v3145
  %v3221 = vpop.f32.mrb[0].mxu0
  %v3222 = vadd.f32 %v3140, %v3221
  %v3223 = vpop.f32.mrb[0].mxu0
  %3224 = vmatprep.mubr.f32.mxu0 0.0
  %3225 = vmatmul.mubr.f32.gmra.mrb[0].mxu0 %v3148
  %v3226 = vpop.f32.mrb[0].mxu0
  %v3227 = vadd.f32 %v3140, %v3226
  %v3228 = vpop.f32.mrb[0].mxu0
  %3229 = vdwg.mxu0
  %3230 = vst [vmem:[%s8] sm:$0xff] %v3217
  %3231 = vst [vmem:[%s8 + $0x8] sm:$0xff] %v3222
  %3232 = vst [vmem:[%s8 + $0x10] sm:$0xff] %v3227
  // Predicated region
  $region34: #{ptychovit_forward.1} parent=0 // pred_check
    _
  $region35: #{ptychovit_forward.1} parent=0 // pred_check_branch
    %3234 = sbr.rel (0) target = $region37
  $region36: #{ptychovit_forward.1} parent=0 // pred_region
    _
  $region37: #{ptychovit_forward.1} parent=0 // pred_fallthru
    _
  // Predicated region
  $region38: #{ptychovit_forward.1} parent=0 // pred_check
    _
  $region39: #{ptychovit_forward.1} parent=0 // pred_check_branch
    %3236 = sbr.rel (0) target = $region41
  $region40: #{ptychovit_forward.1} parent=0 // pred_region
    _
  $region41: #{ptychovit_forward.1} parent=0 // pred_fallthru
    _

</llo_original>
